<compile_context>
chip_gen: v7x
topology: tpu7x:2x2x1
jax: 0.10.0
libtpu: 0.0.40
codegen_flags: <defaults>
</compile_context>

<pallas_src>
import functools
import math

import numpy as np
import jax
import jax.numpy as jnp
from jax import lax
from jax.experimental import pallas as pl
from jax.experimental.pallas import tpu as pltpu

# ----------------------- scaled-down PaSST configuration --------------------
BATCH = 2
WIN = 64            # stft window / n_fft
HOP = 32            # = WIN // 2  (frame t = chunks[t] ++ chunks[t+1])
N_FRAMES = 16
N_SAMPLES = HOP * (N_FRAMES - 1) + WIN   # 544
N_CHUNKS = N_SAMPLES // HOP              # 17 non-overlapping half-window chunks
N_BINS = WIN // 2 + 1                    # 33
N_MELS = 16
SR = 3200.0

PATCH_H = 4
PATCH_W = 4
M_TILES = N_MELS // PATCH_H              # 4 mel tiles
T_TILES = N_FRAMES // PATCH_W            # 4 time tiles
N_PATCHES = M_TILES * T_TILES            # 16
EMBED = 32
HEADS = 4
HEAD_DIM = EMBED // HEADS
DEPTH = 2
MLP_HIDDEN = 4 * EMBED
N_TOK = N_PATCHES + 2                    # cls + dist tokens
N_CLASSES = 183                          # PaSSTMTG default
N_CLASSES_PAD = 256                      # lane-dense head output (sliced outside)

# ------------------------- packed-operand slab layout -----------------------
# bf16 MXU weight slab: (N_WSLOTS, 128, 256), one zero-padded matrix per slot.
W_ROWS, W_COLS = 128, 256
W_PATCH = 0                              # per block: +0 qkv, +1 proj, +2 fc1, +3 fc2
W_HEAD = 1 + 4 * DEPTH
N_WSLOTS = W_HEAD + 1

# f32 LN/bias slab: (N_VROWS, 256); per block 8 rows, then 5 final rows.
V_LANES = N_CLASSES_PAD
V_FINAL = 8 * DEPTH
N_VROWS = V_FINAL + 5

# f32 constant slab: (C_ROWS, 128): DFT bases, mel fb, frame perm, tok bias.
C_LANES = 128
C_WDFT = 0
C_MELFB = C_WDFT + WIN                   # 64
C_PERM = C_MELFB + 40                    # 104  (33-row mel fb padded to 40)
C_TOK = C_PERM + N_FRAMES                # 120
C_ROWS = C_TOK + 24                      # 144  (18-row tok bias padded to 24)

_VMEM = pl.BlockSpec(memory_space=pltpu.MemorySpace.VMEM)


# ------------------------------ fused kernel ---------------------------------
def _passt_kernel(x_ref, c_ref, w_ref, v_ref, o_ref, patch_ref, oall_ref, *,
                  apply_sigmoid):
    f32 = jnp.float32
    bf16 = jnp.bfloat16

    def vrow(i, width):
        return v_ref[i:i + 1, 0:width]                     # (1, width) f32

    def layernorm(x, gi, bi, eps=1e-6):
        mu = jnp.mean(x, axis=-1, keepdims=True)
        xc = x - mu
        var = jnp.mean(xc * xc, axis=-1, keepdims=True)
        return xc * lax.rsqrt(var + eps) * vrow(gi, EMBED) + vrow(bi, EMBED)

    def mm(a, w):
        # bf16 MXU operands, f32 accumulation; elementwise math stays f32.
        return jnp.dot(a.astype(bf16), w, preferred_element_type=f32)

    # ----- frontend: windowed rDFT + power + mel + log (all f32) -------------
    chunks = x_ref[0]                                      # (N_CHUNKS, HOP)
    ca = chunks[0:N_FRAMES, :]                             # frame first halves
    cb = chunks[1:N_FRAMES + 1, :]                         # frame second halves
    wtop = c_ref[C_WDFT:C_WDFT + HOP, 0:2 * N_BINS]
    wbot = c_ref[C_WDFT + HOP:C_WDFT + WIN, 0:2 * N_BINS]
    dft = (jnp.dot(ca, wtop, preferred_element_type=f32)
           + jnp.dot(cb, wbot, preferred_element_type=f32))   # (T, 2*N_BINS)
    re = dft[:, 0:N_BINS]
    im = dft[:, N_BINS:2 * N_BINS]
    power = re * re + im * im                              # (T, N_BINS)
    mel = jnp.dot(power, c_ref[C_MELFB:C_MELFB + N_BINS, 0:N_MELS],
                  preferred_element_type=f32)              # (T, N_MELS)
    # Constant frame-row permutation t = 4*ti + pw  ->  r = 4*pw + ti so that
    # the patch re-layout below only needs contiguous (4,4) block copies.
    mel = jnp.dot(c_ref[C_PERM:C_PERM + N_FRAMES, 0:N_FRAMES], mel,
                  preferred_element_type=f32)
    logmel = jnp.log(mel + 1e-5)                           # rows r = 4*pw + ti

    # ----- 4x4 patch re-layout via static block stores into VMEM scratch -----
    # patches[2 + 4*mi + ti, 4*pw + ph] = logmel[4*pw + ti, 4*mi + ph]
    patch_ref[...] = jnp.zeros_like(patch_ref)             # cls/dist rows stay 0
    for pw in range(PATCH_W):
        for mi in range(M_TILES):
            patch_ref[2 + T_TILES * mi:2 + T_TILES * mi + T_TILES,
                      PATCH_H * pw:PATCH_H * pw + PATCH_H] = (
                logmel[T_TILES * pw:T_TILES * pw + T_TILES,
                       PATCH_H * mi:PATCH_H * mi + PATCH_H])

    # ----- patch embed + fused token / positional bias ------------------------
    h = (c_ref[C_TOK:C_TOK + N_TOK, 0:EMBED]
         + mm(patch_ref[...], w_ref[W_PATCH, 0:PATCH_H * PATCH_W, 0:EMBED]))

    # ----- transformer blocks --------------------------------------------------
    for blk in range(DEPTH):
        wb = 1 + 4 * blk
        vb = 8 * blk

        # attention (1/sqrt(head_dim) folded into the Q columns at pack time)
        x1 = layernorm(h, vb + 0, vb + 1)
        qkv = (mm(x1, w_ref[wb + 0, 0:EMBED, 0:3 * EMBED])
               + vrow(vb + 2, 3 * EMBED))                  # (N_TOK, 3*EMBED)
        for hh in range(HEADS):
            c0 = hh * HEAD_DIM
            q = qkv[:, c0:c0 + HEAD_DIM]
            k = qkv[:, EMBED + c0:EMBED + c0 + HEAD_DIM]
            v = qkv[:, 2 * EMBED + c0:2 * EMBED + c0 + HEAD_DIM]
            s = lax.dot_general(q, k, (((1,), (1,)), ((), ())),
                                preferred_element_type=f32)    # q @ k.T
            s = s - jnp.max(s, axis=-1, keepdims=True)
            p = jnp.exp(s)
            p = p / jnp.sum(p, axis=-1, keepdims=True)         # exact softmax
            oall_ref[:, c0:c0 + HEAD_DIM] = jnp.dot(
                p, v, preferred_element_type=f32)
        # single output projection over the re-assembled heads
        h = (h + mm(oall_ref[...], w_ref[wb + 1, 0:EMBED, 0:EMBED])
             + vrow(vb + 3, EMBED))

        # MLP
        x2 = layernorm(h, vb + 4, vb + 5)
        f = (mm(x2, w_ref[wb + 2, 0:EMBED, 0:MLP_HIDDEN])
             + vrow(vb + 6, MLP_HIDDEN))
        # TODO(synk): PaSST/timm use exact erf-GELU; tanh approximation here.
        f = jax.nn.gelu(f, approximate=True)
        h = (h + mm(f, w_ref[wb + 3, 0:MLP_HIDDEN, 0:EMBED])
             + vrow(vb + 7, EMBED))

    # ----- final norm + (cls+dist)/2 pooling + classifier head ----------------
    hn = layernorm(h, V_FINAL + 0, V_FINAL + 1)
    pooled = 0.5 * (hn[0:1, :] + hn[1:2, :])
    pooled = layernorm(pooled, V_FINAL + 2, V_FINAL + 3)
    logits = (mm(pooled, w_ref[W_HEAD, 0:EMBED, 0:N_CLASSES_PAD])
              + vrow(V_FINAL + 4, N_CLASSES_PAD))          # (1, N_CLASSES_PAD)
    if apply_sigmoid:
        logits = 1.0 / (1.0 + jnp.exp(-logits))
    o_ref[0] = logits


def passt_call(xr, cslab, wslab, vslab, apply_sigmoid):
    b = xr.shape[0]
    return pl.pallas_call(
        functools.partial(_passt_kernel, apply_sigmoid=apply_sigmoid),
        out_shape=jax.ShapeDtypeStruct((b, 1, N_CLASSES_PAD), jnp.float32),
        grid=(b,),
        in_specs=[pl.BlockSpec((1, N_CHUNKS, HOP), lambda i: (i, 0, 0)),
                  _VMEM, _VMEM, _VMEM],
        out_specs=pl.BlockSpec((1, 1, N_CLASSES_PAD), lambda i: (i, 0, 0)),
        scratch_shapes=[
            pltpu.VMEM((N_TOK, PATCH_H * PATCH_W), jnp.float32),  # patches
            pltpu.VMEM((N_TOK, EMBED), jnp.float32),              # head concat
        ],
        # batch kept as a parallel grid axis: 2x on v7x's two TensorCores;
        # on single-core v5e/v6e it is just one extra ~0.35us grid step.
        compiler_params=pltpu.CompilerParams(
            dimension_semantics=("parallel",)),
    )(xr, cslab, wslab, vslab)


# --------------------------- frontend constants ------------------------------
def _hz_to_mel(f):
    return 2595.0 * jnp.log10(1.0 + f / 700.0)


def _mel_to_hz(m):
    return 700.0 * (jnp.power(10.0, m / 2595.0) - 1.0)


def make_frontend_constants():
    # Hann window (periodic), folded directly into one (WIN, 2*N_BINS) basis
    # holding [cos | -sin]; split at row HOP for the two-chunk frame matmul.
    n = jnp.arange(WIN, dtype=jnp.float32)
    window = 0.5 - 0.5 * jnp.cos(2.0 * jnp.pi * n / WIN)
    k = jnp.arange(N_BINS, dtype=jnp.float32)[None, :]
    ang = 2.0 * jnp.pi * n[:, None] * k / WIN
    wcos = window[:, None] * jnp.cos(ang)
    wsin = window[:, None] * (-jnp.sin(ang))
    wdft = jnp.concatenate([wcos, wsin], axis=1).astype(jnp.float32)

    # Triangular mel filterbank: (N_BINS, N_MELS)
    mels = jnp.linspace(_hz_to_mel(0.0), _hz_to_mel(SR / 2.0), N_MELS + 2)
    hz = _mel_to_hz(mels)
    bin_freqs = jnp.linspace(0.0, SR / 2.0, N_BINS)
    filters = []
    for m in range(N_MELS):
        lo, ce, up = hz[m], hz[m + 1], hz[m + 2]
        rising = (bin_freqs - lo) / (ce - lo)
        falling = (up - bin_freqs) / (up - ce)
        filters.append(jnp.clip(jnp.minimum(rising, falling), 0.0, None))
    mel_fb = jnp.stack(filters, axis=1).astype(jnp.float32)
    return wdft, mel_fb


# --------------------------------- params ------------------------------------
def init_params(key, n_classes):
    def nrm(k, shape, std=0.02):
        return std * jax.random.normal(k, shape, jnp.float32)

    keys = iter(jax.random.split(key, 32))
    p = {
        "patch_w": nrm(next(keys), (PATCH_H * PATCH_W, EMBED)),
        "patch_b": jnp.zeros((EMBED,), jnp.float32),
        "pos_embed": nrm(next(keys), (N_PATCHES, EMBED)),
        "cls_tok": nrm(next(keys), (1, EMBED)),
        "dist_tok": nrm(next(keys), (1, EMBED)),
        "cls_pos": nrm(next(keys), (2, EMBED)),
        "norm_g": jnp.ones((EMBED,), jnp.float32),
        "norm_b": jnp.zeros((EMBED,), jnp.float32),
        "head_ln_g": jnp.ones((EMBED,), jnp.float32),
        "head_ln_b": jnp.zeros((EMBED,), jnp.float32),
        "head_w": nrm(next(keys), (EMBED, n_classes)),
        "head_b": jnp.zeros((n_classes,), jnp.float32),
    }
    blocks = []
    for _ in range(DEPTH):
        blocks.append({
            "ln1_g": jnp.ones((EMBED,), jnp.float32),
            "ln1_b": jnp.zeros((EMBED,), jnp.float32),
            "qkv_w": nrm(next(keys), (EMBED, 3 * EMBED)),
            "qkv_b": jnp.zeros((3 * EMBED,), jnp.float32),
            "proj_w": nrm(next(keys), (EMBED, EMBED)),
            "proj_b": jnp.zeros((EMBED,), jnp.float32),
            "ln2_g": jnp.ones((EMBED,), jnp.float32),
            "ln2_b": jnp.zeros((EMBED,), jnp.float32),
            "fc1_w": nrm(next(keys), (EMBED, MLP_HIDDEN)),
            "fc1_b": jnp.zeros((MLP_HIDDEN,), jnp.float32),
            "fc2_w": nrm(next(keys), (MLP_HIDDEN, EMBED)),
            "fc2_b": jnp.zeros((EMBED,), jnp.float32),
        })
    p["blocks"] = blocks
    return p


def pack_params(params):
    """One-time host-side packing into 3 slabs: f32 constants (DFT bases, mel
    filterbank, frame-permutation, fused token/pos bias), bf16 MXU weights
    (attention scale folded into Q, head padded to 256 classes), f32 LN/bias
    rows."""
    scale = 1.0 / math.sqrt(HEAD_DIM)

    # ---- f32 constant slab ----------------------------------------------------
    wdft, melfb = make_frontend_constants()
    perm = np.zeros((N_FRAMES, N_FRAMES), np.float32)
    for pw in range(PATCH_W):
        for ti in range(T_TILES):
            perm[pw * T_TILES + ti, PATCH_W * ti + pw] = 1.0
    # rows 0/1: cls/dist token + their positional embedding,
    # rows 2..: positional embedding + patch-embed bias (patch rows only).
    tokbias = jnp.concatenate([
        params["cls_tok"] + params["cls_pos"][0:1],
        params["dist_tok"] + params["cls_pos"][1:2],
        params["pos_embed"] + params["patch_b"][None, :],
    ], axis=0)

    def cpad(a, rows):
        a = jnp.asarray(a, jnp.float32)
        return jnp.pad(a, ((0, rows - a.shape[0]), (0, C_LANES - a.shape[1])))

    cslab = jnp.concatenate(
        [cpad(wdft, C_MELFB - C_WDFT), cpad(melfb, C_PERM - C_MELFB),
         cpad(perm, C_TOK - C_PERM), cpad(tokbias, C_ROWS - C_TOK)], axis=0)
    assert cslab.shape == (C_ROWS, C_LANES)

    # ---- bf16 MXU weight slab ---------------------------------------------------
    def wpad(w):
        return jnp.pad(w, ((0, W_ROWS - w.shape[0]),
                           (0, W_COLS - w.shape[1]))).astype(jnp.bfloat16)

    # within-patch flattening permuted (ph,pw) -> (pw,ph) to match the
    # in-kernel patch scratch column order.
    j = np.arange(PATCH_H * PATCH_W)
    src = (j % PATCH_H) * PATCH_W + (j // PATCH_H)
    ws = [wpad(params["patch_w"][src, :])]
    for blk in params["blocks"]:
        qkv_w = blk["qkv_w"].at[:, :EMBED].multiply(scale)   # fold 1/sqrt(d)
        ws += [wpad(qkv_w), wpad(blk["proj_w"]),
               wpad(blk["fc1_w"]), wpad(blk["fc2_w"])]
    ws.append(wpad(params["head_w"]))
    wslab = jnp.stack(ws, axis=0)
    assert wslab.shape == (N_WSLOTS, W_ROWS, W_COLS)

    # ---- f32 LN / bias vector slab ---------------------------------------------
    def vpadrow(v):
        v = jnp.asarray(v, jnp.float32)
        return jnp.pad(v, (0, V_LANES - v.shape[0]))

    rows = []
    for blk in params["blocks"]:
        qkv_b = blk["qkv_b"].at[:EMBED].multiply(scale)
        rows += [blk["ln1_g"], blk["ln1_b"], qkv_b, blk["proj_b"],
                 blk["ln2_g"], blk["ln2_b"], blk["fc1_b"], blk["fc2_b"]]
    rows += [params["norm_g"], params["norm_b"],
             params["head_ln_g"], params["head_ln_b"], params["head_b"]]
    vslab = jnp.stack([vpadrow(v) for v in rows], axis=0)
    assert vslab.shape == (N_VROWS, V_LANES)
    return cslab, wslab, vslab


# --------------------------------- forward -----------------------------------
@functools.partial(jax.jit, static_argnames=("apply_sigmoid",))
def passt_mtg_forward(x, cslab, wslab, vslab, apply_sigmoid=True):
    # TODO(synk): AugmentMelSTFT preemphasis / SpecAugment and PaSST structured
    # patchout are train-time augmentations and omitted (inference path only).
    b = x.shape[0]
    # Free row-major reshape into non-overlapping half-window chunks; the
    # overlapping-frame extraction happens inside the kernel (no XLA gather).
    xr = x.reshape(b, N_CHUNKS, HOP)
    out = passt_call(xr, cslab, wslab, vslab, apply_sigmoid)   # (B, 1, 256)
    return out.reshape(b, N_CLASSES_PAD)[:, :N_CLASSES]


# ----------------------------------- main -------------------------------------
if __name__ == "__main__":
    key = jax.random.PRNGKey(0)
    k_param, k_x = jax.random.split(key)
    params = init_params(k_param, N_CLASSES)
    cslab, wslab, vslab = pack_params(params)
    x = jax.random.normal(k_x, (BATCH, N_SAMPLES), jnp.float32)

    out = passt_mtg_forward(x, cslab, wslab, vslab, apply_sigmoid=True)
    out = jax.block_until_ready(out)

    assert out.shape == (BATCH, N_CLASSES), out.shape
    assert bool(jnp.all(jnp.isfinite(out)))
    assert bool(jnp.all((out >= 0.0) & (out <= 1.0)))
    print("KERNEL_OK")
</pallas_src>

<mosaic_0001>
module attributes {stable_mosaic.version = 11 : i64} {
  func.func @_passt_kernel(%arg0: i32, %arg1: memref<1x17x32xf32, #tpu.memory_space<vmem>>, %arg2: memref<144x128xf32, #tpu.memory_space<vmem>>, %arg3: memref<10x128x256xbf16, #tpu.memory_space<vmem>>, %arg4: memref<21x256xf32, #tpu.memory_space<vmem>>, %arg5: memref<1x1x256xf32, #tpu.memory_space<vmem>>, %arg6: memref<18x16xf32, #tpu.memory_space<vmem>>, %arg7: memref<18x32xf32, #tpu.memory_space<vmem>>) attributes {dimension_semantics = [#tpu.dimension_semantics<parallel>], iteration_bounds = array<i64: 2>, scalar_prefetch = 0 : i64, scratch_operands = 2 : i64, tpu.core_type = #tpu.core_type<tc>, window_params = [{transform_indices = @transform_0, window_bounds = array<i64: 1, 17, 32>}, {pipeline_mode = #tpu.pipeline_mode<synchronous>, transform_indices = @transform_1, window_bounds = array<i64: 144, 128>}, {pipeline_mode = #tpu.pipeline_mode<synchronous>, transform_indices = @transform_2, window_bounds = array<i64: 10, 128, 256>}, {pipeline_mode = #tpu.pipeline_mode<synchronous>, transform_indices = @transform_3, window_bounds = array<i64: 21, 256>}, {transform_indices = @transform_4, window_bounds = array<i64: 1, 1, 256>}]} {
    %c0 = arith.constant 0 : index
    %c0_0 = arith.constant 0 : index
    %c0_1 = arith.constant 0 : index
    %0 = vector.load %arg1[%c0, %c0_0, %c0_1] : memref<1x17x32xf32, #tpu.memory_space<vmem>>, vector<1x17x32xf32>
    %1 = vector.shape_cast %0 : vector<1x17x32xf32> to vector<17x32xf32>
    %2 = vector.extract_strided_slice %1 {offsets = [0, 0], sizes = [16, 32], strides = [1, 1]} : vector<17x32xf32> to vector<16x32xf32>
    %3 = vector.extract_strided_slice %1 {offsets = [1, 0], sizes = [16, 32], strides = [1, 1]} : vector<17x32xf32> to vector<16x32xf32>
    %c0_2 = arith.constant 0 : index
    %c0_3 = arith.constant 0 : index
    %4 = vector.load %arg2[%c0_2, %c0_3] : memref<144x128xf32, #tpu.memory_space<vmem>>, vector<32x66xf32>
    %c32 = arith.constant 32 : index
    %c0_4 = arith.constant 0 : index
    %5 = vector.load %arg2[%c32, %c0_4] : memref<144x128xf32, #tpu.memory_space<vmem>>, vector<32x66xf32>
    %cst = arith.constant dense<0.000000e+00> : vector<16x66xf32>
    %6 = tpu.matmul %2, %4, %cst {dimension_numbers = #tpu.dot_dimension_numbers<[1], [0], [0], [1], [0, 0, 1, 1], [], []>} : vector<16x32xf32>, vector<32x66xf32>, vector<16x66xf32> -> vector<16x66xf32>
    %cst_5 = arith.constant dense<0.000000e+00> : vector<16x66xf32>
    %7 = tpu.matmul %3, %5, %cst_5 {dimension_numbers = #tpu.dot_dimension_numbers<[1], [0], [0], [1], [0, 0, 1, 1], [], []>} : vector<16x32xf32>, vector<32x66xf32>, vector<16x66xf32> -> vector<16x66xf32>
    %8 = arith.addf %6, %7 : vector<16x66xf32>
    %9 = vector.extract_strided_slice %8 {offsets = [0, 0], sizes = [16, 33], strides = [1, 1]} : vector<16x66xf32> to vector<16x33xf32>
    %10 = vector.extract_strided_slice %8 {offsets = [0, 33], sizes = [16, 33], strides = [1, 1]} : vector<16x66xf32> to vector<16x33xf32>
    %11 = arith.mulf %9, %9 : vector<16x33xf32>
    %12 = arith.mulf %10, %10 : vector<16x33xf32>
    %13 = arith.addf %11, %12 : vector<16x33xf32>
    %c64 = arith.constant 64 : index
    %c0_6 = arith.constant 0 : index
    %14 = vector.load %arg2[%c64, %c0_6] : memref<144x128xf32, #tpu.memory_space<vmem>>, vector<33x16xf32>
    %cst_7 = arith.constant dense<0.000000e+00> : vector<16x16xf32>
    %15 = tpu.matmul %13, %14, %cst_7 {dimension_numbers = #tpu.dot_dimension_numbers<[1], [0], [0], [1], [0, 0, 1, 1], [], []>} : vector<16x33xf32>, vector<33x16xf32>, vector<16x16xf32> -> vector<16x16xf32>
    %c104 = arith.constant 104 : index
    %c0_8 = arith.constant 0 : index
    %16 = vector.load %arg2[%c104, %c0_8] : memref<144x128xf32, #tpu.memory_space<vmem>>, vector<16x16xf32>
    %cst_9 = arith.constant dense<0.000000e+00> : vector<16x16xf32>
    %17 = tpu.matmul %16, %15, %cst_9 {dimension_numbers = #tpu.dot_dimension_numbers<[1], [0], [0], [1], [0, 0, 1, 1], [], []>} : vector<16x16xf32>, vector<16x16xf32>, vector<16x16xf32> -> vector<16x16xf32>
    %cst_10 = arith.constant 9.99999974E-6 : f32
    %18 = vector.broadcast %cst_10 : f32 to vector<16x16xf32>
    %19 = arith.addf %17, %18 : vector<16x16xf32>
    %20 = math.log %19 : vector<16x16xf32>
    %cst_11 = arith.constant 0.000000e+00 : f32
    %21 = vector.broadcast %cst_11 : f32 to vector<18x16xf32>
    %c0_12 = arith.constant 0 : index
    %c0_13 = arith.constant 0 : index
    %22 = vector.load %arg6[%c0_12, %c0_13] : memref<18x16xf32, #tpu.memory_space<vmem>>, vector<18x16xf32>
    tpu.vector_store %arg6[%c0_12, %c0_13], %21 {strides = array<i32>} : memref<18x16xf32, #tpu.memory_space<vmem>>, vector<18x16xf32>,
    %23 = vector.extract_strided_slice %20 {offsets = [0, 0], sizes = [4, 4], strides = [1, 1]} : vector<16x16xf32> to vector<4x4xf32>
    %c2 = arith.constant 2 : index
    %c0_14 = arith.constant 0 : index
    %24 = vector.load %arg6[%c2, %c0_14] : memref<18x16xf32, #tpu.memory_space<vmem>>, vector<4x4xf32>
    tpu.vector_store %arg6[%c2, %c0_14], %23 {strides = array<i32>} : memref<18x16xf32, #tpu.memory_space<vmem>>, vector<4x4xf32>,
    %25 = vector.extract_strided_slice %20 {offsets = [0, 4], sizes = [4, 4], strides = [1, 1]} : vector<16x16xf32> to vector<4x4xf32>
    %c6 = arith.constant 6 : index
    %c0_15 = arith.constant 0 : index
    %26 = vector.load %arg6[%c6, %c0_15] : memref<18x16xf32, #tpu.memory_space<vmem>>, vector<4x4xf32>
    tpu.vector_store %arg6[%c6, %c0_15], %25 {strides = array<i32>} : memref<18x16xf32, #tpu.memory_space<vmem>>, vector<4x4xf32>,
    %27 = vector.extract_strided_slice %20 {offsets = [0, 8], sizes = [4, 4], strides = [1, 1]} : vector<16x16xf32> to vector<4x4xf32>
    %c10 = arith.constant 10 : index
    %c0_16 = arith.constant 0 : index
    %28 = vector.load %arg6[%c10, %c0_16] : memref<18x16xf32, #tpu.memory_space<vmem>>, vector<4x4xf32>
    tpu.vector_store %arg6[%c10, %c0_16], %27 {strides = array<i32>} : memref<18x16xf32, #tpu.memory_space<vmem>>, vector<4x4xf32>,
    %29 = vector.extract_strided_slice %20 {offsets = [0, 12], sizes = [4, 4], strides = [1, 1]} : vector<16x16xf32> to vector<4x4xf32>
    %c14 = arith.constant 14 : index
    %c0_17 = arith.constant 0 : index
    %30 = vector.load %arg6[%c14, %c0_17] : memref<18x16xf32, #tpu.memory_space<vmem>>, vector<4x4xf32>
    tpu.vector_store %arg6[%c14, %c0_17], %29 {strides = array<i32>} : memref<18x16xf32, #tpu.memory_space<vmem>>, vector<4x4xf32>,
    %31 = vector.extract_strided_slice %20 {offsets = [4, 0], sizes = [4, 4], strides = [1, 1]} : vector<16x16xf32> to vector<4x4xf32>
    %c2_18 = arith.constant 2 : index
    %c4 = arith.constant 4 : index
    %32 = vector.load %arg6[%c2_18, %c4] : memref<18x16xf32, #tpu.memory_space<vmem>>, vector<4x4xf32>
    tpu.vector_store %arg6[%c2_18, %c4], %31 {strides = array<i32>} : memref<18x16xf32, #tpu.memory_space<vmem>>, vector<4x4xf32>,
    %33 = vector.extract_strided_slice %20 {offsets = [4, 4], sizes = [4, 4], strides = [1, 1]} : vector<16x16xf32> to vector<4x4xf32>
    %c6_19 = arith.constant 6 : index
    %c4_20 = arith.constant 4 : index
    %34 = vector.load %arg6[%c6_19, %c4_20] : memref<18x16xf32, #tpu.memory_space<vmem>>, vector<4x4xf32>
    tpu.vector_store %arg6[%c6_19, %c4_20], %33 {strides = array<i32>} : memref<18x16xf32, #tpu.memory_space<vmem>>, vector<4x4xf32>,
    %35 = vector.extract_strided_slice %20 {offsets = [4, 8], sizes = [4, 4], strides = [1, 1]} : vector<16x16xf32> to vector<4x4xf32>
    %c10_21 = arith.constant 10 : index
    %c4_22 = arith.constant 4 : index
    %36 = vector.load %arg6[%c10_21, %c4_22] : memref<18x16xf32, #tpu.memory_space<vmem>>, vector<4x4xf32>
    tpu.vector_store %arg6[%c10_21, %c4_22], %35 {strides = array<i32>} : memref<18x16xf32, #tpu.memory_space<vmem>>, vector<4x4xf32>,
    %37 = vector.extract_strided_slice %20 {offsets = [4, 12], sizes = [4, 4], strides = [1, 1]} : vector<16x16xf32> to vector<4x4xf32>
    %c14_23 = arith.constant 14 : index
    %c4_24 = arith.constant 4 : index
    %38 = vector.load %arg6[%c14_23, %c4_24] : memref<18x16xf32, #tpu.memory_space<vmem>>, vector<4x4xf32>
    tpu.vector_store %arg6[%c14_23, %c4_24], %37 {strides = array<i32>} : memref<18x16xf32, #tpu.memory_space<vmem>>, vector<4x4xf32>,
    %39 = vector.extract_strided_slice %20 {offsets = [8, 0], sizes = [4, 4], strides = [1, 1]} : vector<16x16xf32> to vector<4x4xf32>
    %c2_25 = arith.constant 2 : index
    %c8 = arith.constant 8 : index
    %40 = vector.load %arg6[%c2_25, %c8] : memref<18x16xf32, #tpu.memory_space<vmem>>, vector<4x4xf32>
    tpu.vector_store %arg6[%c2_25, %c8], %39 {strides = array<i32>} : memref<18x16xf32, #tpu.memory_space<vmem>>, vector<4x4xf32>,
    %41 = vector.extract_strided_slice %20 {offsets = [8, 4], sizes = [4, 4], strides = [1, 1]} : vector<16x16xf32> to vector<4x4xf32>
    %c6_26 = arith.constant 6 : index
    %c8_27 = arith.constant 8 : index
    %42 = vector.load %arg6[%c6_26, %c8_27] : memref<18x16xf32, #tpu.memory_space<vmem>>, vector<4x4xf32>
    tpu.vector_store %arg6[%c6_26, %c8_27], %41 {strides = array<i32>} : memref<18x16xf32, #tpu.memory_space<vmem>>, vector<4x4xf32>,
    %43 = vector.extract_strided_slice %20 {offsets = [8, 8], sizes = [4, 4], strides = [1, 1]} : vector<16x16xf32> to vector<4x4xf32>
    %c10_28 = arith.constant 10 : index
    %c8_29 = arith.constant 8 : index
    %44 = vector.load %arg6[%c10_28, %c8_29] : memref<18x16xf32, #tpu.memory_space<vmem>>, vector<4x4xf32>
    tpu.vector_store %arg6[%c10_28, %c8_29], %43 {strides = array<i32>} : memref<18x16xf32, #tpu.memory_space<vmem>>, vector<4x4xf32>,
    %45 = vector.extract_strided_slice %20 {offsets = [8, 12], sizes = [4, 4], strides = [1, 1]} : vector<16x16xf32> to vector<4x4xf32>
    %c14_30 = arith.constant 14 : index
    %c8_31 = arith.constant 8 : index
    %46 = vector.load %arg6[%c14_30, %c8_31] : memref<18x16xf32, #tpu.memory_space<vmem>>, vector<4x4xf32>
    tpu.vector_store %arg6[%c14_30, %c8_31], %45 {strides = array<i32>} : memref<18x16xf32, #tpu.memory_space<vmem>>, vector<4x4xf32>,
    %47 = vector.extract_strided_slice %20 {offsets = [12, 0], sizes = [4, 4], strides = [1, 1]} : vector<16x16xf32> to vector<4x4xf32>
    %c2_32 = arith.constant 2 : index
    %c12 = arith.constant 12 : index
    %48 = vector.load %arg6[%c2_32, %c12] : memref<18x16xf32, #tpu.memory_space<vmem>>, vector<4x4xf32>
    tpu.vector_store %arg6[%c2_32, %c12], %47 {strides = array<i32>} : memref<18x16xf32, #tpu.memory_space<vmem>>, vector<4x4xf32>,
    %49 = vector.extract_strided_slice %20 {offsets = [12, 4], sizes = [4, 4], strides = [1, 1]} : vector<16x16xf32> to vector<4x4xf32>
    %c6_33 = arith.constant 6 : index
    %c12_34 = arith.constant 12 : index
    %50 = vector.load %arg6[%c6_33, %c12_34] : memref<18x16xf32, #tpu.memory_space<vmem>>, vector<4x4xf32>
    tpu.vector_store %arg6[%c6_33, %c12_34], %49 {strides = array<i32>} : memref<18x16xf32, #tpu.memory_space<vmem>>, vector<4x4xf32>,
    %51 = vector.extract_strided_slice %20 {offsets = [12, 8], sizes = [4, 4], strides = [1, 1]} : vector<16x16xf32> to vector<4x4xf32>
    %c10_35 = arith.constant 10 : index
    %c12_36 = arith.constant 12 : index
    %52 = vector.load %arg6[%c10_35, %c12_36] : memref<18x16xf32, #tpu.memory_space<vmem>>, vector<4x4xf32>
    tpu.vector_store %arg6[%c10_35, %c12_36], %51 {strides = array<i32>} : memref<18x16xf32, #tpu.memory_space<vmem>>, vector<4x4xf32>,
    %53 = vector.extract_strided_slice %20 {offsets = [12, 12], sizes = [4, 4], strides = [1, 1]} : vector<16x16xf32> to vector<4x4xf32>
    %c14_37 = arith.constant 14 : index
    %c12_38 = arith.constant 12 : index
    %54 = vector.load %arg6[%c14_37, %c12_38] : memref<18x16xf32, #tpu.memory_space<vmem>>, vector<4x4xf32>
    tpu.vector_store %arg6[%c14_37, %c12_38], %53 {strides = array<i32>} : memref<18x16xf32, #tpu.memory_space<vmem>>, vector<4x4xf32>,
    %c120 = arith.constant 120 : index
    %c0_39 = arith.constant 0 : index
    %55 = vector.load %arg2[%c120, %c0_39] : memref<144x128xf32, #tpu.memory_space<vmem>>, vector<18x32xf32>
    %c0_40 = arith.constant 0 : index
    %c0_41 = arith.constant 0 : index
    %56 = vector.load %arg6[%c0_40, %c0_41] : memref<18x16xf32, #tpu.memory_space<vmem>>, vector<18x16xf32>
    %c0_42 = arith.constant 0 : index
    %c0_43 = arith.constant 0 : index
    %c0_44 = arith.constant 0 : index
    %57 = vector.load %arg3[%c0_42, %c0_43, %c0_44] : memref<10x128x256xbf16, #tpu.memory_space<vmem>>, vector<1x16x32xbf16>
    %58 = vector.shape_cast %57 : vector<1x16x32xbf16> to vector<16x32xbf16>
    %59 = arith.truncf %56 : vector<18x16xf32> to vector<18x16xbf16>
    %cst_45 = arith.constant dense<0.000000e+00> : vector<18x32xf32>
    %60 = tpu.matmul %59, %58, %cst_45 {dimension_numbers = #tpu.dot_dimension_numbers<[1], [0], [0], [1], [0, 0, 1, 1], [], []>} : vector<18x16xbf16>, vector<16x32xbf16>, vector<18x32xf32> -> vector<18x32xf32>
    %61 = arith.addf %55, %60 : vector<18x32xf32>
    %cst_46 = arith.constant dense<0.000000e+00> : vector<18xf32>
    %62 = vector.multi_reduction <add>, %61, %cst_46 [1] : vector<18x32xf32> to vector<18xf32>
    %63 = vector.shape_cast %62 : vector<18xf32> to vector<18x1xf32>
    %cst_47 = arith.constant 3.200000e+01 : f32
    %64 = vector.broadcast %cst_47 : f32 to vector<18x1xf32>
    %65 = arith.divf %63, %64 : vector<18x1xf32>
    %66 = vector.broadcast %65 : vector<18x1xf32> to vector<18x32xf32>
    %67 = arith.subf %61, %66 : vector<18x32xf32>
    %68 = arith.mulf %67, %67 : vector<18x32xf32>
    %cst_48 = arith.constant dense<0.000000e+00> : vector<18xf32>
    %69 = vector.multi_reduction <add>, %68, %cst_48 [1] : vector<18x32xf32> to vector<18xf32>
    %70 = vector.shape_cast %69 : vector<18xf32> to vector<18x1xf32>
    %cst_49 = arith.constant 3.200000e+01 : f32
    %71 = vector.broadcast %cst_49 : f32 to vector<18x1xf32>
    %72 = arith.divf %70, %71 : vector<18x1xf32>
    %cst_50 = arith.constant 9.99999997E-7 : f32
    %73 = vector.broadcast %cst_50 : f32 to vector<18x1xf32>
    %74 = arith.addf %72, %73 : vector<18x1xf32>
    %75 = math.rsqrt %74 : vector<18x1xf32>
    %76 = vector.broadcast %75 : vector<18x1xf32> to vector<18x32xf32>
    %77 = arith.mulf %67, %76 : vector<18x32xf32>
    %c0_51 = arith.constant 0 : index
    %c0_52 = arith.constant 0 : index
    %78 = vector.load %arg4[%c0_51, %c0_52] : memref<21x256xf32, #tpu.memory_space<vmem>>, vector<1x32xf32>
    %79 = vector.broadcast %78 : vector<1x32xf32> to vector<18x32xf32>
    %80 = arith.mulf %77, %79 : vector<18x32xf32>
    %c1 = arith.constant 1 : index
    %c0_53 = arith.constant 0 : index
    %81 = vector.load %arg4[%c1, %c0_53] : memref<21x256xf32, #tpu.memory_space<vmem>>, vector<1x32xf32>
    %82 = vector.broadcast %81 : vector<1x32xf32> to vector<18x32xf32>
    %83 = arith.addf %80, %82 : vector<18x32xf32>
    %c1_54 = arith.constant 1 : index
    %c0_55 = arith.constant 0 : index
    %c0_56 = arith.constant 0 : index
    %84 = vector.load %arg3[%c1_54, %c0_55, %c0_56] : memref<10x128x256xbf16, #tpu.memory_space<vmem>>, vector<1x32x96xbf16>
    %85 = vector.shape_cast %84 : vector<1x32x96xbf16> to vector<32x96xbf16>
    %86 = arith.truncf %83 : vector<18x32xf32> to vector<18x32xbf16>
    %cst_57 = arith.constant dense<0.000000e+00> : vector<18x96xf32>
    %87 = tpu.matmul %86, %85, %cst_57 {dimension_numbers = #tpu.dot_dimension_numbers<[1], [0], [0], [1], [0, 0, 1, 1], [], []>} : vector<18x32xbf16>, vector<32x96xbf16>, vector<18x96xf32> -> vector<18x96xf32>
    %c2_58 = arith.constant 2 : index
    %c0_59 = arith.constant 0 : index
    %88 = vector.load %arg4[%c2_58, %c0_59] : memref<21x256xf32, #tpu.memory_space<vmem>>, vector<1x96xf32>
    %89 = vector.broadcast %88 : vector<1x96xf32> to vector<18x96xf32>
    %90 = arith.addf %87, %89 : vector<18x96xf32>
    %91 = vector.extract_strided_slice %90 {offsets = [0, 0], sizes = [18, 8], strides = [1, 1]} : vector<18x96xf32> to vector<18x8xf32>
    %92 = vector.extract_strided_slice %90 {offsets = [0, 32], sizes = [18, 8], strides = [1, 1]} : vector<18x96xf32> to vector<18x8xf32>
    %93 = vector.extract_strided_slice %90 {offsets = [0, 64], sizes = [18, 8], strides = [1, 1]} : vector<18x96xf32> to vector<18x8xf32>
    %cst_60 = arith.constant dense<0.000000e+00> : vector<18x18xf32>
    %94 = tpu.matmul %91, %92, %cst_60 {dimension_numbers = #tpu.dot_dimension_numbers<[1], [1], [0], [0], [0, 0, 1, 0], [], []>} : vector<18x8xf32>, vector<18x8xf32>, vector<18x18xf32> -> vector<18x18xf32>
    %cst_61 = arith.constant dense<0xFF800000> : vector<18xf32>
    %95 = vector.multi_reduction <maximumf>, %94, %cst_61 [1] : vector<18x18xf32> to vector<18xf32>
    %96 = vector.shape_cast %95 : vector<18xf32> to vector<18x1xf32>
    %97 = vector.broadcast %96 : vector<18x1xf32> to vector<18x18xf32>
    %98 = arith.subf %94, %97 : vector<18x18xf32>
    %99 = math.exp %98 : vector<18x18xf32>
    %cst_62 = arith.constant dense<0.000000e+00> : vector<18xf32>
    %100 = vector.multi_reduction <add>, %99, %cst_62 [1] : vector<18x18xf32> to vector<18xf32>
    %101 = vector.shape_cast %100 : vector<18xf32> to vector<18x1xf32>
    %102 = vector.broadcast %101 : vector<18x1xf32> to vector<18x18xf32>
    %103 = arith.divf %99, %102 : vector<18x18xf32>
    %cst_63 = arith.constant dense<0.000000e+00> : vector<18x8xf32>
    %104 = tpu.matmul %103, %93, %cst_63 {dimension_numbers = #tpu.dot_dimension_numbers<[1], [0], [0], [1], [0, 0, 1, 1], [], []>} : vector<18x18xf32>, vector<18x8xf32>, vector<18x8xf32> -> vector<18x8xf32>
    %c0_64 = arith.constant 0 : index
    %c0_65 = arith.constant 0 : index
    %105 = vector.load %arg7[%c0_64, %c0_65] : memref<18x32xf32, #tpu.memory_space<vmem>>, vector<18x8xf32>
    tpu.vector_store %arg7[%c0_64, %c0_65], %104 {strides = array<i32>} : memref<18x32xf32, #tpu.memory_space<vmem>>, vector<18x8xf32>,
    %106 = vector.extract_strided_slice %90 {offsets = [0, 8], sizes = [18, 8], strides = [1, 1]} : vector<18x96xf32> to vector<18x8xf32>
    %107 = vector.extract_strided_slice %90 {offsets = [0, 40], sizes = [18, 8], strides = [1, 1]} : vector<18x96xf32> to vector<18x8xf32>
    %108 = vector.extract_strided_slice %90 {offsets = [0, 72], sizes = [18, 8], strides = [1, 1]} : vector<18x96xf32> to vector<18x8xf32>
    %cst_66 = arith.constant dense<0.000000e+00> : vector<18x18xf32>
    %109 = tpu.matmul %106, %107, %cst_66 {dimension_numbers = #tpu.dot_dimension_numbers<[1], [1], [0], [0], [0, 0, 1, 0], [], []>} : vector<18x8xf32>, vector<18x8xf32>, vector<18x18xf32> -> vector<18x18xf32>
    %cst_67 = arith.constant dense<0xFF800000> : vector<18xf32>
    %110 = vector.multi_reduction <maximumf>, %109, %cst_67 [1] : vector<18x18xf32> to vector<18xf32>
    %111 = vector.shape_cast %110 : vector<18xf32> to vector<18x1xf32>
    %112 = vector.broadcast %111 : vector<18x1xf32> to vector<18x18xf32>
    %113 = arith.subf %109, %112 : vector<18x18xf32>
    %114 = math.exp %113 : vector<18x18xf32>
    %cst_68 = arith.constant dense<0.000000e+00> : vector<18xf32>
    %115 = vector.multi_reduction <add>, %114, %cst_68 [1] : vector<18x18xf32> to vector<18xf32>
    %116 = vector.shape_cast %115 : vector<18xf32> to vector<18x1xf32>
    %117 = vector.broadcast %116 : vector<18x1xf32> to vector<18x18xf32>
    %118 = arith.divf %114, %117 : vector<18x18xf32>
    %cst_69 = arith.constant dense<0.000000e+00> : vector<18x8xf32>
    %119 = tpu.matmul %118, %108, %cst_69 {dimension_numbers = #tpu.dot_dimension_numbers<[1], [0], [0], [1], [0, 0, 1, 1], [], []>} : vector<18x18xf32>, vector<18x8xf32>, vector<18x8xf32> -> vector<18x8xf32>
    %c0_70 = arith.constant 0 : index
    %c8_71 = arith.constant 8 : index
    %120 = vector.load %arg7[%c0_70, %c8_71] : memref<18x32xf32, #tpu.memory_space<vmem>>, vector<18x8xf32>
    tpu.vector_store %arg7[%c0_70, %c8_71], %119 {strides = array<i32>} : memref<18x32xf32, #tpu.memory_space<vmem>>, vector<18x8xf32>,
    %121 = vector.extract_strided_slice %90 {offsets = [0, 16], sizes = [18, 8], strides = [1, 1]} : vector<18x96xf32> to vector<18x8xf32>
    %122 = vector.extract_strided_slice %90 {offsets = [0, 48], sizes = [18, 8], strides = [1, 1]} : vector<18x96xf32> to vector<18x8xf32>
    %123 = vector.extract_strided_slice %90 {offsets = [0, 80], sizes = [18, 8], strides = [1, 1]} : vector<18x96xf32> to vector<18x8xf32>
    %cst_72 = arith.constant dense<0.000000e+00> : vector<18x18xf32>
    %124 = tpu.matmul %121, %122, %cst_72 {dimension_numbers = #tpu.dot_dimension_numbers<[1], [1], [0], [0], [0, 0, 1, 0], [], []>} : vector<18x8xf32>, vector<18x8xf32>, vector<18x18xf32> -> vector<18x18xf32>
    %cst_73 = arith.constant dense<0xFF800000> : vector<18xf32>
    %125 = vector.multi_reduction <maximumf>, %124, %cst_73 [1] : vector<18x18xf32> to vector<18xf32>
    %126 = vector.shape_cast %125 : vector<18xf32> to vector<18x1xf32>
    %127 = vector.broadcast %126 : vector<18x1xf32> to vector<18x18xf32>
    %128 = arith.subf %124, %127 : vector<18x18xf32>
    %129 = math.exp %128 : vector<18x18xf32>
    %cst_74 = arith.constant dense<0.000000e+00> : vector<18xf32>
    %130 = vector.multi_reduction <add>, %129, %cst_74 [1] : vector<18x18xf32> to vector<18xf32>
    %131 = vector.shape_cast %130 : vector<18xf32> to vector<18x1xf32>
    %132 = vector.broadcast %131 : vector<18x1xf32> to vector<18x18xf32>
    %133 = arith.divf %129, %132 : vector<18x18xf32>
    %cst_75 = arith.constant dense<0.000000e+00> : vector<18x8xf32>
    %134 = tpu.matmul %133, %123, %cst_75 {dimension_numbers = #tpu.dot_dimension_numbers<[1], [0], [0], [1], [0, 0, 1, 1], [], []>} : vector<18x18xf32>, vector<18x8xf32>, vector<18x8xf32> -> vector<18x8xf32>
    %c0_76 = arith.constant 0 : index
    %c16 = arith.constant 16 : index
    %135 = vector.load %arg7[%c0_76, %c16] : memref<18x32xf32, #tpu.memory_space<vmem>>, vector<18x8xf32>
    tpu.vector_store %arg7[%c0_76, %c16], %134 {strides = array<i32>} : memref<18x32xf32, #tpu.memory_space<vmem>>, vector<18x8xf32>,
    %136 = vector.extract_strided_slice %90 {offsets = [0, 24], sizes = [18, 8], strides = [1, 1]} : vector<18x96xf32> to vector<18x8xf32>
    %137 = vector.extract_strided_slice %90 {offsets = [0, 56], sizes = [18, 8], strides = [1, 1]} : vector<18x96xf32> to vector<18x8xf32>
    %138 = vector.extract_strided_slice %90 {offsets = [0, 88], sizes = [18, 8], strides = [1, 1]} : vector<18x96xf32> to vector<18x8xf32>
    %cst_77 = arith.constant dense<0.000000e+00> : vector<18x18xf32>
    %139 = tpu.matmul %136, %137, %cst_77 {dimension_numbers = #tpu.dot_dimension_numbers<[1], [1], [0], [0], [0, 0, 1, 0], [], []>} : vector<18x8xf32>, vector<18x8xf32>, vector<18x18xf32> -> vector<18x18xf32>
    %cst_78 = arith.constant dense<0xFF800000> : vector<18xf32>
    %140 = vector.multi_reduction <maximumf>, %139, %cst_78 [1] : vector<18x18xf32> to vector<18xf32>
    %141 = vector.shape_cast %140 : vector<18xf32> to vector<18x1xf32>
    %142 = vector.broadcast %141 : vector<18x1xf32> to vector<18x18xf32>
    %143 = arith.subf %139, %142 : vector<18x18xf32>
    %144 = math.exp %143 : vector<18x18xf32>
    %cst_79 = arith.constant dense<0.000000e+00> : vector<18xf32>
    %145 = vector.multi_reduction <add>, %144, %cst_79 [1] : vector<18x18xf32> to vector<18xf32>
    %146 = vector.shape_cast %145 : vector<18xf32> to vector<18x1xf32>
    %147 = vector.broadcast %146 : vector<18x1xf32> to vector<18x18xf32>
    %148 = arith.divf %144, %147 : vector<18x18xf32>
    %cst_80 = arith.constant dense<0.000000e+00> : vector<18x8xf32>
    %149 = tpu.matmul %148, %138, %cst_80 {dimension_numbers = #tpu.dot_dimension_numbers<[1], [0], [0], [1], [0, 0, 1, 1], [], []>} : vector<18x18xf32>, vector<18x8xf32>, vector<18x8xf32> -> vector<18x8xf32>
    %c0_81 = arith.constant 0 : index
    %c24 = arith.constant 24 : index
    %150 = vector.load %arg7[%c0_81, %c24] : memref<18x32xf32, #tpu.memory_space<vmem>>, vector<18x8xf32>
    tpu.vector_store %arg7[%c0_81, %c24], %149 {strides = array<i32>} : memref<18x32xf32, #tpu.memory_space<vmem>>, vector<18x8xf32>,
    %c0_82 = arith.constant 0 : index
    %c0_83 = arith.constant 0 : index
    %151 = vector.load %arg7[%c0_82, %c0_83] : memref<18x32xf32, #tpu.memory_space<vmem>>, vector<18x32xf32>
    %c2_84 = arith.constant 2 : index
    %c0_85 = arith.constant 0 : index
    %c0_86 = arith.constant 0 : index
    %152 = vector.load %arg3[%c2_84, %c0_85, %c0_86] : memref<10x128x256xbf16, #tpu.memory_space<vmem>>, vector<1x32x32xbf16>
    %153 = vector.shape_cast %152 : vector<1x32x32xbf16> to vector<32x32xbf16>
    %154 = arith.truncf %151 : vector<18x32xf32> to vector<18x32xbf16>
    %cst_87 = arith.constant dense<0.000000e+00> : vector<18x32xf32>
    %155 = tpu.matmul %154, %153, %cst_87 {dimension_numbers = #tpu.dot_dimension_numbers<[1], [0], [0], [1], [0, 0, 1, 1], [], []>} : vector<18x32xbf16>, vector<32x32xbf16>, vector<18x32xf32> -> vector<18x32xf32>
    %156 = arith.addf %61, %155 : vector<18x32xf32>
    %c3 = arith.constant 3 : index
    %c0_88 = arith.constant 0 : index
    %157 = vector.load %arg4[%c3, %c0_88] : memref<21x256xf32, #tpu.memory_space<vmem>>, vector<1x32xf32>
    %158 = vector.broadcast %157 : vector<1x32xf32> to vector<18x32xf32>
    %159 = arith.addf %156, %158 : vector<18x32xf32>
    %cst_89 = arith.constant dense<0.000000e+00> : vector<18xf32>
    %160 = vector.multi_reduction <add>, %159, %cst_89 [1] : vector<18x32xf32> to vector<18xf32>
    %161 = vector.shape_cast %160 : vector<18xf32> to vector<18x1xf32>
    %cst_90 = arith.constant 3.200000e+01 : f32
    %162 = vector.broadcast %cst_90 : f32 to vector<18x1xf32>
    %163 = arith.divf %161, %162 : vector<18x1xf32>
    %164 = vector.broadcast %163 : vector<18x1xf32> to vector<18x32xf32>
    %165 = arith.subf %159, %164 : vector<18x32xf32>
    %166 = arith.mulf %165, %165 : vector<18x32xf32>
    %cst_91 = arith.constant dense<0.000000e+00> : vector<18xf32>
    %167 = vector.multi_reduction <add>, %166, %cst_91 [1] : vector<18x32xf32> to vector<18xf32>
    %168 = vector.shape_cast %167 : vector<18xf32> to vector<18x1xf32>
    %cst_92 = arith.constant 3.200000e+01 : f32
    %169 = vector.broadcast %cst_92 : f32 to vector<18x1xf32>
    %170 = arith.divf %168, %169 : vector<18x1xf32>
    %cst_93 = arith.constant 9.99999997E-7 : f32
    %171 = vector.broadcast %cst_93 : f32 to vector<18x1xf32>
    %172 = arith.addf %170, %171 : vector<18x1xf32>
    %173 = math.rsqrt %172 : vector<18x1xf32>
    %174 = vector.broadcast %173 : vector<18x1xf32> to vector<18x32xf32>
    %175 = arith.mulf %165, %174 : vector<18x32xf32>
    %c4_94 = arith.constant 4 : index
    %c0_95 = arith.constant 0 : index
    %176 = vector.load %arg4[%c4_94, %c0_95] : memref<21x256xf32, #tpu.memory_space<vmem>>, vector<1x32xf32>
    %177 = vector.broadcast %176 : vector<1x32xf32> to vector<18x32xf32>
    %178 = arith.mulf %175, %177 : vector<18x32xf32>
    %c5 = arith.constant 5 : index
    %c0_96 = arith.constant 0 : index
    %179 = vector.load %arg4[%c5, %c0_96] : memref<21x256xf32, #tpu.memory_space<vmem>>, vector<1x32xf32>
    %180 = vector.broadcast %179 : vector<1x32xf32> to vector<18x32xf32>
    %181 = arith.addf %178, %180 : vector<18x32xf32>
    %c3_97 = arith.constant 3 : index
    %c0_98 = arith.constant 0 : index
    %c0_99 = arith.constant 0 : index
    %182 = vector.load %arg3[%c3_97, %c0_98, %c0_99] : memref<10x128x256xbf16, #tpu.memory_space<vmem>>, vector<1x32x128xbf16>
    %183 = vector.shape_cast %182 : vector<1x32x128xbf16> to vector<32x128xbf16>
    %184 = arith.truncf %181 : vector<18x32xf32> to vector<18x32xbf16>
    %cst_100 = arith.constant dense<0.000000e+00> : vector<18x128xf32>
    %185 = tpu.matmul %184, %183, %cst_100 {dimension_numbers = #tpu.dot_dimension_numbers<[1], [0], [0], [1], [0, 0, 1, 1], [], []>} : vector<18x32xbf16>, vector<32x128xbf16>, vector<18x128xf32> -> vector<18x128xf32>
    %c6_101 = arith.constant 6 : index
    %c0_102 = arith.constant 0 : index
    %186 = vector.load %arg4[%c6_101, %c0_102] : memref<21x256xf32, #tpu.memory_space<vmem>>, vector<1x128xf32>
    %187 = vector.broadcast %186 : vector<1x128xf32> to vector<18x128xf32>
    %188 = arith.addf %185, %187 : vector<18x128xf32>
    %189 = arith.mulf %188, %188 : vector<18x128xf32>
    %190 = arith.mulf %188, %189 : vector<18x128xf32>
    %cst_103 = arith.constant 4.471500e-02 : f32
    %191 = vector.broadcast %cst_103 : f32 to vector<18x128xf32>
    %192 = arith.mulf %191, %190 : vector<18x128xf32>
    %193 = arith.addf %188, %192 : vector<18x128xf32>
    %cst_104 = arith.constant 0.797884583 : f32
    %194 = vector.broadcast %cst_104 : f32 to vector<18x128xf32>
    %195 = arith.mulf %194, %193 : vector<18x128xf32>
    %196 = math.tanh %195 : vector<18x128xf32>
    %cst_105 = arith.constant 1.000000e+00 : f32
    %197 = vector.broadcast %cst_105 : f32 to vector<18x128xf32>
    %198 = arith.addf %197, %196 : vector<18x128xf32>
    %cst_106 = arith.constant 5.000000e-01 : f32
    %199 = vector.broadcast %cst_106 : f32 to vector<18x128xf32>
    %200 = arith.mulf %199, %198 : vector<18x128xf32>
    %201 = arith.mulf %188, %200 : vector<18x128xf32>
    %c4_107 = arith.constant 4 : index
    %c0_108 = arith.constant 0 : index
    %c0_109 = arith.constant 0 : index
    %202 = vector.load %arg3[%c4_107, %c0_108, %c0_109] : memref<10x128x256xbf16, #tpu.memory_space<vmem>>, vector<1x128x32xbf16>
    %203 = vector.shape_cast %202 : vector<1x128x32xbf16> to vector<128x32xbf16>
    %204 = arith.truncf %201 : vector<18x128xf32> to vector<18x128xbf16>
    %cst_110 = arith.constant dense<0.000000e+00> : vector<18x32xf32>
    %205 = tpu.matmul %204, %203, %cst_110 {dimension_numbers = #tpu.dot_dimension_numbers<[1], [0], [0], [1], [0, 0, 1, 1], [], []>} : vector<18x128xbf16>, vector<128x32xbf16>, vector<18x32xf32> -> vector<18x32xf32>
    %206 = arith.addf %159, %205 : vector<18x32xf32>
    %c7 = arith.constant 7 : index
    %c0_111 = arith.constant 0 : index
    %207 = vector.load %arg4[%c7, %c0_111] : memref<21x256xf32, #tpu.memory_space<vmem>>, vector<1x32xf32>
    %208 = vector.broadcast %207 : vector<1x32xf32> to vector<18x32xf32>
    %209 = arith.addf %206, %208 : vector<18x32xf32>
    %cst_112 = arith.constant dense<0.000000e+00> : vector<18xf32>
    %210 = vector.multi_reduction <add>, %209, %cst_112 [1] : vector<18x32xf32> to vector<18xf32>
    %211 = vector.shape_cast %210 : vector<18xf32> to vector<18x1xf32>
    %cst_113 = arith.constant 3.200000e+01 : f32
    %212 = vector.broadcast %cst_113 : f32 to vector<18x1xf32>
    %213 = arith.divf %211, %212 : vector<18x1xf32>
    %214 = vector.broadcast %213 : vector<18x1xf32> to vector<18x32xf32>
    %215 = arith.subf %209, %214 : vector<18x32xf32>
    %216 = arith.mulf %215, %215 : vector<18x32xf32>
    %cst_114 = arith.constant dense<0.000000e+00> : vector<18xf32>
    %217 = vector.multi_reduction <add>, %216, %cst_114 [1] : vector<18x32xf32> to vector<18xf32>
    %218 = vector.shape_cast %217 : vector<18xf32> to vector<18x1xf32>
    %cst_115 = arith.constant 3.200000e+01 : f32
    %219 = vector.broadcast %cst_115 : f32 to vector<18x1xf32>
    %220 = arith.divf %218, %219 : vector<18x1xf32>
    %cst_116 = arith.constant 9.99999997E-7 : f32
    %221 = vector.broadcast %cst_116 : f32 to vector<18x1xf32>
    %222 = arith.addf %220, %221 : vector<18x1xf32>
    %223 = math.rsqrt %222 : vector<18x1xf32>
    %224 = vector.broadcast %223 : vector<18x1xf32> to vector<18x32xf32>
    %225 = arith.mulf %215, %224 : vector<18x32xf32>
    %c8_117 = arith.constant 8 : index
    %c0_118 = arith.constant 0 : index
    %226 = vector.load %arg4[%c8_117, %c0_118] : memref<21x256xf32, #tpu.memory_space<vmem>>, vector<1x32xf32>
    %227 = vector.broadcast %226 : vector<1x32xf32> to vector<18x32xf32>
    %228 = arith.mulf %225, %227 : vector<18x32xf32>
    %c9 = arith.constant 9 : index
    %c0_119 = arith.constant 0 : index
    %229 = vector.load %arg4[%c9, %c0_119] : memref<21x256xf32, #tpu.memory_space<vmem>>, vector<1x32xf32>
    %230 = vector.broadcast %229 : vector<1x32xf32> to vector<18x32xf32>
    %231 = arith.addf %228, %230 : vector<18x32xf32>
    %c5_120 = arith.constant 5 : index
    %c0_121 = arith.constant 0 : index
    %c0_122 = arith.constant 0 : index
    %232 = vector.load %arg3[%c5_120, %c0_121, %c0_122] : memref<10x128x256xbf16, #tpu.memory_space<vmem>>, vector<1x32x96xbf16>
    %233 = vector.shape_cast %232 : vector<1x32x96xbf16> to vector<32x96xbf16>
    %234 = arith.truncf %231 : vector<18x32xf32> to vector<18x32xbf16>
    %cst_123 = arith.constant dense<0.000000e+00> : vector<18x96xf32>
    %235 = tpu.matmul %234, %233, %cst_123 {dimension_numbers = #tpu.dot_dimension_numbers<[1], [0], [0], [1], [0, 0, 1, 1], [], []>} : vector<18x32xbf16>, vector<32x96xbf16>, vector<18x96xf32> -> vector<18x96xf32>
    %c10_124 = arith.constant 10 : index
    %c0_125 = arith.constant 0 : index
    %236 = vector.load %arg4[%c10_124, %c0_125] : memref<21x256xf32, #tpu.memory_space<vmem>>, vector<1x96xf32>
    %237 = vector.broadcast %236 : vector<1x96xf32> to vector<18x96xf32>
    %238 = arith.addf %235, %237 : vector<18x96xf32>
    %239 = vector.extract_strided_slice %238 {offsets = [0, 0], sizes = [18, 8], strides = [1, 1]} : vector<18x96xf32> to vector<18x8xf32>
    %240 = vector.extract_strided_slice %238 {offsets = [0, 32], sizes = [18, 8], strides = [1, 1]} : vector<18x96xf32> to vector<18x8xf32>
    %241 = vector.extract_strided_slice %238 {offsets = [0, 64], sizes = [18, 8], strides = [1, 1]} : vector<18x96xf32> to vector<18x8xf32>
    %cst_126 = arith.constant dense<0.000000e+00> : vector<18x18xf32>
    %242 = tpu.matmul %239, %240, %cst_126 {dimension_numbers = #tpu.dot_dimension_numbers<[1], [1], [0], [0], [0, 0, 1, 0], [], []>} : vector<18x8xf32>, vector<18x8xf32>, vector<18x18xf32> -> vector<18x18xf32>
    %cst_127 = arith.constant dense<0xFF800000> : vector<18xf32>
    %243 = vector.multi_reduction <maximumf>, %242, %cst_127 [1] : vector<18x18xf32> to vector<18xf32>
    %244 = vector.shape_cast %243 : vector<18xf32> to vector<18x1xf32>
    %245 = vector.broadcast %244 : vector<18x1xf32> to vector<18x18xf32>
    %246 = arith.subf %242, %245 : vector<18x18xf32>
    %247 = math.exp %246 : vector<18x18xf32>
    %cst_128 = arith.constant dense<0.000000e+00> : vector<18xf32>
    %248 = vector.multi_reduction <add>, %247, %cst_128 [1] : vector<18x18xf32> to vector<18xf32>
    %249 = vector.shape_cast %248 : vector<18xf32> to vector<18x1xf32>
    %250 = vector.broadcast %249 : vector<18x1xf32> to vector<18x18xf32>
    %251 = arith.divf %247, %250 : vector<18x18xf32>
    %cst_129 = arith.constant dense<0.000000e+00> : vector<18x8xf32>
    %252 = tpu.matmul %251, %241, %cst_129 {dimension_numbers = #tpu.dot_dimension_numbers<[1], [0], [0], [1], [0, 0, 1, 1], [], []>} : vector<18x18xf32>, vector<18x8xf32>, vector<18x8xf32> -> vector<18x8xf32>
    %c0_130 = arith.constant 0 : index
    %c0_131 = arith.constant 0 : index
    %253 = vector.load %arg7[%c0_130, %c0_131] : memref<18x32xf32, #tpu.memory_space<vmem>>, vector<18x8xf32>
    tpu.vector_store %arg7[%c0_130, %c0_131], %252 {strides = array<i32>} : memref<18x32xf32, #tpu.memory_space<vmem>>, vector<18x8xf32>,
    %254 = vector.extract_strided_slice %238 {offsets = [0, 8], sizes = [18, 8], strides = [1, 1]} : vector<18x96xf32> to vector<18x8xf32>
    %255 = vector.extract_strided_slice %238 {offsets = [0, 40], sizes = [18, 8], strides = [1, 1]} : vector<18x96xf32> to vector<18x8xf32>
    %256 = vector.extract_strided_slice %238 {offsets = [0, 72], sizes = [18, 8], strides = [1, 1]} : vector<18x96xf32> to vector<18x8xf32>
    %cst_132 = arith.constant dense<0.000000e+00> : vector<18x18xf32>
    %257 = tpu.matmul %254, %255, %cst_132 {dimension_numbers = #tpu.dot_dimension_numbers<[1], [1], [0], [0], [0, 0, 1, 0], [], []>} : vector<18x8xf32>, vector<18x8xf32>, vector<18x18xf32> -> vector<18x18xf32>
    %cst_133 = arith.constant dense<0xFF800000> : vector<18xf32>
    %258 = vector.multi_reduction <maximumf>, %257, %cst_133 [1] : vector<18x18xf32> to vector<18xf32>
    %259 = vector.shape_cast %258 : vector<18xf32> to vector<18x1xf32>
    %260 = vector.broadcast %259 : vector<18x1xf32> to vector<18x18xf32>
    %261 = arith.subf %257, %260 : vector<18x18xf32>
    %262 = math.exp %261 : vector<18x18xf32>
    %cst_134 = arith.constant dense<0.000000e+00> : vector<18xf32>
    %263 = vector.multi_reduction <add>, %262, %cst_134 [1] : vector<18x18xf32> to vector<18xf32>
    %264 = vector.shape_cast %263 : vector<18xf32> to vector<18x1xf32>
    %265 = vector.broadcast %264 : vector<18x1xf32> to vector<18x18xf32>
    %266 = arith.divf %262, %265 : vector<18x18xf32>
    %cst_135 = arith.constant dense<0.000000e+00> : vector<18x8xf32>
    %267 = tpu.matmul %266, %256, %cst_135 {dimension_numbers = #tpu.dot_dimension_numbers<[1], [0], [0], [1], [0, 0, 1, 1], [], []>} : vector<18x18xf32>, vector<18x8xf32>, vector<18x8xf32> -> vector<18x8xf32>
    %c0_136 = arith.constant 0 : index
    %c8_137 = arith.constant 8 : index
    %268 = vector.load %arg7[%c0_136, %c8_137] : memref<18x32xf32, #tpu.memory_space<vmem>>, vector<18x8xf32>
    tpu.vector_store %arg7[%c0_136, %c8_137], %267 {strides = array<i32>} : memref<18x32xf32, #tpu.memory_space<vmem>>, vector<18x8xf32>,
    %269 = vector.extract_strided_slice %238 {offsets = [0, 16], sizes = [18, 8], strides = [1, 1]} : vector<18x96xf32> to vector<18x8xf32>
    %270 = vector.extract_strided_slice %238 {offsets = [0, 48], sizes = [18, 8], strides = [1, 1]} : vector<18x96xf32> to vector<18x8xf32>
    %271 = vector.extract_strided_slice %238 {offsets = [0, 80], sizes = [18, 8], strides = [1, 1]} : vector<18x96xf32> to vector<18x8xf32>
    %cst_138 = arith.constant dense<0.000000e+00> : vector<18x18xf32>
    %272 = tpu.matmul %269, %270, %cst_138 {dimension_numbers = #tpu.dot_dimension_numbers<[1], [1], [0], [0], [0, 0, 1, 0], [], []>} : vector<18x8xf32>, vector<18x8xf32>, vector<18x18xf32> -> vector<18x18xf32>
    %cst_139 = arith.constant dense<0xFF800000> : vector<18xf32>
    %273 = vector.multi_reduction <maximumf>, %272, %cst_139 [1] : vector<18x18xf32> to vector<18xf32>
    %274 = vector.shape_cast %273 : vector<18xf32> to vector<18x1xf32>
    %275 = vector.broadcast %274 : vector<18x1xf32> to vector<18x18xf32>
    %276 = arith.subf %272, %275 : vector<18x18xf32>
    %277 = math.exp %276 : vector<18x18xf32>
    %cst_140 = arith.constant dense<0.000000e+00> : vector<18xf32>
    %278 = vector.multi_reduction <add>, %277, %cst_140 [1] : vector<18x18xf32> to vector<18xf32>
    %279 = vector.shape_cast %278 : vector<18xf32> to vector<18x1xf32>
    %280 = vector.broadcast %279 : vector<18x1xf32> to vector<18x18xf32>
    %281 = arith.divf %277, %280 : vector<18x18xf32>
    %cst_141 = arith.constant dense<0.000000e+00> : vector<18x8xf32>
    %282 = tpu.matmul %281, %271, %cst_141 {dimension_numbers = #tpu.dot_dimension_numbers<[1], [0], [0], [1], [0, 0, 1, 1], [], []>} : vector<18x18xf32>, vector<18x8xf32>, vector<18x8xf32> -> vector<18x8xf32>
    %c0_142 = arith.constant 0 : index
    %c16_143 = arith.constant 16 : index
    %283 = vector.load %arg7[%c0_142, %c16_143] : memref<18x32xf32, #tpu.memory_space<vmem>>, vector<18x8xf32>
    tpu.vector_store %arg7[%c0_142, %c16_143], %282 {strides = array<i32>} : memref<18x32xf32, #tpu.memory_space<vmem>>, vector<18x8xf32>,
    %284 = vector.extract_strided_slice %238 {offsets = [0, 24], sizes = [18, 8], strides = [1, 1]} : vector<18x96xf32> to vector<18x8xf32>
    %285 = vector.extract_strided_slice %238 {offsets = [0, 56], sizes = [18, 8], strides = [1, 1]} : vector<18x96xf32> to vector<18x8xf32>
    %286 = vector.extract_strided_slice %238 {offsets = [0, 88], sizes = [18, 8], strides = [1, 1]} : vector<18x96xf32> to vector<18x8xf32>
    %cst_144 = arith.constant dense<0.000000e+00> : vector<18x18xf32>
    %287 = tpu.matmul %284, %285, %cst_144 {dimension_numbers = #tpu.dot_dimension_numbers<[1], [1], [0], [0], [0, 0, 1, 0], [], []>} : vector<18x8xf32>, vector<18x8xf32>, vector<18x18xf32> -> vector<18x18xf32>
    %cst_145 = arith.constant dense<0xFF800000> : vector<18xf32>
    %288 = vector.multi_reduction <maximumf>, %287, %cst_145 [1] : vector<18x18xf32> to vector<18xf32>
    %289 = vector.shape_cast %288 : vector<18xf32> to vector<18x1xf32>
    %290 = vector.broadcast %289 : vector<18x1xf32> to vector<18x18xf32>
    %291 = arith.subf %287, %290 : vector<18x18xf32>
    %292 = math.exp %291 : vector<18x18xf32>
    %cst_146 = arith.constant dense<0.000000e+00> : vector<18xf32>
    %293 = vector.multi_reduction <add>, %292, %cst_146 [1] : vector<18x18xf32> to vector<18xf32>
    %294 = vector.shape_cast %293 : vector<18xf32> to vector<18x1xf32>
    %295 = vector.broadcast %294 : vector<18x1xf32> to vector<18x18xf32>
    %296 = arith.divf %292, %295 : vector<18x18xf32>
    %cst_147 = arith.constant dense<0.000000e+00> : vector<18x8xf32>
    %297 = tpu.matmul %296, %286, %cst_147 {dimension_numbers = #tpu.dot_dimension_numbers<[1], [0], [0], [1], [0, 0, 1, 1], [], []>} : vector<18x18xf32>, vector<18x8xf32>, vector<18x8xf32> -> vector<18x8xf32>
    %c0_148 = arith.constant 0 : index
    %c24_149 = arith.constant 24 : index
    %298 = vector.load %arg7[%c0_148, %c24_149] : memref<18x32xf32, #tpu.memory_space<vmem>>, vector<18x8xf32>
    tpu.vector_store %arg7[%c0_148, %c24_149], %297 {strides = array<i32>} : memref<18x32xf32, #tpu.memory_space<vmem>>, vector<18x8xf32>,
    %c0_150 = arith.constant 0 : index
    %c0_151 = arith.constant 0 : index
    %299 = vector.load %arg7[%c0_150, %c0_151] : memref<18x32xf32, #tpu.memory_space<vmem>>, vector<18x32xf32>
    %c6_152 = arith.constant 6 : index
    %c0_153 = arith.constant 0 : index
    %c0_154 = arith.constant 0 : index
    %300 = vector.load %arg3[%c6_152, %c0_153, %c0_154] : memref<10x128x256xbf16, #tpu.memory_space<vmem>>, vector<1x32x32xbf16>
    %301 = vector.shape_cast %300 : vector<1x32x32xbf16> to vector<32x32xbf16>
    %302 = arith.truncf %299 : vector<18x32xf32> to vector<18x32xbf16>
    %cst_155 = arith.constant dense<0.000000e+00> : vector<18x32xf32>
    %303 = tpu.matmul %302, %301, %cst_155 {dimension_numbers = #tpu.dot_dimension_numbers<[1], [0], [0], [1], [0, 0, 1, 1], [], []>} : vector<18x32xbf16>, vector<32x32xbf16>, vector<18x32xf32> -> vector<18x32xf32>
    %304 = arith.addf %209, %303 : vector<18x32xf32>
    %c11 = arith.constant 11 : index
    %c0_156 = arith.constant 0 : index
    %305 = vector.load %arg4[%c11, %c0_156] : memref<21x256xf32, #tpu.memory_space<vmem>>, vector<1x32xf32>
    %306 = vector.broadcast %305 : vector<1x32xf32> to vector<18x32xf32>
    %307 = arith.addf %304, %306 : vector<18x32xf32>
    %cst_157 = arith.constant dense<0.000000e+00> : vector<18xf32>
    %308 = vector.multi_reduction <add>, %307, %cst_157 [1] : vector<18x32xf32> to vector<18xf32>
    %309 = vector.shape_cast %308 : vector<18xf32> to vector<18x1xf32>
    %cst_158 = arith.constant 3.200000e+01 : f32
    %310 = vector.broadcast %cst_158 : f32 to vector<18x1xf32>
    %311 = arith.divf %309, %310 : vector<18x1xf32>
    %312 = vector.broadcast %311 : vector<18x1xf32> to vector<18x32xf32>
    %313 = arith.subf %307, %312 : vector<18x32xf32>
    %314 = arith.mulf %313, %313 : vector<18x32xf32>
    %cst_159 = arith.constant dense<0.000000e+00> : vector<18xf32>
    %315 = vector.multi_reduction <add>, %314, %cst_159 [1] : vector<18x32xf32> to vector<18xf32>
    %316 = vector.shape_cast %315 : vector<18xf32> to vector<18x1xf32>
    %cst_160 = arith.constant 3.200000e+01 : f32
    %317 = vector.broadcast %cst_160 : f32 to vector<18x1xf32>
    %318 = arith.divf %316, %317 : vector<18x1xf32>
    %cst_161 = arith.constant 9.99999997E-7 : f32
    %319 = vector.broadcast %cst_161 : f32 to vector<18x1xf32>
    %320 = arith.addf %318, %319 : vector<18x1xf32>
    %321 = math.rsqrt %320 : vector<18x1xf32>
    %322 = vector.broadcast %321 : vector<18x1xf32> to vector<18x32xf32>
    %323 = arith.mulf %313, %322 : vector<18x32xf32>
    %c12_162 = arith.constant 12 : index
    %c0_163 = arith.constant 0 : index
    %324 = vector.load %arg4[%c12_162, %c0_163] : memref<21x256xf32, #tpu.memory_space<vmem>>, vector<1x32xf32>
    %325 = vector.broadcast %324 : vector<1x32xf32> to vector<18x32xf32>
    %326 = arith.mulf %323, %325 : vector<18x32xf32>
    %c13 = arith.constant 13 : index
    %c0_164 = arith.constant 0 : index
    %327 = vector.load %arg4[%c13, %c0_164] : memref<21x256xf32, #tpu.memory_space<vmem>>, vector<1x32xf32>
    %328 = vector.broadcast %327 : vector<1x32xf32> to vector<18x32xf32>
    %329 = arith.addf %326, %328 : vector<18x32xf32>
    %c7_165 = arith.constant 7 : index
    %c0_166 = arith.constant 0 : index
    %c0_167 = arith.constant 0 : index
    %330 = vector.load %arg3[%c7_165, %c0_166, %c0_167] : memref<10x128x256xbf16, #tpu.memory_space<vmem>>, vector<1x32x128xbf16>
    %331 = vector.shape_cast %330 : vector<1x32x128xbf16> to vector<32x128xbf16>
    %332 = arith.truncf %329 : vector<18x32xf32> to vector<18x32xbf16>
    %cst_168 = arith.constant dense<0.000000e+00> : vector<18x128xf32>
    %333 = tpu.matmul %332, %331, %cst_168 {dimension_numbers = #tpu.dot_dimension_numbers<[1], [0], [0], [1], [0, 0, 1, 1], [], []>} : vector<18x32xbf16>, vector<32x128xbf16>, vector<18x128xf32> -> vector<18x128xf32>
    %c14_169 = arith.constant 14 : index
    %c0_170 = arith.constant 0 : index
    %334 = vector.load %arg4[%c14_169, %c0_170] : memref<21x256xf32, #tpu.memory_space<vmem>>, vector<1x128xf32>
    %335 = vector.broadcast %334 : vector<1x128xf32> to vector<18x128xf32>
    %336 = arith.addf %333, %335 : vector<18x128xf32>
    %337 = arith.mulf %336, %336 : vector<18x128xf32>
    %338 = arith.mulf %336, %337 : vector<18x128xf32>
    %cst_171 = arith.constant 4.471500e-02 : f32
    %339 = vector.broadcast %cst_171 : f32 to vector<18x128xf32>
    %340 = arith.mulf %339, %338 : vector<18x128xf32>
    %341 = arith.addf %336, %340 : vector<18x128xf32>
    %cst_172 = arith.constant 0.797884583 : f32
    %342 = vector.broadcast %cst_172 : f32 to vector<18x128xf32>
    %343 = arith.mulf %342, %341 : vector<18x128xf32>
    %344 = math.tanh %343 : vector<18x128xf32>
    %cst_173 = arith.constant 1.000000e+00 : f32
    %345 = vector.broadcast %cst_173 : f32 to vector<18x128xf32>
    %346 = arith.addf %345, %344 : vector<18x128xf32>
    %cst_174 = arith.constant 5.000000e-01 : f32
    %347 = vector.broadcast %cst_174 : f32 to vector<18x128xf32>
    %348 = arith.mulf %347, %346 : vector<18x128xf32>
    %349 = arith.mulf %336, %348 : vector<18x128xf32>
    %c8_175 = arith.constant 8 : index
    %c0_176 = arith.constant 0 : index
    %c0_177 = arith.constant 0 : index
    %350 = vector.load %arg3[%c8_175, %c0_176, %c0_177] : memref<10x128x256xbf16, #tpu.memory_space<vmem>>, vector<1x128x32xbf16>
    %351 = vector.shape_cast %350 : vector<1x128x32xbf16> to vector<128x32xbf16>
    %352 = arith.truncf %349 : vector<18x128xf32> to vector<18x128xbf16>
    %cst_178 = arith.constant dense<0.000000e+00> : vector<18x32xf32>
    %353 = tpu.matmul %352, %351, %cst_178 {dimension_numbers = #tpu.dot_dimension_numbers<[1], [0], [0], [1], [0, 0, 1, 1], [], []>} : vector<18x128xbf16>, vector<128x32xbf16>, vector<18x32xf32> -> vector<18x32xf32>
    %354 = arith.addf %307, %353 : vector<18x32xf32>
    %c15 = arith.constant 15 : index
    %c0_179 = arith.constant 0 : index
    %355 = vector.load %arg4[%c15, %c0_179] : memref<21x256xf32, #tpu.memory_space<vmem>>, vector<1x32xf32>
    %356 = vector.broadcast %355 : vector<1x32xf32> to vector<18x32xf32>
    %357 = arith.addf %354, %356 : vector<18x32xf32>
    %cst_180 = arith.constant dense<0.000000e+00> : vector<18xf32>
    %358 = vector.multi_reduction <add>, %357, %cst_180 [1] : vector<18x32xf32> to vector<18xf32>
    %359 = vector.shape_cast %358 : vector<18xf32> to vector<18x1xf32>
    %cst_181 = arith.constant 3.200000e+01 : f32
    %360 = vector.broadcast %cst_181 : f32 to vector<18x1xf32>
    %361 = arith.divf %359, %360 : vector<18x1xf32>
    %362 = vector.broadcast %361 : vector<18x1xf32> to vector<18x32xf32>
    %363 = arith.subf %357, %362 : vector<18x32xf32>
    %364 = arith.mulf %363, %363 : vector<18x32xf32>
    %cst_182 = arith.constant dense<0.000000e+00> : vector<18xf32>
    %365 = vector.multi_reduction <add>, %364, %cst_182 [1] : vector<18x32xf32> to vector<18xf32>
    %366 = vector.shape_cast %365 : vector<18xf32> to vector<18x1xf32>
    %cst_183 = arith.constant 3.200000e+01 : f32
    %367 = vector.broadcast %cst_183 : f32 to vector<18x1xf32>
    %368 = arith.divf %366, %367 : vector<18x1xf32>
    %cst_184 = arith.constant 9.99999997E-7 : f32
    %369 = vector.broadcast %cst_184 : f32 to vector<18x1xf32>
    %370 = arith.addf %368, %369 : vector<18x1xf32>
    %371 = math.rsqrt %370 : vector<18x1xf32>
    %372 = vector.broadcast %371 : vector<18x1xf32> to vector<18x32xf32>
    %373 = arith.mulf %363, %372 : vector<18x32xf32>
    %c16_185 = arith.constant 16 : index
    %c0_186 = arith.constant 0 : index
    %374 = vector.load %arg4[%c16_185, %c0_186] : memref<21x256xf32, #tpu.memory_space<vmem>>, vector<1x32xf32>
    %375 = vector.broadcast %374 : vector<1x32xf32> to vector<18x32xf32>
    %376 = arith.mulf %373, %375 : vector<18x32xf32>
    %c17 = arith.constant 17 : index
    %c0_187 = arith.constant 0 : index
    %377 = vector.load %arg4[%c17, %c0_187] : memref<21x256xf32, #tpu.memory_space<vmem>>, vector<1x32xf32>
    %378 = vector.broadcast %377 : vector<1x32xf32> to vector<18x32xf32>
    %379 = arith.addf %376, %378 : vector<18x32xf32>
    %380 = vector.extract_strided_slice %379 {offsets = [0, 0], sizes = [1, 32], strides = [1, 1]} : vector<18x32xf32> to vector<1x32xf32>
    %381 = vector.extract_strided_slice %379 {offsets = [1, 0], sizes = [1, 32], strides = [1, 1]} : vector<18x32xf32> to vector<1x32xf32>
    %382 = arith.addf %380, %381 : vector<1x32xf32>
    %cst_188 = arith.constant 5.000000e-01 : f32
    %383 = vector.broadcast %cst_188 : f32 to vector<1x32xf32>
    %384 = arith.mulf %383, %382 : vector<1x32xf32>
    %cst_189 = arith.constant dense<0.000000e+00> : vector<1xf32>
    %385 = vector.multi_reduction <add>, %384, %cst_189 [1] : vector<1x32xf32> to vector<1xf32>
    %386 = vector.shape_cast %385 : vector<1xf32> to vector<1x1xf32>
    %cst_190 = arith.constant 3.200000e+01 : f32
    %387 = vector.broadcast %cst_190 : f32 to vector<1x1xf32>
    %388 = arith.divf %386, %387 : vector<1x1xf32>
    %389 = vector.broadcast %388 : vector<1x1xf32> to vector<1x32xf32>
    %390 = arith.subf %384, %389 : vector<1x32xf32>
    %391 = arith.mulf %390, %390 : vector<1x32xf32>
    %cst_191 = arith.constant dense<0.000000e+00> : vector<1xf32>
    %392 = vector.multi_reduction <add>, %391, %cst_191 [1] : vector<1x32xf32> to vector<1xf32>
    %393 = vector.shape_cast %392 : vector<1xf32> to vector<1x1xf32>
    %cst_192 = arith.constant 3.200000e+01 : f32
    %394 = vector.broadcast %cst_192 : f32 to vector<1x1xf32>
    %395 = arith.divf %393, %394 : vector<1x1xf32>
    %cst_193 = arith.constant 9.99999997E-7 : f32
    %396 = vector.broadcast %cst_193 : f32 to vector<1x1xf32>
    %397 = arith.addf %395, %396 : vector<1x1xf32>
    %398 = math.rsqrt %397 : vector<1x1xf32>
    %399 = vector.broadcast %398 : vector<1x1xf32> to vector<1x32xf32>
    %400 = arith.mulf %390, %399 : vector<1x32xf32>
    %c18 = arith.constant 18 : index
    %c0_194 = arith.constant 0 : index
    %401 = vector.load %arg4[%c18, %c0_194] : memref<21x256xf32, #tpu.memory_space<vmem>>, vector<1x32xf32>
    %402 = arith.mulf %400, %401 : vector<1x32xf32>
    %c19 = arith.constant 19 : index
    %c0_195 = arith.constant 0 : index
    %403 = vector.load %arg4[%c19, %c0_195] : memref<21x256xf32, #tpu.memory_space<vmem>>, vector<1x32xf32>
    %404 = arith.addf %402, %403 : vector<1x32xf32>
    %c9_196 = arith.constant 9 : index
    %c0_197 = arith.constant 0 : index
    %c0_198 = arith.constant 0 : index
    %405 = vector.load %arg3[%c9_196, %c0_197, %c0_198] : memref<10x128x256xbf16, #tpu.memory_space<vmem>>, vector<1x32x256xbf16>
    %406 = vector.shape_cast %405 : vector<1x32x256xbf16> to vector<32x256xbf16>
    %407 = arith.truncf %404 : vector<1x32xf32> to vector<1x32xbf16>
    %cst_199 = arith.constant dense<0.000000e+00> : vector<1x256xf32>
    %408 = tpu.matmul %407, %406, %cst_199 {dimension_numbers = #tpu.dot_dimension_numbers<[1], [0], [0], [1], [0, 0, 1, 1], [], []>} : vector<1x32xbf16>, vector<32x256xbf16>, vector<1x256xf32> -> vector<1x256xf32>
    %c20 = arith.constant 20 : index
    %c0_200 = arith.constant 0 : index
    %409 = vector.load %arg4[%c20, %c0_200] : memref<21x256xf32, #tpu.memory_space<vmem>>, vector<1x256xf32>
    %410 = arith.addf %408, %409 : vector<1x256xf32>
    %cst_201 = arith.constant 0.000000e+00 : f32
    %411 = vector.broadcast %cst_201 : f32 to vector<1x256xf32>
    %412 = arith.subf %411, %410 : vector<1x256xf32>
    %413 = math.exp %412 : vector<1x256xf32>
    %cst_202 = arith.constant 1.000000e+00 : f32
    %414 = vector.broadcast %cst_202 : f32 to vector<1x256xf32>
    %415 = arith.addf %414, %413 : vector<1x256xf32>
    %cst_203 = arith.constant 1.000000e+00 : f32
    %416 = vector.broadcast %cst_203 : f32 to vector<1x256xf32>
    %417 = arith.divf %416, %415 : vector<1x256xf32>
    %c0_204 = arith.constant 0 : index
    %c0_205 = arith.constant 0 : index
    %c0_206 = arith.constant 0 : index
    %418 = vector.load %arg5[%c0_204, %c0_205, %c0_206] : memref<1x1x256xf32, #tpu.memory_space<vmem>>, vector<1x1x256xf32>
    %419 = vector.shape_cast %418 : vector<1x1x256xf32> to vector<1x256xf32>
    %420 = vector.shape_cast %417 : vector<1x256xf32> to vector<1x1x256xf32>
    tpu.vector_store %arg5[%c0_204, %c0_205, %c0_206], %420 {strides = array<i32>} : memref<1x1x256xf32, #tpu.memory_space<vmem>>, vector<1x1x256xf32>,
    return
  }
  func.func @transform_0(%arg0: i32) -> (i32, i32, i32) {
    %c0_i32 = arith.constant 0 : i32
    %c0_i32_0 = arith.constant 0 : i32
    %c0_i32_1 = arith.constant 0 : i32
    return %arg0, %c0_i32, %c0_i32_0 : i32, i32, i32
  }
  func.func @transform_1(%arg0: i32) -> (i32, i32) {
    %c0_i32 = arith.constant 0 : i32
    %c0_i32_0 = arith.constant 0 : i32
    %c0_i32_1 = arith.constant 0 : i32
    return %c0_i32, %c0_i32_0 : i32, i32
  }
  func.func @transform_2(%arg0: i32) -> (i32, i32, i32) {
    %c0_i32 = arith.constant 0 : i32
    %c0_i32_0 = arith.constant 0 : i32
    %c0_i32_1 = arith.constant 0 : i32
    %c0_i32_2 = arith.constant 0 : i32
    return %c0_i32, %c0_i32_0, %c0_i32_1 : i32, i32, i32
  }
  func.func @transform_3(%arg0: i32) -> (i32, i32) {
    %c0_i32 = arith.constant 0 : i32
    %c0_i32_0 = arith.constant 0 : i32
    %c0_i32_1 = arith.constant 0 : i32
    return %c0_i32, %c0_i32_0 : i32, i32
  }
  func.func @transform_4(%arg0: i32) -> (i32, i32, i32) {
    %c0_i32 = arith.constant 0 : i32
    %c0_i32_0 = arith.constant 0 : i32
    %c0_i32_1 = arith.constant 0 : i32
    return %arg0, %c0_i32, %c0_i32_0 : i32, i32, i32
  }
}

</mosaic_0001>

<llo_original>
// kernel: passt_mtg_forward.1
$region0: #{passt_mtg_forward.1}
  #allocation0 [shape = 'u32[]', space=smem, size = 0x4, offset = 0x4, fixed_abs, tag = 'smem constant byte address 0x4 - core index']
  #allocation1 [shape = 'u32[144,128]{1,0:T(1,128)}', space=vmem, size = 0x12000, scoped, tag = 'internal scratch']
  #allocation2 [shape = 'f32[18,16]{1,0:T(8,128)}', space=vmem, size = 0x3000, scoped, tag = 'scratch operand']
  #allocation3 [shape = 'f32[18,32]{1,0:T(8,128)}', space=vmem, size = 0x3000, scoped, tag = 'scratch operand']
  %s0 = inlined_call_operand.vmem [shape: f32[2,17,32], index: 0, kind: input, shape index: {}]
  %s1 = inlined_call_operand.hbm [shape: f32[144,128], index: 1, kind: input, shape index: {}]
  %s2 = inlined_call_operand.hbm [shape: bf16[10,128,256], index: 2, kind: input, shape index: {}]
  %s3 = inlined_call_operand.vmem [shape: f32[21,256], index: 3, kind: input, shape index: {}]
  %s4 = inlined_call_operand.vmem [shape: f32[2,1,256], index: 4, kind: output, shape index: {}]
  %s5 = sld [smem:[#allocation0]]
  $region57: #{passt_mtg_forward.1} parent=0
    _
  %s7 = ssub.s32 1, %s5
  %s8 = scalar_select 0, %s7, %s5
  $region1: #{passt_mtg_forward.1} parent=0
    #allocation4 [shape = 'u8[73728]{0}', space=vmem, size = 0x12000, scoped, tag = 'input window, operand 1, single buffered']
    #allocation5 [shape = 's32[2]{0}', space=sflag, size = 0x8, scoped, tag = 'scoped memory for passt_mtg_forward.1']
    #allocation6 [shape = 'u8[655360]{0}', space=vmem, size = 0xa0000, scoped, tag = 'input window, operand 2, single buffered']
    #allocation7 [shape = 's32[1]{0}', space=sflag, size = 0x4, scoped, tag = 'scoped memory for passt_mtg_forward.1']
    %9 = vsyncpa [#allocation5], 0
    %10 = vsyncpa [#allocation7], 0
    loop: start=0, step=1, limit=4
    $region2: #{passt_mtg_forward.1} parent=1 // loop_pre_header
      _
    $region3: #{passt_mtg_forward.1} parent=1 // loop_header
      %s12 = sphi 0, %s16
      %p13 = scmp.ge.s32.totalorder %s12, 4
      %s22 = sphi 0, %s24
      %s25 = sphi 0, %s22
      %s26 = sphi 0, %s25
      %s42 = sphi 0, %s26
      %s46 = sphi 0, %s46
      %s48 = sphi 0, %s46
      %s49 = sphi 0, %s48
      %s63 = sphi 0, %s49
      %s67 = sphi 0, %s67
      %s69 = sphi 0, %s67
      %s70 = sphi 0, %s69
      %s84 = sphi 0, %s70
      %s88 = sphi 0, %s88
      %s90 = sphi 0, %s88
      %s91 = sphi 0, %s90
      %s105 = sphi 0, %s91
      %s111 = sphi 0, %s113
      %s114 = sphi 0, %s111
      %s115 = sphi 0, %s114
      %s131 = sphi 0, %s115
    $region4: #{passt_mtg_forward.1} parent=1 // loop_header_branch
      %15 = sbr.rel (%p13) target = $region8
    $region5: #{passt_mtg_forward.1} parent=1 // loop_body
      %s17 = ssub.s32 %s12, 1
      %s18 = ssub.s32 %s12, 2
      %s19 = sadd.s32 %s12, 1
      %s20 = ssub.s32 %s12, %s19
      %p21 = scmp.eq.s32.totalorder %s20, 0
      %s23 = sadd.s32 %s22, 1
      %s24 = scalar_select %p21, %s22, %s23
      %p27 = pneg %p21
      %p28 = scmp.eq.s32.totalorder %s12, 1
      %p29 = por %p27, %p28
      %p30 = scmp.ne.s32.totalorder %s22, %s25
      %p31 = scmp.eq.s32.totalorder %s12, 0
      %p32 = por %p30, %p31
      %p33 = scmp.ne.s32.totalorder %s22, %s25
      %p34 = scmp.eq.s32.totalorder %s17, 1
      %p35 = por %p33, %p34
      %p36 = scmp.ne.s32.totalorder %s25, %s26
      %p37 = scmp.eq.s32.totalorder %s17, 0
      %p38 = por %p36, %p37
      %p39 = scmp.ne.s32.totalorder %s25, %s26
      %p40 = scmp.eq.s32.totalorder %s18, 1
      %p41 = por %p39, %p40
      %p43 = scmp.ne.s32.totalorder %s26, %s42
      %p44 = scmp.eq.s32.totalorder %s18, 0
      %p45 = por %p43, %p44
      %s47 = sadd.s32 %s46, 1
      %p50 = scmp.eq.s32.totalorder %s12, 1
      %p51 = scmp.ne.s32.totalorder %s46, %s48
      %p52 = scmp.eq.s32.totalorder %s12, 0
      %p53 = por %p51, %p52
      %p54 = scmp.ne.s32.totalorder %s46, %s48
      %p55 = scmp.eq.s32.totalorder %s17, 1
      %p56 = por %p54, %p55
      %p57 = scmp.ne.s32.totalorder %s48, %s49
      %p58 = scmp.eq.s32.totalorder %s17, 0
      %p59 = por %p57, %p58
      %p60 = scmp.ne.s32.totalorder %s48, %s49
      %p61 = scmp.eq.s32.totalorder %s18, 1
      %p62 = por %p60, %p61
      %p64 = scmp.ne.s32.totalorder %s49, %s63
      %p65 = scmp.eq.s32.totalorder %s18, 0
      %p66 = por %p64, %p65
      %s68 = sadd.s32 %s67, 1
      %p71 = scmp.eq.s32.totalorder %s12, 1
      %p72 = scmp.ne.s32.totalorder %s67, %s69
      %p73 = scmp.eq.s32.totalorder %s12, 0
      %p74 = por %p72, %p73
      %p75 = scmp.ne.s32.totalorder %s67, %s69
      %p76 = scmp.eq.s32.totalorder %s17, 1
      %p77 = por %p75, %p76
      %p78 = scmp.ne.s32.totalorder %s69, %s70
      %p79 = scmp.eq.s32.totalorder %s17, 0
      %p80 = por %p78, %p79
      %p81 = scmp.ne.s32.totalorder %s69, %s70
      %p82 = scmp.eq.s32.totalorder %s18, 1
      %p83 = por %p81, %p82
      %p85 = scmp.ne.s32.totalorder %s70, %s84
      %p86 = scmp.eq.s32.totalorder %s18, 0
      %p87 = por %p85, %p86
      %s89 = sadd.s32 %s88, 1
      %p92 = scmp.eq.s32.totalorder %s12, 1
      %p93 = scmp.ne.s32.totalorder %s88, %s90
      %p94 = scmp.eq.s32.totalorder %s12, 0
      %p95 = por %p93, %p94
      %p96 = scmp.ne.s32.totalorder %s88, %s90
      %p97 = scmp.eq.s32.totalorder %s17, 1
      %p98 = por %p96, %p97
      %p99 = scmp.ne.s32.totalorder %s90, %s91
      %p100 = scmp.eq.s32.totalorder %s17, 0
      %p101 = por %p99, %p100
      %p102 = scmp.ne.s32.totalorder %s90, %s91
      %p103 = scmp.eq.s32.totalorder %s18, 1
      %p104 = por %p102, %p103
      %p106 = scmp.ne.s32.totalorder %s91, %s105
      %p107 = scmp.eq.s32.totalorder %s18, 0
      %p108 = por %p106, %p107
      %s109 = ssub.s32 %s12, %s19
      %p110 = scmp.eq.s32.totalorder %s109, 0
      %s112 = sadd.s32 %s111, 1
      %s113 = scalar_select %p110, %s111, %s112
      %p116 = pneg %p110
      %p117 = scmp.eq.s32.totalorder %s12, 1
      %p118 = por %p116, %p117
      %p119 = scmp.ne.s32.totalorder %s111, %s114
      %p120 = scmp.eq.s32.totalorder %s12, 0
      %p121 = por %p119, %p120
      %p122 = scmp.ne.s32.totalorder %s111, %s114
      %p123 = scmp.eq.s32.totalorder %s17, 1
      %p124 = por %p122, %p123
      %p125 = scmp.ne.s32.totalorder %s114, %s115
      %p126 = scmp.eq.s32.totalorder %s17, 0
      %p127 = por %p125, %p126
      %p128 = scmp.ne.s32.totalorder %s114, %s115
      %p129 = scmp.eq.s32.totalorder %s18, 1
      %p130 = por %p128, %p129
      %p132 = scmp.ne.s32.totalorder %s115, %s131
      %p133 = scmp.eq.s32.totalorder %s18, 0
      %p134 = por %p132, %p133
      %p135 = scmp.le.s32.totalorder 1, %s12
      %p136 = scmp.lt.s32.totalorder %s12, 3
      %p137 = pnand %p135, %p136
      %p138 = pneg %p137
      // Predicated region
      $region9: #{passt_mtg_forward.1} parent=5 // pred_check
        _
      $region10: #{passt_mtg_forward.1} parent=5 // pred_check_branch
        %140 = sbr.rel (%p137) target = $region12
      $region11: #{passt_mtg_forward.1} parent=5 // pred_region
        %s141 = ssub.s32 %s12, 1
        // Predicated region
        $region13: #{passt_mtg_forward.1} parent=11 // pred_check
          %p142 = pneg %p59
        $region14: #{passt_mtg_forward.1} parent=11 // pred_check_branch
          %144 = sbr.rel (%p142) target = $region16
        $region15: #{passt_mtg_forward.1} parent=11 // pred_region
          %s146 = ssub.s32 2304, 2304
          %147 = vsyncadd [#allocation5], %s146
          %s148 = sshll.u32 [#allocation4], 4
          %s149 = int_to_ptr.vmem [resolvable:$true] %s148
          %154 = dma.hbm_to_vmem [thread:$0]  %s1, 2304, %s149, [#allocation5], 128, 128, 8
        $region16: #{passt_mtg_forward.1} parent=11 // pred_fallthru
          _
        // Predicated region
        $region17: #{passt_mtg_forward.1} parent=11 // pred_check
          %p155 = pneg %p80
        $region18: #{passt_mtg_forward.1} parent=11 // pred_check_branch
          %157 = sbr.rel (%p155) target = $region20
        $region19: #{passt_mtg_forward.1} parent=11 // pred_region
          %s159 = ssub.s32 20480, 20480
          %160 = vsyncadd [#allocation7], %s159
          %s161 = sshll.u32 [#allocation6], 4
          %s162 = int_to_ptr.vmem [resolvable:$true] %s161
          %167 = dma.hbm_to_vmem [thread:$0]  %s2, 20480, %s162, [#allocation7], 128, 128, 8
        $region20: #{passt_mtg_forward.1} parent=11 // pred_fallthru
          _
        // Predicated region
        $region21: #{passt_mtg_forward.1} parent=11 // pred_check
          %p168 = pneg %p101
        $region22: #{passt_mtg_forward.1} parent=11 // pred_check_branch
          %170 = sbr.rel (%p168) target = $region24
        $region23: #{passt_mtg_forward.1} parent=11 // pred_region
          _
        $region24: #{passt_mtg_forward.1} parent=11 // pred_fallthru
          _
      $region12: #{passt_mtg_forward.1} parent=5 // pred_fallthru
        _
      %p171 = scmp.lt.s32.totalorder %s12, 2
      // Predicated region
      $region25: #{passt_mtg_forward.1} parent=5 // pred_check
        %p172 = pneg %p171
      $region26: #{passt_mtg_forward.1} parent=5 // pred_check_branch
        %174 = sbr.rel (%p172) target = $region28
      $region27: #{passt_mtg_forward.1} parent=5 // pred_region
        // Predicated region
        $region29: #{passt_mtg_forward.1} parent=27 // pred_check
          %p175 = pneg %p32
        $region30: #{passt_mtg_forward.1} parent=27 // pred_check_branch
          %177 = sbr.rel (%p175) target = $region32
        $region31: #{passt_mtg_forward.1} parent=27 // pred_region
          %p178 = scmp.lt.s32.totalorder %s12, 1
          %s179 = scalar_select %p178, %s12, 1
          %s180 = smul.addr %s179, 3
          %s181 = smul.addr %s180, 8
          %s182 = scalar_lea.vmem %s0, %s181
        $region32: #{passt_mtg_forward.1} parent=27 // pred_fallthru
          _
      $region28: #{passt_mtg_forward.1} parent=5 // pred_fallthru
        _
      %p183 = scmp.le.s32.totalorder 1, %s12
      %p184 = scmp.lt.s32.totalorder %s12, 3
      %p185 = pnand %p183, %p184
      %p186 = pneg %p185
      // Predicated region
      $region33: #{passt_mtg_forward.1} parent=5 // pred_check
        _
      $region34: #{passt_mtg_forward.1} parent=5 // pred_check_branch
        %188 = sbr.rel (%p185) target = $region36
      $region35: #{passt_mtg_forward.1} parent=5 // pred_region
        %s189 = ssub.s32 %s12, 1
        // Predicated region
        $region37: #{passt_mtg_forward.1} parent=35 // pred_check
          %p190 = pneg %p59
        $region38: #{passt_mtg_forward.1} parent=35 // pred_check_branch
          %192 = sbr.rel (%p190) target = $region40
        $region39: #{passt_mtg_forward.1} parent=35 // pred_region
          %193 = dma.done [#allocation5], 2304
        $region40: #{passt_mtg_forward.1} parent=35 // pred_fallthru
          _
        // Predicated region
        $region41: #{passt_mtg_forward.1} parent=35 // pred_check
          %p194 = pneg %p80
        $region42: #{passt_mtg_forward.1} parent=35 // pred_check_branch
          %196 = sbr.rel (%p194) target = $region44
        $region43: #{passt_mtg_forward.1} parent=35 // pred_region
          %197 = dma.done [#allocation7], 20480
        $region44: #{passt_mtg_forward.1} parent=35 // pred_fallthru
          _
        %p198 = scmp.lt.s32.totalorder %s17, 1
        %s199 = scalar_select %p198, %s17, 1
        %s200 = smul.addr %s199, 3
        %s201 = smul.addr %s200, 8
        %s202 = scalar_lea.vmem %s0, %s201
        %p203 = pneg %p38
        %p204 = pneg %p35
        %p205 = pneg %p59
        %p206 = pneg %p56
        %p207 = pneg %p80
        %p208 = pneg %p77
        %p209 = pneg %p101
        %p210 = pneg %p98
        %p211 = pneg %p127
        %p212 = pneg %p124
        %p213 = scmp.lt.s32.totalorder %s17, 1
        %s214 = scalar_select %p213, %s17, 1
        %s215 = smul.addr %s214, 2
        %s216 = scalar_lea.vmem %s4, %s215
        %p217 = scmp.lt.s32.totalorder %s17, 1
        %s218 = scalar_select %p217, %s17, 1
        %s219 = smul.addr %s218, 3
        %s220 = smul.addr %s219, 8
        %s221 = scalar_lea.vmem %s0, %s220
        %p222 = scmp.lt.s32.totalorder %s17, 1
        %s223 = scalar_select %p222, %s17, 1
        %s224 = smul.addr %s223, 2
        %s225 = scalar_lea.vmem %s4, %s224
        %v227 = vld [vmem:[%s221] sm:$0xff]
        %v228 = vld [vmem:[%s221 + $0x8] sm:$0xff]
        %v229 = vld [vmem:[%s221 + $0x10] sm:$0x1]
        %v230 = vld [vmem:[#allocation4] sm:$0xff]
        %v231 = vld [vmem:[#allocation4 + $0x8] sm:$0xff]
        %v232 = vld [vmem:[#allocation4 + $0x10] sm:$0xff]
        %v233 = vld [vmem:[#allocation4 + $0x18] sm:$0xff]
        %v234 = vld [vmem:[#allocation4 + $0x20] sm:$0xff]
        %v235 = vld [vmem:[#allocation4 + $0x28] sm:$0xff]
        %v236 = vld [vmem:[#allocation4 + $0x30] sm:$0xff]
        %v237 = vld [vmem:[#allocation4 + $0x38] sm:$0xff]
        %vm241 = vcmask 1046528
        %v242 = vrot.slane %v227, 1
        %v243 = vrot.slane %v228, 1
        %v244 = vsel %vm241, %v242, %v243
        %v245 = vrot.slane %v229, 1
        %v246 = vsel %vm241, %v243, %v245
        %vm247 = vcmask 261120
        %v248 = vsel %vm247, %v244, 0
        %v250 = vsel %vm247, %v246, 0
        %252 = vmatprep.subr.mxu0 0.0
        %253 = vmatpush1.msra.mxu0 %v234
        %254 = vmatprep.subr.mxu0 0.0
        %255 = vmatpush1.msra.mxu0 %v235
        %256 = vmatprep.subr.mxu0 0.0
        %257 = vmatpush1.msra.mxu0 %v236
        %258 = vmatprep.subr.mxu0 0.0
        %259 = vmatpush1.msra.mxu0 %v237
        %260 = vmatprep.subr.mxu0 0.0
        %261 = vmatpush1.msra.mxu0 0.0
        %262 = vmatprep.subr.mxu0 0.0
        %263 = vmatpush1.msra.mxu0 0.0
        %264 = vmatprep.subr.mxu0 0.0
        %265 = vmatpush1.msra.mxu0 0.0
        %266 = vmatprep.subr.mxu0 0.0
        %267 = vmatpush1.msra.mxu0 0.0
        %268 = vmatprep.subr.mxu0 0.0
        %269 = vmatpush1.msra.mxu0 0.0
        %270 = vmatprep.subr.mxu0 0.0
        %271 = vmatpush1.msra.mxu0 0.0
        %272 = vmatprep.subr.mxu0 0.0
        %273 = vmatpush1.msra.mxu0 0.0
        %274 = vmatprep.subr.mxu0 0.0
        %275 = vmatpush1.msra.mxu0 0.0
        %276 = vmatprep.subr.mxu0 0.0
        %277 = vmatpush1.msra.mxu0 0.0
        %278 = vmatprep.subr.mxu0 0.0
        %279 = vmatpush1.msra.mxu0 0.0
        %280 = vmatprep.subr.mxu0 0.0
        %281 = vmatpush1.msra.mxu0 0.0
        %282 = vmatprep.subr.mxu0 0.0
        %283 = vmatpush1.msra.mxu0 0.0
        %284 = vmatprep.subr.mxu0 0.0
        %285 = vmatpush1.msra.mxu0 0.0
        %286 = vmatprep.subr.mxu0 0.0
        %287 = vmatpush1.msra.mxu0 0.0
        %288 = vmatprep.subr.mxu0 0.0
        %289 = vmatpush1.msra.mxu0 0.0
        %290 = vmatprep.subr.mxu0 0.0
        %291 = vmatpush1.msra.mxu0 0.0
        %292 = vmatprep.subr.mxu0 0.0
        %293 = vmatpush1.msra.mxu0 0.0
        %294 = vmatprep.subr.mxu0 0.0
        %295 = vmatpush1.msra.mxu0 0.0
        %296 = vmatprep.subr.mxu0 0.0
        %297 = vmatpush1.msra.mxu0 0.0
        %298 = vmatprep.subr.mxu0 0.0
        %299 = vmatpush1.msra.mxu0 0.0
        %300 = vmatprep.subr.mxu0 0.0
        %301 = vmatpush1.msra.mxu0 0.0
        %302 = vmatprep.subr.mxu0 0.0
        %303 = vmatpush1.msra.mxu0 0.0
        %304 = vmatprep.subr.mxu0 0.0
        %305 = vmatpush1.msra.mxu0 0.0
        %306 = vmatprep.subr.mxu0 0.0
        %307 = vmatpush1.msra.mxu0 0.0
        %308 = vmatprep.subr.mxu0 0.0
        %309 = vmatpush1.msra.mxu0 0.0
        %310 = vmatprep.subr.mxu0 0.0
        %311 = vmatpush1.msra.mxu0 0.0
        %312 = vmatprep.subr.mxu0 0.0
        %313 = vmatpush1.msra.mxu0 0.0
        %314 = vmatprep.subr.mxu0 0.0
        %315 = vmatpush1.msra.mxu0 0.0
        %316 = vmatprep.mubr.f32.mxu0 0.0
        %317 = vmatmul.mubr.f32.gmra.mrb[0].mxu0 %v248
        %v318 = vpop.f32.mrb[0].mxu0
        %v319 = vadd.f32 0.0, %v318
        %v320 = vpop.f32.mrb[0].mxu0
        %321 = vmatprep.mubr.f32.mxu0 0.0
        %322 = vmatmul.mubr.f32.gmra.mrb[0].mxu0 %v250
        %v323 = vpop.f32.mrb[0].mxu0
        %v324 = vadd.f32 0.0, %v323
        %v325 = vpop.f32.mrb[0].mxu0
        %326 = vdwg.mxu0
        %v327 = vsel %vm247, %v227, 0
        %v329 = vsel %vm247, %v228, 0
        %331 = vmatprep.subr.mxu0 0.0
        %332 = vmatpush1.msra.mxu0 %v230
        %333 = vmatprep.subr.mxu0 0.0
        %334 = vmatpush1.msra.mxu0 %v231
        %335 = vmatprep.subr.mxu0 0.0
        %336 = vmatpush1.msra.mxu0 %v232
        %337 = vmatprep.subr.mxu0 0.0
        %338 = vmatpush1.msra.mxu0 %v233
        %339 = vmatprep.subr.mxu0 0.0
        %340 = vmatpush1.msra.mxu0 0.0
        %341 = vmatprep.subr.mxu0 0.0
        %342 = vmatpush1.msra.mxu0 0.0
        %343 = vmatprep.subr.mxu0 0.0
        %344 = vmatpush1.msra.mxu0 0.0
        %345 = vmatprep.subr.mxu0 0.0
        %346 = vmatpush1.msra.mxu0 0.0
        %347 = vmatprep.subr.mxu0 0.0
        %348 = vmatpush1.msra.mxu0 0.0
        %349 = vmatprep.subr.mxu0 0.0
        %350 = vmatpush1.msra.mxu0 0.0
        %351 = vmatprep.subr.mxu0 0.0
        %352 = vmatpush1.msra.mxu0 0.0
        %353 = vmatprep.subr.mxu0 0.0
        %354 = vmatpush1.msra.mxu0 0.0
        %355 = vmatprep.subr.mxu0 0.0
        %356 = vmatpush1.msra.mxu0 0.0
        %357 = vmatprep.subr.mxu0 0.0
        %358 = vmatpush1.msra.mxu0 0.0
        %359 = vmatprep.subr.mxu0 0.0
        %360 = vmatpush1.msra.mxu0 0.0
        %361 = vmatprep.subr.mxu0 0.0
        %362 = vmatpush1.msra.mxu0 0.0
        %363 = vmatprep.subr.mxu0 0.0
        %364 = vmatpush1.msra.mxu0 0.0
        %365 = vmatprep.subr.mxu0 0.0
        %366 = vmatpush1.msra.mxu0 0.0
        %367 = vmatprep.subr.mxu0 0.0
        %368 = vmatpush1.msra.mxu0 0.0
        %369 = vmatprep.subr.mxu0 0.0
        %370 = vmatpush1.msra.mxu0 0.0
        %371 = vmatprep.subr.mxu0 0.0
        %372 = vmatpush1.msra.mxu0 0.0
        %373 = vmatprep.subr.mxu0 0.0
        %374 = vmatpush1.msra.mxu0 0.0
        %375 = vmatprep.subr.mxu0 0.0
        %376 = vmatpush1.msra.mxu0 0.0
        %377 = vmatprep.subr.mxu0 0.0
        %378 = vmatpush1.msra.mxu0 0.0
        %379 = vmatprep.subr.mxu0 0.0
        %380 = vmatpush1.msra.mxu0 0.0
        %381 = vmatprep.subr.mxu0 0.0
        %382 = vmatpush1.msra.mxu0 0.0
        %383 = vmatprep.subr.mxu0 0.0
        %384 = vmatpush1.msra.mxu0 0.0
        %385 = vmatprep.subr.mxu0 0.0
        %386 = vmatpush1.msra.mxu0 0.0
        %387 = vmatprep.subr.mxu0 0.0
        %388 = vmatpush1.msra.mxu0 0.0
        %389 = vmatprep.subr.mxu0 0.0
        %390 = vmatpush1.msra.mxu0 0.0
        %391 = vmatprep.subr.mxu0 0.0
        %392 = vmatpush1.msra.mxu0 0.0
        %393 = vmatprep.subr.mxu0 0.0
        %394 = vmatpush1.msra.mxu0 0.0
        %395 = vmatprep.mubr.f32.mxu0 0.0
        %396 = vmatmul.mubr.f32.gmra.mrb[0].mxu0 %v327
        %v397 = vpop.f32.mrb[0].mxu0
        %v398 = vadd.f32 %v319, %v397
        %v399 = vpop.f32.mrb[0].mxu0
        %400 = vmatprep.mubr.f32.mxu0 0.0
        %401 = vmatmul.mubr.f32.gmra.mrb[0].mxu0 %v329
        %v402 = vpop.f32.mrb[0].mxu0
        %v403 = vadd.f32 %v324, %v402
        %v404 = vpop.f32.mrb[0].mxu0
        %405 = vdwg.mxu0
        %v406 = vmul.f32 %v398, %v398
        %v407 = vmul.f32 %v403, %v403
        %410 = vrot.lane.b32.xlu0 %v406, 95
        %v411 = vpop.permute.xlu0 %410
        %412 = vrot.lane.b32.xlu0 %v407, 95
        %v413 = vpop.permute.xlu0 %412
        %v416 = vadd.f32 %v406, %v411
        %v417 = vadd.f32 %v407, %v413
        %v418 = vld [vmem:[#allocation4 + $0x40] sm:$0xff]
        %v419 = vld [vmem:[#allocation4 + $0x48] sm:$0xff]
        %v420 = vld [vmem:[#allocation4 + $0x50] sm:$0xff]
        %v421 = vld [vmem:[#allocation4 + $0x58] sm:$0xff]
        %v422 = vld [vmem:[#allocation4 + $0x60] sm:$0x1]
        %vm423 = vcmask 269312
        %v425 = vsel %vm423, %v416, 0
        %v428 = vsel %vm423, %v417, 0
        %vm430 = vcmask 1040384
        %v432 = vsel %vm430, %v422, 0
        %434 = vmatprep.subr.mxu0 0.0
        %435 = vmatpush1.msra.mxu0 %v418
        %436 = vmatprep.subr.mxu0 0.0
        %437 = vmatpush1.msra.mxu0 %v419
        %438 = vmatprep.subr.mxu0 0.0
        %439 = vmatpush1.msra.mxu0 %v420
        %440 = vmatprep.subr.mxu0 0.0
        %441 = vmatpush1.msra.mxu0 %v421
        %442 = vmatprep.subr.mxu0 0.0
        %443 = vmatpush1.msra.mxu0 %v432
        %444 = vmatprep.subr.mxu0 0.0
        %445 = vmatpush1.msra.mxu0 0.0
        %446 = vmatprep.subr.mxu0 0.0
        %447 = vmatpush1.msra.mxu0 0.0
        %448 = vmatprep.subr.mxu0 0.0
        %449 = vmatpush1.msra.mxu0 0.0
        %450 = vmatprep.subr.mxu0 0.0
        %451 = vmatpush1.msra.mxu0 0.0
        %452 = vmatprep.subr.mxu0 0.0
        %453 = vmatpush1.msra.mxu0 0.0
        %454 = vmatprep.subr.mxu0 0.0
        %455 = vmatpush1.msra.mxu0 0.0
        %456 = vmatprep.subr.mxu0 0.0
        %457 = vmatpush1.msra.mxu0 0.0
        %458 = vmatprep.subr.mxu0 0.0
        %459 = vmatpush1.msra.mxu0 0.0
        %460 = vmatprep.subr.mxu0 0.0
        %461 = vmatpush1.msra.mxu0 0.0
        %462 = vmatprep.subr.mxu0 0.0
        %463 = vmatpush1.msra.mxu0 0.0
        %464 = vmatprep.subr.mxu0 0.0
        %465 = vmatpush1.msra.mxu0 0.0
        %466 = vmatprep.subr.mxu0 0.0
        %467 = vmatpush1.msra.mxu0 0.0
        %468 = vmatprep.subr.mxu0 0.0
        %469 = vmatpush1.msra.mxu0 0.0
        %470 = vmatprep.subr.mxu0 0.0
        %471 = vmatpush1.msra.mxu0 0.0
        %472 = vmatprep.subr.mxu0 0.0
        %473 = vmatpush1.msra.mxu0 0.0
        %474 = vmatprep.subr.mxu0 0.0
        %475 = vmatpush1.msra.mxu0 0.0
        %476 = vmatprep.subr.mxu0 0.0
        %477 = vmatpush1.msra.mxu0 0.0
        %478 = vmatprep.subr.mxu0 0.0
        %479 = vmatpush1.msra.mxu0 0.0
        %480 = vmatprep.subr.mxu0 0.0
        %481 = vmatpush1.msra.mxu0 0.0
        %482 = vmatprep.subr.mxu0 0.0
        %483 = vmatpush1.msra.mxu0 0.0
        %484 = vmatprep.subr.mxu0 0.0
        %485 = vmatpush1.msra.mxu0 0.0
        %486 = vmatprep.subr.mxu0 0.0
        %487 = vmatpush1.msra.mxu0 0.0
        %488 = vmatprep.subr.mxu0 0.0
        %489 = vmatpush1.msra.mxu0 0.0
        %490 = vmatprep.subr.mxu0 0.0
        %491 = vmatpush1.msra.mxu0 0.0
        %492 = vmatprep.subr.mxu0 0.0
        %493 = vmatpush1.msra.mxu0 0.0
        %494 = vmatprep.subr.mxu0 0.0
        %495 = vmatpush1.msra.mxu0 0.0
        %496 = vmatprep.subr.mxu0 0.0
        %497 = vmatpush1.msra.mxu0 0.0
        %498 = vmatprep.mubr.f32.mxu0 0.0
        %499 = vmatmul.mubr.f32.gmra.mrb[0].mxu0 %v425
        %v500 = vpop.f32.mrb[0].mxu0
        %v501 = vadd.f32 0.0, %v500
        %v502 = vpop.f32.mrb[0].mxu0
        %503 = vmatprep.mubr.f32.mxu0 0.0
        %504 = vmatmul.mubr.f32.gmra.mrb[0].mxu0 %v428
        %v505 = vpop.f32.mrb[0].mxu0
        %v506 = vadd.f32 0.0, %v505
        %v507 = vpop.f32.mrb[0].mxu0
        %508 = vdwg.mxu0
        %v509 = vld [vmem:[#allocation4 + $0x68] sm:$0xff]
        %v510 = vld [vmem:[#allocation4 + $0x70] sm:$0xff]
        %vm511 = vcmask 130048
        %v513 = vsel %vm511, %v509, 0
        %v516 = vsel %vm511, %v510, 0
        %518 = vmatprep.subr.mxu0 0.0
        %519 = vmatpush1.msra.mxu0 %v501
        %520 = vmatprep.subr.mxu0 0.0
        %521 = vmatpush1.msra.mxu0 %v506
        %522 = vmatprep.subr.mxu0 0.0
        %523 = vmatpush1.msra.mxu0 0.0
        %524 = vmatprep.subr.mxu0 0.0
        %525 = vmatpush1.msra.mxu0 0.0
        %526 = vmatprep.subr.mxu0 0.0
        %527 = vmatpush1.msra.mxu0 0.0
        %528 = vmatprep.subr.mxu0 0.0
        %529 = vmatpush1.msra.mxu0 0.0
        %530 = vmatprep.subr.mxu0 0.0
        %531 = vmatpush1.msra.mxu0 0.0
        %532 = vmatprep.subr.mxu0 0.0
        %533 = vmatpush1.msra.mxu0 0.0
        %534 = vmatprep.subr.mxu0 0.0
        %535 = vmatpush1.msra.mxu0 0.0
        %536 = vmatprep.subr.mxu0 0.0
        %537 = vmatpush1.msra.mxu0 0.0
        %538 = vmatprep.subr.mxu0 0.0
        %539 = vmatpush1.msra.mxu0 0.0
        %540 = vmatprep.subr.mxu0 0.0
        %541 = vmatpush1.msra.mxu0 0.0
        %542 = vmatprep.subr.mxu0 0.0
        %543 = vmatpush1.msra.mxu0 0.0
        %544 = vmatprep.subr.mxu0 0.0
        %545 = vmatpush1.msra.mxu0 0.0
        %546 = vmatprep.subr.mxu0 0.0
        %547 = vmatpush1.msra.mxu0 0.0
        %548 = vmatprep.subr.mxu0 0.0
        %549 = vmatpush1.msra.mxu0 0.0
        %550 = vmatprep.subr.mxu0 0.0
        %551 = vmatpush1.msra.mxu0 0.0
        %552 = vmatprep.subr.mxu0 0.0
        %553 = vmatpush1.msra.mxu0 0.0
        %554 = vmatprep.subr.mxu0 0.0
        %555 = vmatpush1.msra.mxu0 0.0
        %556 = vmatprep.subr.mxu0 0.0
        %557 = vmatpush1.msra.mxu0 0.0
        %558 = vmatprep.subr.mxu0 0.0
        %559 = vmatpush1.msra.mxu0 0.0
        %560 = vmatprep.subr.mxu0 0.0
        %561 = vmatpush1.msra.mxu0 0.0
        %562 = vmatprep.subr.mxu0 0.0
        %563 = vmatpush1.msra.mxu0 0.0
        %564 = vmatprep.subr.mxu0 0.0
        %565 = vmatpush1.msra.mxu0 0.0
        %566 = vmatprep.subr.mxu0 0.0
        %567 = vmatpush1.msra.mxu0 0.0
        %568 = vmatprep.subr.mxu0 0.0
        %569 = vmatpush1.msra.mxu0 0.0
        %570 = vmatprep.subr.mxu0 0.0
        %571 = vmatpush1.msra.mxu0 0.0
        %572 = vmatprep.subr.mxu0 0.0
        %573 = vmatpush1.msra.mxu0 0.0
        %574 = vmatprep.subr.mxu0 0.0
        %575 = vmatpush1.msra.mxu0 0.0
        %576 = vmatprep.subr.mxu0 0.0
        %577 = vmatpush1.msra.mxu0 0.0
        %578 = vmatprep.subr.mxu0 0.0
        %579 = vmatpush1.msra.mxu0 0.0
        %580 = vmatprep.subr.mxu0 0.0
        %581 = vmatpush1.msra.mxu0 0.0
        %582 = vmatprep.mubr.f32.mxu0 0.0
        %583 = vmatmul.mubr.f32.gmra.mrb[0].mxu0 %v513
        %v584 = vpop.f32.mrb[0].mxu0
        %v585 = vadd.f32 1e-05, %v584
        %v586 = vpop.f32.mrb[0].mxu0
        %587 = vmatprep.mubr.f32.mxu0 0.0
        %588 = vmatmul.mubr.f32.gmra.mrb[0].mxu0 %v516
        %v589 = vpop.f32.mrb[0].mxu0
        %v590 = vadd.f32 1e-05, %v589
        %v591 = vpop.f32.mrb[0].mxu0
        %592 = vdwg.mxu0
        %v593 = vlog2.pop %v585
        %v594 = vmul.f32 %v593, 0.6931472
        %v595 = vlog2.pop %v590
        %v596 = vmul.f32 %v595, 0.6931472
        %597 = vst.msk [vmem:[#allocation2] sm:$0xff] %vm511, 0.0
        %598 = vst.msk [vmem:[#allocation2 + $0x8] sm:$0xff] %vm511, 0.0
        %vm599 = vcmask 123904
        %600 = vst.msk [vmem:[#allocation2 + $0x10] sm:$0x3] %vm599, 0.0
        %vm601 = vcmask 27648
        %602 = vst.msk [vmem:[#allocation2 + $0x2] sm:$0xf] %vm601, %v594
        %604 = vrot.lane.b32.xlu0 %v594, 124
        %v605 = vpop.permute.xlu0 %604
        %607 = vst.msk [vmem:[#allocation2 + $0x6] sm:$0xf] %vm601, %v605
        %608 = vrot.lane.b32.xlu0 %v594, 120
        %v609 = vpop.permute.xlu0 %608
        %611 = vst.msk [vmem:[#allocation2 + $0xa] sm:$0xf] %vm601, %v609
        %612 = vrot.lane.b32.xlu0 %v594, 116
        %v613 = vpop.permute.xlu0 %612
        %615 = vst.msk [vmem:[#allocation2 + $0xe] sm:$0xf] %vm601, %v613
        %616 = vrot.lane.b32.xlu0 %v594, 4
        %v617 = vpop.permute.xlu0 %616
        %vm619 = vcmask 64548
        %620 = vst.msk [vmem:[#allocation2 - $0x2] sm:$0xf0] %vm619, %v617
        %621 = vst.msk [vmem:[#allocation2 + $0x2] sm:$0xf0] %vm619, %v594
        %622 = vst.msk [vmem:[#allocation2 + $0x6] sm:$0xf0] %vm619, %v605
        %623 = vst.msk [vmem:[#allocation2 + $0xa] sm:$0xf0] %vm619, %v609
        %625 = vrot.lane.b32.xlu0 %v596, 8
        %v626 = vpop.permute.xlu0 %625
        %vm628 = vcmask 93248
        %629 = vst.msk [vmem:[#allocation2 + $0x2] sm:$0xf] %vm628, %v626
        %630 = vrot.lane.b32.xlu0 %v596, 4
        %v631 = vpop.permute.xlu0 %630
        %633 = vst.msk [vmem:[#allocation2 + $0x6] sm:$0xf] %vm628, %v631
        %634 = vst.msk [vmem:[#allocation2 + $0xa] sm:$0xf] %vm628, %v596
        %635 = vrot.lane.b32.xlu0 %v596, 124
        %v636 = vpop.permute.xlu0 %635
        %638 = vst.msk [vmem:[#allocation2 + $0xe] sm:$0xf] %vm628, %v636
        %639 = vrot.lane.b32.xlu0 %v596, 12
        %v640 = vpop.permute.xlu0 %639
        %vm642 = vcmask 130148
        %643 = vst.msk [vmem:[#allocation2 - $0x2] sm:$0xf0] %vm642, %v640
        %644 = vst.msk [vmem:[#allocation2 + $0x2] sm:$0xf0] %vm642, %v626
        %645 = vst.msk [vmem:[#allocation2 + $0x6] sm:$0xf0] %vm642, %v631
        %646 = vst.msk [vmem:[#allocation2 + $0xa] sm:$0xf0] %vm642, %v596
        %v647 = vld [vmem:[#allocation4 + $0x78] sm:$0xff]
        %v648 = vld [vmem:[#allocation4 + $0x80] sm:$0xff]
        %v649 = vld [vmem:[#allocation4 + $0x88] sm:$0x3]
        %v650 = vld [vmem:[#allocation2] sm:$0xff]
        %v651 = vld [vmem:[#allocation2 + $0x8] sm:$0xff]
        %v652 = vld [vmem:[#allocation2 + $0x10] sm:$0x3]
        %v653 = vld [vmem:[#allocation6] sm:$0xf]
        %v654 = vld [vmem:[#allocation6 + $0x8] sm:$0xf]
        %v655 = vpack.c.bf16 %v651, %v650
        %v656 = vpack.c.bf16 %v652, %v652
        %v659 = vunpack.c.l.b16 %v653
        %v660 = vunpack.c.l.b16 %v654
        %v661 = vpack.c.b16 %v660, %v659
        %v664 = vsel %vm511, %v655, 0
        %v667 = vsel %vm511, %v656, 0
        %669 = vmatprep.subr.bf16.mxu0 0
        %670 = vmatpush1.bf16.msra.mxu0 %v661
        %671 = vmatprep.subr.bf16.mxu0 0
        %672 = vmatpush1.bf16.msra.mxu0 0
        %673 = vmatprep.subr.bf16.mxu0 0
        %674 = vmatpush1.bf16.msra.mxu0 0
        %675 = vmatprep.subr.bf16.mxu0 0
        %676 = vmatpush1.bf16.msra.mxu0 0
        %677 = vmatprep.subr.bf16.mxu0 0
        %678 = vmatpush1.bf16.msra.mxu0 0
        %679 = vmatprep.subr.bf16.mxu0 0
        %680 = vmatpush1.bf16.msra.mxu0 0
        %681 = vmatprep.subr.bf16.mxu0 0
        %682 = vmatpush1.bf16.msra.mxu0 0
        %683 = vmatprep.subr.bf16.mxu0 0
        %684 = vmatpush1.bf16.msra.mxu0 0
        %685 = vmatprep.subr.bf16.mxu0 0
        %686 = vmatpush1.bf16.msra.mxu0 0
        %687 = vmatprep.subr.bf16.mxu0 0
        %688 = vmatpush1.bf16.msra.mxu0 0
        %689 = vmatprep.subr.bf16.mxu0 0
        %690 = vmatpush1.bf16.msra.mxu0 0
        %691 = vmatprep.subr.bf16.mxu0 0
        %692 = vmatpush1.bf16.msra.mxu0 0
        %693 = vmatprep.subr.bf16.mxu0 0
        %694 = vmatpush1.bf16.msra.mxu0 0
        %695 = vmatprep.subr.bf16.mxu0 0
        %696 = vmatpush1.bf16.msra.mxu0 0
        %697 = vmatprep.subr.bf16.mxu0 0
        %698 = vmatpush1.bf16.msra.mxu0 0
        %699 = vmatprep.subr.bf16.mxu0 0
        %700 = vmatpush1.bf16.msra.mxu0 0
        %701 = vmatprep.mubr.bf16.mxu0 0
        %702 = vmatmul.mubr.bf16.gmra.mrb[0].mxu0 %v664
        %v703 = vpop.f32.mrb[0].mxu0
        %v704 = vadd.f32 0.0, %v703
        %v705 = vpop.f32.mrb[0].mxu0
        %v706 = vpop.f32.mrb[0].mxu0
        %v707 = vadd.f32 0.0, %v706
        %v708 = vpop.f32.mrb[0].mxu0
        %709 = vmatprep.mubr.bf16.mxu0 0
        %710 = vmatmul.mubr.bf16.gmra.mrb[0].mxu0 %v667
        %v711 = vpop.f32.mrb[0].mxu0
        %v712 = vadd.f32 0.0, %v711
        %v713 = vpop.f32.mrb[0].mxu0
        %v714 = vpop.f32.mrb[0].mxu0
        %v715 = vpop.f32.mrb[0].mxu0
        %716 = vdwg.mxu0
        %v717 = vadd.f32 %v647, %v704
        %v718 = vadd.f32 %v648, %v707
        %v719 = vadd.f32 %v649, %v712
        %v720 = vsel %vm247, %v717, 0.0
        %721 = vadd.xlane.f32.xlu0 %v720
        %v722 = vpop.xlane.xlu0 %721
        %v723 = vsel %vm247, %v718, 0.0
        %724 = vadd.xlane.f32.xlu0 %v723
        %v725 = vpop.xlane.xlu0 %724
        %vm726 = vcmask 254976
        %v727 = vsel %vm726, %v719, 0.0
        %728 = vadd.xlane.f32.xlu0 %v727
        %v729 = vpop.xlane.xlu0 %728
        %v730 = vrcp.pop 32.0
        %v731 = vmul.f32 %v722, %v730
        %v732 = vmul.f32 %v725, %v730
        %v733 = vmul.f32 %v729, %v730
        %v734 = vsub.f32 %v717, %v731
        %v735 = vsub.f32 %v718, %v732
        %v736 = vsub.f32 %v719, %v733
        %v737 = vmul.f32 %v734, %v734
        %v738 = vmul.f32 %v735, %v735
        %v739 = vmul.f32 %v736, %v736
        %v740 = vsel %vm247, %v737, 0.0
        %741 = vadd.xlane.f32.xlu0 %v740
        %v742 = vpop.xlane.xlu0 %741
        %v743 = vsel %vm247, %v738, 0.0
        %744 = vadd.xlane.f32.xlu0 %v743
        %v745 = vpop.xlane.xlu0 %744
        %v746 = vsel %vm726, %v739, 0.0
        %747 = vadd.xlane.f32.xlu0 %v746
        %v748 = vpop.xlane.xlu0 %747
        %v749 = vmul.f32 %v742, %v730
        %v750 = vmul.f32 %v745, %v730
        %v751 = vmul.f32 %v748, %v730
        %v752 = vadd.f32 %v749, 1e-06
        %v753 = vadd.f32 %v750, 1e-06
        %v754 = vadd.f32 %v751, 1e-06
        %v755 = vrsqrt.pop %v752
        %v756 = vrsqrt.pop %v753
        %v757 = vrsqrt.pop %v754
        %v758 = vmul.f32 %v734, %v755
        %v759 = vmul.f32 %v735, %v756
        %v760 = vmul.f32 %v736, %v757
        %v761 = vld [vmem:[%s3] ss:$0 sm:$0xff]
        %v762 = vmul.f32 %v758, %v761
        %v763 = vmul.f32 %v759, %v761
        %v764 = vmul.f32 %v760, %v761
        %v765 = vld [vmem:[%s3 + $0x1] ss:$0 sm:$0xff]
        %v766 = vadd.f32 %v762, %v765
        %v767 = vadd.f32 %v763, %v765
        %v768 = vadd.f32 %v764, %v765
        %s769 = scalar_lea.vmem [#allocation6], 128
        %v770 = vld [vmem:[%s769] sm:$0xf]
        %v771 = vld [vmem:[%s769 + $0x8] sm:$0xf]
        %v772 = vld [vmem:[%s769 + $0x10] sm:$0xf]
        %v773 = vld [vmem:[%s769 + $0x18] sm:$0xf]
        %v774 = vpack.c.bf16 %v767, %v766
        %v775 = vpack.c.bf16 %v768, %v768
        %v776 = vld [vmem:[%s3 + $0x2] ss:$0 sm:$0xff]
        %v781 = vunpack.c.l.b16 %v770
        %v782 = vunpack.c.l.b16 %v771
        %v783 = vunpack.c.l.b16 %v772
        %v784 = vunpack.c.l.b16 %v773
        %v785 = vpack.c.b16 %v782, %v781
        %v786 = vpack.c.b16 %v784, %v783
        %v790 = vsel %vm247, %v774, 0
        %v793 = vsel %vm247, %v775, 0
        %795 = vmatprep.subr.bf16.mxu0 0
        %796 = vmatpush1.bf16.msra.mxu0 %v785
        %797 = vmatprep.subr.bf16.mxu0 0
        %798 = vmatpush1.bf16.msra.mxu0 %v786
        %799 = vmatprep.subr.bf16.mxu0 0
        %800 = vmatpush1.bf16.msra.mxu0 0
        %801 = vmatprep.subr.bf16.mxu0 0
        %802 = vmatpush1.bf16.msra.mxu0 0
        %803 = vmatprep.subr.bf16.mxu0 0
        %804 = vmatpush1.bf16.msra.mxu0 0
        %805 = vmatprep.subr.bf16.mxu0 0
        %806 = vmatpush1.bf16.msra.mxu0 0
        %807 = vmatprep.subr.bf16.mxu0 0
        %808 = vmatpush1.bf16.msra.mxu0 0
        %809 = vmatprep.subr.bf16.mxu0 0
        %810 = vmatpush1.bf16.msra.mxu0 0
        %811 = vmatprep.subr.bf16.mxu0 0
        %812 = vmatpush1.bf16.msra.mxu0 0
        %813 = vmatprep.subr.bf16.mxu0 0
        %814 = vmatpush1.bf16.msra.mxu0 0
        %815 = vmatprep.subr.bf16.mxu0 0
        %816 = vmatpush1.bf16.msra.mxu0 0
        %817 = vmatprep.subr.bf16.mxu0 0
        %818 = vmatpush1.bf16.msra.mxu0 0
        %819 = vmatprep.subr.bf16.mxu0 0
        %820 = vmatpush1.bf16.msra.mxu0 0
        %821 = vmatprep.subr.bf16.mxu0 0
        %822 = vmatpush1.bf16.msra.mxu0 0
        %823 = vmatprep.subr.bf16.mxu0 0
        %824 = vmatpush1.bf16.msra.mxu0 0
        %825 = vmatprep.subr.bf16.mxu0 0
        %826 = vmatpush1.bf16.msra.mxu0 0
        %827 = vmatprep.mubr.bf16.mxu0 0
        %828 = vmatmul.mubr.bf16.gmra.mrb[0].mxu0 %v790
        %v829 = vpop.f32.mrb[0].mxu0
        %v830 = vadd.f32 %v776, %v829
        %v831 = vpop.f32.mrb[0].mxu0
        %v832 = vpop.f32.mrb[0].mxu0
        %v833 = vadd.f32 %v776, %v832
        %v834 = vpop.f32.mrb[0].mxu0
        %835 = vmatprep.mubr.bf16.mxu0 0
        %836 = vmatmul.mubr.bf16.gmra.mrb[0].mxu0 %v793
        %v837 = vpop.f32.mrb[0].mxu0
        %v838 = vadd.f32 %v776, %v837
        %v839 = vpop.f32.mrb[0].mxu0
        %v840 = vpop.f32.mrb[0].mxu0
        %v841 = vpop.f32.mrb[0].mxu0
        %842 = vdwg.mxu0
        %846 = vrot.lane.b32.xlu0 %v830, 96
        %v847 = vpop.permute.xlu0 %846
        %848 = vrot.lane.b32.xlu0 %v833, 96
        %v849 = vpop.permute.xlu0 %848
        %850 = vrot.lane.b32.xlu0 %v838, 96
        %v851 = vpop.permute.xlu0 %850
        %vm852 = vcmask 64512
        %v853 = vsel %vm852, %v830, 0
        %v855 = vsel %vm852, %v833, 0
        %v857 = vsel %vm852, %v838, 0
        %v859 = vsel %vm852, %v847, 0
        %v861 = vsel %vm852, %v849, 0
        %v863 = vsel %vm852, %v851, 0
        %865 = vmatprep.subr.mxu0 0.0
        %866 = vmatpush1.xpose.msra.mxu0 %v859
        %867 = vmatprep.subr.mxu0 0.0
        %868 = vmatpush1.xpose.msra.mxu0 %v861
        %869 = vmatprep.subr.mxu0 0.0
        %870 = vmatpush1.xpose.msra.mxu0 %v863
        %871 = vmatprep.subr.mxu0 0.0
        %872 = vmatpush1.xpose.msra.mxu0 0.0
        %873 = vmatprep.subr.mxu0 0.0
        %874 = vmatpush1.xpose.msra.mxu0 0.0
        %875 = vmatprep.subr.mxu0 0.0
        %876 = vmatpush1.xpose.msra.mxu0 0.0
        %877 = vmatprep.subr.mxu0 0.0
        %878 = vmatpush1.xpose.msra.mxu0 0.0
        %879 = vmatprep.subr.mxu0 0.0
        %880 = vmatpush1.xpose.msra.mxu0 0.0
        %881 = vmatprep.subr.mxu0 0.0
        %882 = vmatpush1.xpose.msra.mxu0 0.0
        %883 = vmatprep.subr.mxu0 0.0
        %884 = vmatpush1.xpose.msra.mxu0 0.0
        %885 = vmatprep.subr.mxu0 0.0
        %886 = vmatpush1.xpose.msra.mxu0 0.0
        %887 = vmatprep.subr.mxu0 0.0
        %888 = vmatpush1.xpose.msra.mxu0 0.0
        %889 = vmatprep.subr.mxu0 0.0
        %890 = vmatpush1.xpose.msra.mxu0 0.0
        %891 = vmatprep.subr.mxu0 0.0
        %892 = vmatpush1.xpose.msra.mxu0 0.0
        %893 = vmatprep.subr.mxu0 0.0
        %894 = vmatpush1.xpose.msra.mxu0 0.0
        %895 = vmatprep.subr.mxu0 0.0
        %896 = vmatpush1.xpose.msra.mxu0 0.0
        %897 = vmatprep.subr.mxu0 0.0
        %898 = vmatpush1.xpose.msra.mxu0 0.0
        %899 = vmatprep.subr.mxu0 0.0
        %900 = vmatpush1.xpose.msra.mxu0 0.0
        %901 = vmatprep.subr.mxu0 0.0
        %902 = vmatpush1.xpose.msra.mxu0 0.0
        %903 = vmatprep.subr.mxu0 0.0
        %904 = vmatpush1.xpose.msra.mxu0 0.0
        %905 = vmatprep.subr.mxu0 0.0
        %906 = vmatpush1.xpose.msra.mxu0 0.0
        %907 = vmatprep.subr.mxu0 0.0
        %908 = vmatpush1.xpose.msra.mxu0 0.0
        %909 = vmatprep.subr.mxu0 0.0
        %910 = vmatpush1.xpose.msra.mxu0 0.0
        %911 = vmatprep.subr.mxu0 0.0
        %912 = vmatpush1.xpose.msra.mxu0 0.0
        %913 = vmatprep.subr.mxu0 0.0
        %914 = vmatpush1.xpose.msra.mxu0 0.0
        %915 = vmatprep.subr.mxu0 0.0
        %916 = vmatpush1.xpose.msra.mxu0 0.0
        %917 = vmatprep.subr.mxu0 0.0
        %918 = vmatpush1.xpose.msra.mxu0 0.0
        %919 = vmatprep.subr.mxu0 0.0
        %920 = vmatpush1.xpose.msra.mxu0 0.0
        %921 = vmatprep.subr.mxu0 0.0
        %922 = vmatpush1.xpose.msra.mxu0 0.0
        %923 = vmatprep.subr.mxu0 0.0
        %924 = vmatpush1.xpose.msra.mxu0 0.0
        %925 = vmatprep.subr.mxu0 0.0
        %926 = vmatpush1.xpose.msra.mxu0 0.0
        %927 = vmatprep.subr.mxu0 0.0
        %928 = vmatpush1.xpose.msra.mxu0 0.0
        %929 = vmatprep.mubr.f32.mxu0 0.0
        %930 = vmatmul.mubr.f32.gmra.mrb[0].mxu0 %v853
        %v931 = vpop.f32.mrb[0].mxu0
        %v932 = vadd.f32 0.0, %v931
        %v933 = vpop.f32.mrb[0].mxu0
        %934 = vmatprep.mubr.f32.mxu0 0.0
        %935 = vmatmul.mubr.f32.gmra.mrb[0].mxu0 %v855
        %v936 = vpop.f32.mrb[0].mxu0
        %v937 = vadd.f32 0.0, %v936
        %v938 = vpop.f32.mrb[0].mxu0
        %939 = vmatprep.mubr.f32.mxu0 0.0
        %940 = vmatmul.mubr.f32.gmra.mrb[0].mxu0 %v857
        %v941 = vpop.f32.mrb[0].mxu0
        %v942 = vadd.f32 0.0, %v941
        %v943 = vpop.f32.mrb[0].mxu0
        %944 = vdwg.mxu0
        %vm945 = vcmask 146432
        %v946 = vsel %vm945, %v932, -inf
        %947 = vmax.xlane.f32.xlu0 %v946
        %v948 = vpop.xlane.xlu0 %947
        %v949 = vsel %vm945, %v937, -inf
        %950 = vmax.xlane.f32.xlu0 %v949
        %v951 = vpop.xlane.xlu0 %950
        %vm952 = vcmask 140288
        %v953 = vsel %vm952, %v942, -inf
        %954 = vmax.xlane.f32.xlu0 %v953
        %v955 = vpop.xlane.xlu0 %954
        %v956 = vsub.f32 %v932, %v948
        %v957 = vsub.f32 %v937, %v951
        %v958 = vsub.f32 %v942, %v955
        %v959 = vmul.f32 %v956, 1.442695
        %v960 = vpow.pop %v959
        %v961 = vmul.f32 %v957, 1.442695
        %v962 = vpow.pop %v961
        %v963 = vmul.f32 %v958, 1.442695
        %v964 = vpow.pop %v963
        %v965 = vsel %vm945, %v960, 0.0
        %966 = vadd.xlane.f32.xlu0 %v965
        %v967 = vpop.xlane.xlu0 %966
        %v968 = vsel %vm945, %v962, 0.0
        %969 = vadd.xlane.f32.xlu0 %v968
        %v970 = vpop.xlane.xlu0 %969
        %v971 = vsel %vm952, %v964, 0.0
        %972 = vadd.xlane.f32.xlu0 %v971
        %v973 = vpop.xlane.xlu0 %972
        %v974 = vrcp.pop %v967
        %v975 = vmul.f32 %v960, %v974
        %v976 = vrcp.pop %v970
        %v977 = vmul.f32 %v962, %v976
        %v978 = vrcp.pop %v973
        %v979 = vmul.f32 %v964, %v978
        %980 = vrot.lane.b32.xlu0 %v830, 64
        %v981 = vpop.permute.xlu0 %980
        %982 = vrot.lane.b32.xlu0 %v833, 64
        %v983 = vpop.permute.xlu0 %982
        %984 = vrot.lane.b32.xlu0 %v838, 64
        %v985 = vpop.permute.xlu0 %984
        %v989 = vsel %vm945, %v975, 0
        %v992 = vsel %vm945, %v977, 0
        %v995 = vsel %vm945, %v979, 0
        %vm997 = vcmask 1041408
        %v998 = vsel %vm997, %v985, 0
        %1000 = vmatprep.subr.mxu0 0.0
        %1001 = vmatpush1.msra.mxu0 %v981
        %1002 = vmatprep.subr.mxu0 0.0
        %1003 = vmatpush1.msra.mxu0 %v983
        %1004 = vmatprep.subr.mxu0 0.0
        %1005 = vmatpush1.msra.mxu0 %v998
        %1006 = vmatprep.subr.mxu0 0.0
        %1007 = vmatpush1.msra.mxu0 0.0
        %1008 = vmatprep.subr.mxu0 0.0
        %1009 = vmatpush1.msra.mxu0 0.0
        %1010 = vmatprep.subr.mxu0 0.0
        %1011 = vmatpush1.msra.mxu0 0.0
        %1012 = vmatprep.subr.mxu0 0.0
        %1013 = vmatpush1.msra.mxu0 0.0
        %1014 = vmatprep.subr.mxu0 0.0
        %1015 = vmatpush1.msra.mxu0 0.0
        %1016 = vmatprep.subr.mxu0 0.0
        %1017 = vmatpush1.msra.mxu0 0.0
        %1018 = vmatprep.subr.mxu0 0.0
        %1019 = vmatpush1.msra.mxu0 0.0
        %1020 = vmatprep.subr.mxu0 0.0
        %1021 = vmatpush1.msra.mxu0 0.0
        %1022 = vmatprep.subr.mxu0 0.0
        %1023 = vmatpush1.msra.mxu0 0.0
        %1024 = vmatprep.subr.mxu0 0.0
        %1025 = vmatpush1.msra.mxu0 0.0
        %1026 = vmatprep.subr.mxu0 0.0
        %1027 = vmatpush1.msra.mxu0 0.0
        %1028 = vmatprep.subr.mxu0 0.0
        %1029 = vmatpush1.msra.mxu0 0.0
        %1030 = vmatprep.subr.mxu0 0.0
        %1031 = vmatpush1.msra.mxu0 0.0
        %1032 = vmatprep.subr.mxu0 0.0
        %1033 = vmatpush1.msra.mxu0 0.0
        %1034 = vmatprep.subr.mxu0 0.0
        %1035 = vmatpush1.msra.mxu0 0.0
        %1036 = vmatprep.subr.mxu0 0.0
        %1037 = vmatpush1.msra.mxu0 0.0
        %1038 = vmatprep.subr.mxu0 0.0
        %1039 = vmatpush1.msra.mxu0 0.0
        %1040 = vmatprep.subr.mxu0 0.0
        %1041 = vmatpush1.msra.mxu0 0.0
        %1042 = vmatprep.subr.mxu0 0.0
        %1043 = vmatpush1.msra.mxu0 0.0
        %1044 = vmatprep.subr.mxu0 0.0
        %1045 = vmatpush1.msra.mxu0 0.0
        %1046 = vmatprep.subr.mxu0 0.0
        %1047 = vmatpush1.msra.mxu0 0.0
        %1048 = vmatprep.subr.mxu0 0.0
        %1049 = vmatpush1.msra.mxu0 0.0
        %1050 = vmatprep.subr.mxu0 0.0
        %1051 = vmatpush1.msra.mxu0 0.0
        %1052 = vmatprep.subr.mxu0 0.0
        %1053 = vmatpush1.msra.mxu0 0.0
        %1054 = vmatprep.subr.mxu0 0.0
        %1055 = vmatpush1.msra.mxu0 0.0
        %1056 = vmatprep.subr.mxu0 0.0
        %1057 = vmatpush1.msra.mxu0 0.0
        %1058 = vmatprep.subr.mxu0 0.0
        %1059 = vmatpush1.msra.mxu0 0.0
        %1060 = vmatprep.subr.mxu0 0.0
        %1061 = vmatpush1.msra.mxu0 0.0
        %1062 = vmatprep.subr.mxu0 0.0
        %1063 = vmatpush1.msra.mxu0 0.0
        %1064 = vmatprep.mubr.f32.mxu0 0.0
        %1065 = vmatmul.mubr.f32.gmra.mrb[0].mxu0 %v989
        %v1066 = vpop.f32.mrb[0].mxu0
        %v1067 = vadd.f32 0.0, %v1066
        %v1068 = vpop.f32.mrb[0].mxu0
        %1069 = vmatprep.mubr.f32.mxu0 0.0
        %1070 = vmatmul.mubr.f32.gmra.mrb[0].mxu0 %v992
        %v1071 = vpop.f32.mrb[0].mxu0
        %v1072 = vadd.f32 0.0, %v1071
        %v1073 = vpop.f32.mrb[0].mxu0
        %1074 = vmatprep.mubr.f32.mxu0 0.0
        %1075 = vmatmul.mubr.f32.gmra.mrb[0].mxu0 %v995
        %v1076 = vpop.f32.mrb[0].mxu0
        %v1077 = vadd.f32 0.0, %v1076
        %v1078 = vpop.f32.mrb[0].mxu0
        %1079 = vdwg.mxu0
        %1080 = vst.msk [vmem:[#allocation3] sm:$0xff] %vm852, %v1067
        %1081 = vst.msk [vmem:[#allocation3 + $0x8] sm:$0xff] %vm852, %v1072
        %vm1082 = vcmask 58368
        %1083 = vst.msk [vmem:[#allocation3 + $0x10] sm:$0x3] %vm1082, %v1077
        %1084 = vrot.lane.b32.xlu0 %v830, 120
        %v1085 = vpop.permute.xlu0 %1084
        %1086 = vrot.lane.b32.xlu0 %v833, 120
        %v1087 = vpop.permute.xlu0 %1086
        %1088 = vrot.lane.b32.xlu0 %v838, 120
        %v1089 = vpop.permute.xlu0 %1088
        %1090 = vrot.lane.b32.xlu0 %v830, 88
        %v1091 = vpop.permute.xlu0 %1090
        %1092 = vrot.lane.b32.xlu0 %v833, 88
        %v1093 = vpop.permute.xlu0 %1092
        %1094 = vrot.lane.b32.xlu0 %v838, 88
        %v1095 = vpop.permute.xlu0 %1094
        %v1096 = vsel %vm852, %v1085, 0
        %v1098 = vsel %vm852, %v1087, 0
        %v1100 = vsel %vm852, %v1089, 0
        %v1102 = vsel %vm852, %v1091, 0
        %v1104 = vsel %vm852, %v1093, 0
        %v1106 = vsel %vm852, %v1095, 0
        %1108 = vmatprep.subr.mxu0 0.0
        %1109 = vmatpush1.xpose.msra.mxu0 %v1102
        %1110 = vmatprep.subr.mxu0 0.0
        %1111 = vmatpush1.xpose.msra.mxu0 %v1104
        %1112 = vmatprep.subr.mxu0 0.0
        %1113 = vmatpush1.xpose.msra.mxu0 %v1106
        %1114 = vmatprep.subr.mxu0 0.0
        %1115 = vmatpush1.xpose.msra.mxu0 0.0
        %1116 = vmatprep.subr.mxu0 0.0
        %1117 = vmatpush1.xpose.msra.mxu0 0.0
        %1118 = vmatprep.subr.mxu0 0.0
        %1119 = vmatpush1.xpose.msra.mxu0 0.0
        %1120 = vmatprep.subr.mxu0 0.0
        %1121 = vmatpush1.xpose.msra.mxu0 0.0
        %1122 = vmatprep.subr.mxu0 0.0
        %1123 = vmatpush1.xpose.msra.mxu0 0.0
        %1124 = vmatprep.subr.mxu0 0.0
        %1125 = vmatpush1.xpose.msra.mxu0 0.0
        %1126 = vmatprep.subr.mxu0 0.0
        %1127 = vmatpush1.xpose.msra.mxu0 0.0
        %1128 = vmatprep.subr.mxu0 0.0
        %1129 = vmatpush1.xpose.msra.mxu0 0.0
        %1130 = vmatprep.subr.mxu0 0.0
        %1131 = vmatpush1.xpose.msra.mxu0 0.0
        %1132 = vmatprep.subr.mxu0 0.0
        %1133 = vmatpush1.xpose.msra.mxu0 0.0
        %1134 = vmatprep.subr.mxu0 0.0
        %1135 = vmatpush1.xpose.msra.mxu0 0.0
        %1136 = vmatprep.subr.mxu0 0.0
        %1137 = vmatpush1.xpose.msra.mxu0 0.0
        %1138 = vmatprep.subr.mxu0 0.0
        %1139 = vmatpush1.xpose.msra.mxu0 0.0
        %1140 = vmatprep.subr.mxu0 0.0
        %1141 = vmatpush1.xpose.msra.mxu0 0.0
        %1142 = vmatprep.subr.mxu0 0.0
        %1143 = vmatpush1.xpose.msra.mxu0 0.0
        %1144 = vmatprep.subr.mxu0 0.0
        %1145 = vmatpush1.xpose.msra.mxu0 0.0
        %1146 = vmatprep.subr.mxu0 0.0
        %1147 = vmatpush1.xpose.msra.mxu0 0.0
        %1148 = vmatprep.subr.mxu0 0.0
        %1149 = vmatpush1.xpose.msra.mxu0 0.0
        %1150 = vmatprep.subr.mxu0 0.0
        %1151 = vmatpush1.xpose.msra.mxu0 0.0
        %1152 = vmatprep.subr.mxu0 0.0
        %1153 = vmatpush1.xpose.msra.mxu0 0.0
        %1154 = vmatprep.subr.mxu0 0.0
        %1155 = vmatpush1.xpose.msra.mxu0 0.0
        %1156 = vmatprep.subr.mxu0 0.0
        %1157 = vmatpush1.xpose.msra.mxu0 0.0
        %1158 = vmatprep.subr.mxu0 0.0
        %1159 = vmatpush1.xpose.msra.mxu0 0.0
        %1160 = vmatprep.subr.mxu0 0.0
        %1161 = vmatpush1.xpose.msra.mxu0 0.0
        %1162 = vmatprep.subr.mxu0 0.0
        %1163 = vmatpush1.xpose.msra.mxu0 0.0
        %1164 = vmatprep.subr.mxu0 0.0
        %1165 = vmatpush1.xpose.msra.mxu0 0.0
        %1166 = vmatprep.subr.mxu0 0.0
        %1167 = vmatpush1.xpose.msra.mxu0 0.0
        %1168 = vmatprep.subr.mxu0 0.0
        %1169 = vmatpush1.xpose.msra.mxu0 0.0
        %1170 = vmatprep.subr.mxu0 0.0
        %1171 = vmatpush1.xpose.msra.mxu0 0.0
        %1172 = vmatprep.mubr.f32.mxu0 0.0
        %1173 = vmatmul.mubr.f32.gmra.mrb[0].mxu0 %v1096
        %v1174 = vpop.f32.mrb[0].mxu0
        %v1175 = vadd.f32 0.0, %v1174
        %v1176 = vpop.f32.mrb[0].mxu0
        %1177 = vmatprep.mubr.f32.mxu0 0.0
        %1178 = vmatmul.mubr.f32.gmra.mrb[0].mxu0 %v1098
        %v1179 = vpop.f32.mrb[0].mxu0
        %v1180 = vadd.f32 0.0, %v1179
        %v1181 = vpop.f32.mrb[0].mxu0
        %1182 = vmatprep.mubr.f32.mxu0 0.0
        %1183 = vmatmul.mubr.f32.gmra.mrb[0].mxu0 %v1100
        %v1184 = vpop.f32.mrb[0].mxu0
        %v1185 = vadd.f32 0.0, %v1184
        %v1186 = vpop.f32.mrb[0].mxu0
        %1187 = vdwg.mxu0
        %v1188 = vsel %vm945, %v1175, -inf
        %1189 = vmax.xlane.f32.xlu0 %v1188
        %v1190 = vpop.xlane.xlu0 %1189
        %v1191 = vsel %vm945, %v1180, -inf
        %1192 = vmax.xlane.f32.xlu0 %v1191
        %v1193 = vpop.xlane.xlu0 %1192
        %v1194 = vsel %vm952, %v1185, -inf
        %1195 = vmax.xlane.f32.xlu0 %v1194
        %v1196 = vpop.xlane.xlu0 %1195
        %v1197 = vsub.f32 %v1175, %v1190
        %v1198 = vsub.f32 %v1180, %v1193
        %v1199 = vsub.f32 %v1185, %v1196
        %v1200 = vmul.f32 %v1197, 1.442695
        %v1201 = vpow.pop %v1200
        %v1202 = vmul.f32 %v1198, 1.442695
        %v1203 = vpow.pop %v1202
        %v1204 = vmul.f32 %v1199, 1.442695
        %v1205 = vpow.pop %v1204
        %v1206 = vsel %vm945, %v1201, 0.0
        %1207 = vadd.xlane.f32.xlu0 %v1206
        %v1208 = vpop.xlane.xlu0 %1207
        %v1209 = vsel %vm945, %v1203, 0.0
        %1210 = vadd.xlane.f32.xlu0 %v1209
        %v1211 = vpop.xlane.xlu0 %1210
        %v1212 = vsel %vm952, %v1205, 0.0
        %1213 = vadd.xlane.f32.xlu0 %v1212
        %v1214 = vpop.xlane.xlu0 %1213
        %v1215 = vrcp.pop %v1208
        %v1216 = vmul.f32 %v1201, %v1215
        %v1217 = vrcp.pop %v1211
        %v1218 = vmul.f32 %v1203, %v1217
        %v1219 = vrcp.pop %v1214
        %v1220 = vmul.f32 %v1205, %v1219
        %1221 = vrot.lane.b32.xlu0 %v830, 56
        %v1222 = vpop.permute.xlu0 %1221
        %1223 = vrot.lane.b32.xlu0 %v833, 56
        %v1224 = vpop.permute.xlu0 %1223
        %1225 = vrot.lane.b32.xlu0 %v838, 56
        %v1226 = vpop.permute.xlu0 %1225
        %v1230 = vsel %vm945, %v1216, 0
        %v1233 = vsel %vm945, %v1218, 0
        %v1236 = vsel %vm945, %v1220, 0
        %v1238 = vsel %vm997, %v1226, 0
        %1240 = vmatprep.subr.mxu0 0.0
        %1241 = vmatpush1.msra.mxu0 %v1222
        %1242 = vmatprep.subr.mxu0 0.0
        %1243 = vmatpush1.msra.mxu0 %v1224
        %1244 = vmatprep.subr.mxu0 0.0
        %1245 = vmatpush1.msra.mxu0 %v1238
        %1246 = vmatprep.subr.mxu0 0.0
        %1247 = vmatpush1.msra.mxu0 0.0
        %1248 = vmatprep.subr.mxu0 0.0
        %1249 = vmatpush1.msra.mxu0 0.0
        %1250 = vmatprep.subr.mxu0 0.0
        %1251 = vmatpush1.msra.mxu0 0.0
        %1252 = vmatprep.subr.mxu0 0.0
        %1253 = vmatpush1.msra.mxu0 0.0
        %1254 = vmatprep.subr.mxu0 0.0
        %1255 = vmatpush1.msra.mxu0 0.0
        %1256 = vmatprep.subr.mxu0 0.0
        %1257 = vmatpush1.msra.mxu0 0.0
        %1258 = vmatprep.subr.mxu0 0.0
        %1259 = vmatpush1.msra.mxu0 0.0
        %1260 = vmatprep.subr.mxu0 0.0
        %1261 = vmatpush1.msra.mxu0 0.0
        %1262 = vmatprep.subr.mxu0 0.0
        %1263 = vmatpush1.msra.mxu0 0.0
        %1264 = vmatprep.subr.mxu0 0.0
        %1265 = vmatpush1.msra.mxu0 0.0
        %1266 = vmatprep.subr.mxu0 0.0
        %1267 = vmatpush1.msra.mxu0 0.0
        %1268 = vmatprep.subr.mxu0 0.0
        %1269 = vmatpush1.msra.mxu0 0.0
        %1270 = vmatprep.subr.mxu0 0.0
        %1271 = vmatpush1.msra.mxu0 0.0
        %1272 = vmatprep.subr.mxu0 0.0
        %1273 = vmatpush1.msra.mxu0 0.0
        %1274 = vmatprep.subr.mxu0 0.0
        %1275 = vmatpush1.msra.mxu0 0.0
        %1276 = vmatprep.subr.mxu0 0.0
        %1277 = vmatpush1.msra.mxu0 0.0
        %1278 = vmatprep.subr.mxu0 0.0
        %1279 = vmatpush1.msra.mxu0 0.0
        %1280 = vmatprep.subr.mxu0 0.0
        %1281 = vmatpush1.msra.mxu0 0.0
        %1282 = vmatprep.subr.mxu0 0.0
        %1283 = vmatpush1.msra.mxu0 0.0
        %1284 = vmatprep.subr.mxu0 0.0
        %1285 = vmatpush1.msra.mxu0 0.0
        %1286 = vmatprep.subr.mxu0 0.0
        %1287 = vmatpush1.msra.mxu0 0.0
        %1288 = vmatprep.subr.mxu0 0.0
        %1289 = vmatpush1.msra.mxu0 0.0
        %1290 = vmatprep.subr.mxu0 0.0
        %1291 = vmatpush1.msra.mxu0 0.0
        %1292 = vmatprep.subr.mxu0 0.0
        %1293 = vmatpush1.msra.mxu0 0.0
        %1294 = vmatprep.subr.mxu0 0.0
        %1295 = vmatpush1.msra.mxu0 0.0
        %1296 = vmatprep.subr.mxu0 0.0
        %1297 = vmatpush1.msra.mxu0 0.0
        %1298 = vmatprep.subr.mxu0 0.0
        %1299 = vmatpush1.msra.mxu0 0.0
        %1300 = vmatprep.subr.mxu0 0.0
        %1301 = vmatpush1.msra.mxu0 0.0
        %1302 = vmatprep.subr.mxu0 0.0
        %1303 = vmatpush1.msra.mxu0 0.0
        %1304 = vmatprep.mubr.f32.mxu0 0.0
        %1305 = vmatmul.mubr.f32.gmra.mrb[0].mxu0 %v1230
        %v1306 = vpop.f32.mrb[0].mxu0
        %v1307 = vadd.f32 0.0, %v1306
        %v1308 = vpop.f32.mrb[0].mxu0
        %1309 = vmatprep.mubr.f32.mxu0 0.0
        %1310 = vmatmul.mubr.f32.gmra.mrb[0].mxu0 %v1233
        %v1311 = vpop.f32.mrb[0].mxu0
        %v1312 = vadd.f32 0.0, %v1311
        %v1313 = vpop.f32.mrb[0].mxu0
        %1314 = vmatprep.mubr.f32.mxu0 0.0
        %1315 = vmatmul.mubr.f32.gmra.mrb[0].mxu0 %v1236
        %v1316 = vpop.f32.mrb[0].mxu0
        %v1317 = vadd.f32 0.0, %v1316
        %v1318 = vpop.f32.mrb[0].mxu0
        %1319 = vdwg.mxu0
        %1323 = vrot.lane.b32.xlu0 %v1307, 8
        %v1324 = vpop.permute.xlu0 %1323
        %1325 = vrot.lane.b32.xlu0 %v1312, 8
        %v1326 = vpop.permute.xlu0 %1325
        %1327 = vrot.lane.b32.xlu0 %v1317, 8
        %v1328 = vpop.permute.xlu0 %1327
        %vm1332 = vcmask 130112
        %1333 = vst.msk [vmem:[#allocation3] sm:$0xff] %vm1332, %v1324
        %1334 = vst.msk [vmem:[#allocation3 + $0x8] sm:$0xff] %vm1332, %v1326
        %vm1335 = vcmask 123968
        %1336 = vst.msk [vmem:[#allocation3 + $0x10] sm:$0x3] %vm1335, %v1328
        %1337 = vrot.lane.b32.xlu0 %v830, 112
        %v1338 = vpop.permute.xlu0 %1337
        %1339 = vrot.lane.b32.xlu0 %v833, 112
        %v1340 = vpop.permute.xlu0 %1339
        %1341 = vrot.lane.b32.xlu0 %v838, 112
        %v1342 = vpop.permute.xlu0 %1341
        %1343 = vrot.lane.b32.xlu0 %v830, 80
        %v1344 = vpop.permute.xlu0 %1343
        %1345 = vrot.lane.b32.xlu0 %v833, 80
        %v1346 = vpop.permute.xlu0 %1345
        %1347 = vrot.lane.b32.xlu0 %v838, 80
        %v1348 = vpop.permute.xlu0 %1347
        %v1349 = vsel %vm852, %v1338, 0
        %v1351 = vsel %vm852, %v1340, 0
        %v1353 = vsel %vm852, %v1342, 0
        %v1355 = vsel %vm852, %v1344, 0
        %v1357 = vsel %vm852, %v1346, 0
        %v1359 = vsel %vm852, %v1348, 0
        %1361 = vmatprep.subr.mxu0 0.0
        %1362 = vmatpush1.xpose.msra.mxu0 %v1355
        %1363 = vmatprep.subr.mxu0 0.0
        %1364 = vmatpush1.xpose.msra.mxu0 %v1357
        %1365 = vmatprep.subr.mxu0 0.0
        %1366 = vmatpush1.xpose.msra.mxu0 %v1359
        %1367 = vmatprep.subr.mxu0 0.0
        %1368 = vmatpush1.xpose.msra.mxu0 0.0
        %1369 = vmatprep.subr.mxu0 0.0
        %1370 = vmatpush1.xpose.msra.mxu0 0.0
        %1371 = vmatprep.subr.mxu0 0.0
        %1372 = vmatpush1.xpose.msra.mxu0 0.0
        %1373 = vmatprep.subr.mxu0 0.0
        %1374 = vmatpush1.xpose.msra.mxu0 0.0
        %1375 = vmatprep.subr.mxu0 0.0
        %1376 = vmatpush1.xpose.msra.mxu0 0.0
        %1377 = vmatprep.subr.mxu0 0.0
        %1378 = vmatpush1.xpose.msra.mxu0 0.0
        %1379 = vmatprep.subr.mxu0 0.0
        %1380 = vmatpush1.xpose.msra.mxu0 0.0
        %1381 = vmatprep.subr.mxu0 0.0
        %1382 = vmatpush1.xpose.msra.mxu0 0.0
        %1383 = vmatprep.subr.mxu0 0.0
        %1384 = vmatpush1.xpose.msra.mxu0 0.0
        %1385 = vmatprep.subr.mxu0 0.0
        %1386 = vmatpush1.xpose.msra.mxu0 0.0
        %1387 = vmatprep.subr.mxu0 0.0
        %1388 = vmatpush1.xpose.msra.mxu0 0.0
        %1389 = vmatprep.subr.mxu0 0.0
        %1390 = vmatpush1.xpose.msra.mxu0 0.0
        %1391 = vmatprep.subr.mxu0 0.0
        %1392 = vmatpush1.xpose.msra.mxu0 0.0
        %1393 = vmatprep.subr.mxu0 0.0
        %1394 = vmatpush1.xpose.msra.mxu0 0.0
        %1395 = vmatprep.subr.mxu0 0.0
        %1396 = vmatpush1.xpose.msra.mxu0 0.0
        %1397 = vmatprep.subr.mxu0 0.0
        %1398 = vmatpush1.xpose.msra.mxu0 0.0
        %1399 = vmatprep.subr.mxu0 0.0
        %1400 = vmatpush1.xpose.msra.mxu0 0.0
        %1401 = vmatprep.subr.mxu0 0.0
        %1402 = vmatpush1.xpose.msra.mxu0 0.0
        %1403 = vmatprep.subr.mxu0 0.0
        %1404 = vmatpush1.xpose.msra.mxu0 0.0
        %1405 = vmatprep.subr.mxu0 0.0
        %1406 = vmatpush1.xpose.msra.mxu0 0.0
        %1407 = vmatprep.subr.mxu0 0.0
        %1408 = vmatpush1.xpose.msra.mxu0 0.0
        %1409 = vmatprep.subr.mxu0 0.0
        %1410 = vmatpush1.xpose.msra.mxu0 0.0
        %1411 = vmatprep.subr.mxu0 0.0
        %1412 = vmatpush1.xpose.msra.mxu0 0.0
        %1413 = vmatprep.subr.mxu0 0.0
        %1414 = vmatpush1.xpose.msra.mxu0 0.0
        %1415 = vmatprep.subr.mxu0 0.0
        %1416 = vmatpush1.xpose.msra.mxu0 0.0
        %1417 = vmatprep.subr.mxu0 0.0
        %1418 = vmatpush1.xpose.msra.mxu0 0.0
        %1419 = vmatprep.subr.mxu0 0.0
        %1420 = vmatpush1.xpose.msra.mxu0 0.0
        %1421 = vmatprep.subr.mxu0 0.0
        %1422 = vmatpush1.xpose.msra.mxu0 0.0
        %1423 = vmatprep.subr.mxu0 0.0
        %1424 = vmatpush1.xpose.msra.mxu0 0.0
        %1425 = vmatprep.mubr.f32.mxu0 0.0
        %1426 = vmatmul.mubr.f32.gmra.mrb[0].mxu0 %v1349
        %v1427 = vpop.f32.mrb[0].mxu0
        %v1428 = vadd.f32 0.0, %v1427
        %v1429 = vpop.f32.mrb[0].mxu0
        %1430 = vmatprep.mubr.f32.mxu0 0.0
        %1431 = vmatmul.mubr.f32.gmra.mrb[0].mxu0 %v1351
        %v1432 = vpop.f32.mrb[0].mxu0
        %v1433 = vadd.f32 0.0, %v1432
        %v1434 = vpop.f32.mrb[0].mxu0
        %1435 = vmatprep.mubr.f32.mxu0 0.0
        %1436 = vmatmul.mubr.f32.gmra.mrb[0].mxu0 %v1353
        %v1437 = vpop.f32.mrb[0].mxu0
        %v1438 = vadd.f32 0.0, %v1437
        %v1439 = vpop.f32.mrb[0].mxu0
        %1440 = vdwg.mxu0
        %v1441 = vsel %vm945, %v1428, -inf
        %1442 = vmax.xlane.f32.xlu0 %v1441
        %v1443 = vpop.xlane.xlu0 %1442
        %v1444 = vsel %vm945, %v1433, -inf
        %1445 = vmax.xlane.f32.xlu0 %v1444
        %v1446 = vpop.xlane.xlu0 %1445
        %v1447 = vsel %vm952, %v1438, -inf
        %1448 = vmax.xlane.f32.xlu0 %v1447
        %v1449 = vpop.xlane.xlu0 %1448
        %v1450 = vsub.f32 %v1428, %v1443
        %v1451 = vsub.f32 %v1433, %v1446
        %v1452 = vsub.f32 %v1438, %v1449
        %v1453 = vmul.f32 %v1450, 1.442695
        %v1454 = vpow.pop %v1453
        %v1455 = vmul.f32 %v1451, 1.442695
        %v1456 = vpow.pop %v1455
        %v1457 = vmul.f32 %v1452, 1.442695
        %v1458 = vpow.pop %v1457
        %v1459 = vsel %vm945, %v1454, 0.0
        %1460 = vadd.xlane.f32.xlu0 %v1459
        %v1461 = vpop.xlane.xlu0 %1460
        %v1462 = vsel %vm945, %v1456, 0.0
        %1463 = vadd.xlane.f32.xlu0 %v1462
        %v1464 = vpop.xlane.xlu0 %1463
        %v1465 = vsel %vm952, %v1458, 0.0
        %1466 = vadd.xlane.f32.xlu0 %v1465
        %v1467 = vpop.xlane.xlu0 %1466
        %v1468 = vrcp.pop %v1461
        %v1469 = vmul.f32 %v1454, %v1468
        %v1470 = vrcp.pop %v1464
        %v1471 = vmul.f32 %v1456, %v1470
        %v1472 = vrcp.pop %v1467
        %v1473 = vmul.f32 %v1458, %v1472
        %1474 = vrot.lane.b32.xlu0 %v830, 48
        %v1475 = vpop.permute.xlu0 %1474
        %1476 = vrot.lane.b32.xlu0 %v833, 48
        %v1477 = vpop.permute.xlu0 %1476
        %1478 = vrot.lane.b32.xlu0 %v838, 48
        %v1479 = vpop.permute.xlu0 %1478
        %v1483 = vsel %vm945, %v1469, 0
        %v1486 = vsel %vm945, %v1471, 0
        %v1489 = vsel %vm945, %v1473, 0
        %v1491 = vsel %vm997, %v1479, 0
        %1493 = vmatprep.subr.mxu0 0.0
        %1494 = vmatpush1.msra.mxu0 %v1475
        %1495 = vmatprep.subr.mxu0 0.0
        %1496 = vmatpush1.msra.mxu0 %v1477
        %1497 = vmatprep.subr.mxu0 0.0
        %1498 = vmatpush1.msra.mxu0 %v1491
        %1499 = vmatprep.subr.mxu0 0.0
        %1500 = vmatpush1.msra.mxu0 0.0
        %1501 = vmatprep.subr.mxu0 0.0
        %1502 = vmatpush1.msra.mxu0 0.0
        %1503 = vmatprep.subr.mxu0 0.0
        %1504 = vmatpush1.msra.mxu0 0.0
        %1505 = vmatprep.subr.mxu0 0.0
        %1506 = vmatpush1.msra.mxu0 0.0
        %1507 = vmatprep.subr.mxu0 0.0
        %1508 = vmatpush1.msra.mxu0 0.0
        %1509 = vmatprep.subr.mxu0 0.0
        %1510 = vmatpush1.msra.mxu0 0.0
        %1511 = vmatprep.subr.mxu0 0.0
        %1512 = vmatpush1.msra.mxu0 0.0
        %1513 = vmatprep.subr.mxu0 0.0
        %1514 = vmatpush1.msra.mxu0 0.0
        %1515 = vmatprep.subr.mxu0 0.0
        %1516 = vmatpush1.msra.mxu0 0.0
        %1517 = vmatprep.subr.mxu0 0.0
        %1518 = vmatpush1.msra.mxu0 0.0
        %1519 = vmatprep.subr.mxu0 0.0
        %1520 = vmatpush1.msra.mxu0 0.0
        %1521 = vmatprep.subr.mxu0 0.0
        %1522 = vmatpush1.msra.mxu0 0.0
        %1523 = vmatprep.subr.mxu0 0.0
        %1524 = vmatpush1.msra.mxu0 0.0
        %1525 = vmatprep.subr.mxu0 0.0
        %1526 = vmatpush1.msra.mxu0 0.0
        %1527 = vmatprep.subr.mxu0 0.0
        %1528 = vmatpush1.msra.mxu0 0.0
        %1529 = vmatprep.subr.mxu0 0.0
        %1530 = vmatpush1.msra.mxu0 0.0
        %1531 = vmatprep.subr.mxu0 0.0
        %1532 = vmatpush1.msra.mxu0 0.0
        %1533 = vmatprep.subr.mxu0 0.0
        %1534 = vmatpush1.msra.mxu0 0.0
        %1535 = vmatprep.subr.mxu0 0.0
        %1536 = vmatpush1.msra.mxu0 0.0
        %1537 = vmatprep.subr.mxu0 0.0
        %1538 = vmatpush1.msra.mxu0 0.0
        %1539 = vmatprep.subr.mxu0 0.0
        %1540 = vmatpush1.msra.mxu0 0.0
        %1541 = vmatprep.subr.mxu0 0.0
        %1542 = vmatpush1.msra.mxu0 0.0
        %1543 = vmatprep.subr.mxu0 0.0
        %1544 = vmatpush1.msra.mxu0 0.0
        %1545 = vmatprep.subr.mxu0 0.0
        %1546 = vmatpush1.msra.mxu0 0.0
        %1547 = vmatprep.subr.mxu0 0.0
        %1548 = vmatpush1.msra.mxu0 0.0
        %1549 = vmatprep.subr.mxu0 0.0
        %1550 = vmatpush1.msra.mxu0 0.0
        %1551 = vmatprep.subr.mxu0 0.0
        %1552 = vmatpush1.msra.mxu0 0.0
        %1553 = vmatprep.subr.mxu0 0.0
        %1554 = vmatpush1.msra.mxu0 0.0
        %1555 = vmatprep.subr.mxu0 0.0
        %1556 = vmatpush1.msra.mxu0 0.0
        %1557 = vmatprep.mubr.f32.mxu0 0.0
        %1558 = vmatmul.mubr.f32.gmra.mrb[0].mxu0 %v1483
        %v1559 = vpop.f32.mrb[0].mxu0
        %v1560 = vadd.f32 0.0, %v1559
        %v1561 = vpop.f32.mrb[0].mxu0
        %1562 = vmatprep.mubr.f32.mxu0 0.0
        %1563 = vmatmul.mubr.f32.gmra.mrb[0].mxu0 %v1486
        %v1564 = vpop.f32.mrb[0].mxu0
        %v1565 = vadd.f32 0.0, %v1564
        %v1566 = vpop.f32.mrb[0].mxu0
        %1567 = vmatprep.mubr.f32.mxu0 0.0
        %1568 = vmatmul.mubr.f32.gmra.mrb[0].mxu0 %v1489
        %v1569 = vpop.f32.mrb[0].mxu0
        %v1570 = vadd.f32 0.0, %v1569
        %v1571 = vpop.f32.mrb[0].mxu0
        %1572 = vdwg.mxu0
        %1576 = vrot.lane.b32.xlu0 %v1560, 16
        %v1577 = vpop.permute.xlu0 %1576
        %1578 = vrot.lane.b32.xlu0 %v1565, 16
        %v1579 = vpop.permute.xlu0 %1578
        %1580 = vrot.lane.b32.xlu0 %v1570, 16
        %v1581 = vpop.permute.xlu0 %1580
        %vm1585 = vcmask 195712
        %1586 = vst.msk [vmem:[#allocation3] sm:$0xff] %vm1585, %v1577
        %1587 = vst.msk [vmem:[#allocation3 + $0x8] sm:$0xff] %vm1585, %v1579
        %vm1588 = vcmask 189568
        %1589 = vst.msk [vmem:[#allocation3 + $0x10] sm:$0x3] %vm1588, %v1581
        %1590 = vrot.lane.b32.xlu0 %v830, 104
        %v1591 = vpop.permute.xlu0 %1590
        %1592 = vrot.lane.b32.xlu0 %v833, 104
        %v1593 = vpop.permute.xlu0 %1592
        %1594 = vrot.lane.b32.xlu0 %v838, 104
        %v1595 = vpop.permute.xlu0 %1594
        %1596 = vrot.lane.b32.xlu0 %v830, 72
        %v1597 = vpop.permute.xlu0 %1596
        %1598 = vrot.lane.b32.xlu0 %v833, 72
        %v1599 = vpop.permute.xlu0 %1598
        %1600 = vrot.lane.b32.xlu0 %v838, 72
        %v1601 = vpop.permute.xlu0 %1600
        %v1602 = vsel %vm852, %v1591, 0
        %v1604 = vsel %vm852, %v1593, 0
        %v1606 = vsel %vm852, %v1595, 0
        %v1608 = vsel %vm852, %v1597, 0
        %v1610 = vsel %vm852, %v1599, 0
        %v1612 = vsel %vm852, %v1601, 0
        %1614 = vmatprep.subr.mxu0 0.0
        %1615 = vmatpush1.xpose.msra.mxu0 %v1608
        %1616 = vmatprep.subr.mxu0 0.0
        %1617 = vmatpush1.xpose.msra.mxu0 %v1610
        %1618 = vmatprep.subr.mxu0 0.0
        %1619 = vmatpush1.xpose.msra.mxu0 %v1612
        %1620 = vmatprep.subr.mxu0 0.0
        %1621 = vmatpush1.xpose.msra.mxu0 0.0
        %1622 = vmatprep.subr.mxu0 0.0
        %1623 = vmatpush1.xpose.msra.mxu0 0.0
        %1624 = vmatprep.subr.mxu0 0.0
        %1625 = vmatpush1.xpose.msra.mxu0 0.0
        %1626 = vmatprep.subr.mxu0 0.0
        %1627 = vmatpush1.xpose.msra.mxu0 0.0
        %1628 = vmatprep.subr.mxu0 0.0
        %1629 = vmatpush1.xpose.msra.mxu0 0.0
        %1630 = vmatprep.subr.mxu0 0.0
        %1631 = vmatpush1.xpose.msra.mxu0 0.0
        %1632 = vmatprep.subr.mxu0 0.0
        %1633 = vmatpush1.xpose.msra.mxu0 0.0
        %1634 = vmatprep.subr.mxu0 0.0
        %1635 = vmatpush1.xpose.msra.mxu0 0.0
        %1636 = vmatprep.subr.mxu0 0.0
        %1637 = vmatpush1.xpose.msra.mxu0 0.0
        %1638 = vmatprep.subr.mxu0 0.0
        %1639 = vmatpush1.xpose.msra.mxu0 0.0
        %1640 = vmatprep.subr.mxu0 0.0
        %1641 = vmatpush1.xpose.msra.mxu0 0.0
        %1642 = vmatprep.subr.mxu0 0.0
        %1643 = vmatpush1.xpose.msra.mxu0 0.0
        %1644 = vmatprep.subr.mxu0 0.0
        %1645 = vmatpush1.xpose.msra.mxu0 0.0
        %1646 = vmatprep.subr.mxu0 0.0
        %1647 = vmatpush1.xpose.msra.mxu0 0.0
        %1648 = vmatprep.subr.mxu0 0.0
        %1649 = vmatpush1.xpose.msra.mxu0 0.0
        %1650 = vmatprep.subr.mxu0 0.0
        %1651 = vmatpush1.xpose.msra.mxu0 0.0
        %1652 = vmatprep.subr.mxu0 0.0
        %1653 = vmatpush1.xpose.msra.mxu0 0.0
        %1654 = vmatprep.subr.mxu0 0.0
        %1655 = vmatpush1.xpose.msra.mxu0 0.0
        %1656 = vmatprep.subr.mxu0 0.0
        %1657 = vmatpush1.xpose.msra.mxu0 0.0
        %1658 = vmatprep.subr.mxu0 0.0
        %1659 = vmatpush1.xpose.msra.mxu0 0.0
        %1660 = vmatprep.subr.mxu0 0.0
        %1661 = vmatpush1.xpose.msra.mxu0 0.0
        %1662 = vmatprep.subr.mxu0 0.0
        %1663 = vmatpush1.xpose.msra.mxu0 0.0
        %1664 = vmatprep.subr.mxu0 0.0
        %1665 = vmatpush1.xpose.msra.mxu0 0.0
        %1666 = vmatprep.subr.mxu0 0.0
        %1667 = vmatpush1.xpose.msra.mxu0 0.0
        %1668 = vmatprep.subr.mxu0 0.0
        %1669 = vmatpush1.xpose.msra.mxu0 0.0
        %1670 = vmatprep.subr.mxu0 0.0
        %1671 = vmatpush1.xpose.msra.mxu0 0.0
        %1672 = vmatprep.subr.mxu0 0.0
        %1673 = vmatpush1.xpose.msra.mxu0 0.0
        %1674 = vmatprep.subr.mxu0 0.0
        %1675 = vmatpush1.xpose.msra.mxu0 0.0
        %1676 = vmatprep.subr.mxu0 0.0
        %1677 = vmatpush1.xpose.msra.mxu0 0.0
        %1678 = vmatprep.mubr.f32.mxu0 0.0
        %1679 = vmatmul.mubr.f32.gmra.mrb[0].mxu0 %v1602
        %v1680 = vpop.f32.mrb[0].mxu0
        %v1681 = vadd.f32 0.0, %v1680
        %v1682 = vpop.f32.mrb[0].mxu0
        %1683 = vmatprep.mubr.f32.mxu0 0.0
        %1684 = vmatmul.mubr.f32.gmra.mrb[0].mxu0 %v1604
        %v1685 = vpop.f32.mrb[0].mxu0
        %v1686 = vadd.f32 0.0, %v1685
        %v1687 = vpop.f32.mrb[0].mxu0
        %1688 = vmatprep.mubr.f32.mxu0 0.0
        %1689 = vmatmul.mubr.f32.gmra.mrb[0].mxu0 %v1606
        %v1690 = vpop.f32.mrb[0].mxu0
        %v1691 = vadd.f32 0.0, %v1690
        %v1692 = vpop.f32.mrb[0].mxu0
        %1693 = vdwg.mxu0
        %v1694 = vsel %vm945, %v1681, -inf
        %1695 = vmax.xlane.f32.xlu0 %v1694
        %v1696 = vpop.xlane.xlu0 %1695
        %v1697 = vsel %vm945, %v1686, -inf
        %1698 = vmax.xlane.f32.xlu0 %v1697
        %v1699 = vpop.xlane.xlu0 %1698
        %v1700 = vsel %vm952, %v1691, -inf
        %1701 = vmax.xlane.f32.xlu0 %v1700
        %v1702 = vpop.xlane.xlu0 %1701
        %v1703 = vsub.f32 %v1681, %v1696
        %v1704 = vsub.f32 %v1686, %v1699
        %v1705 = vsub.f32 %v1691, %v1702
        %v1706 = vmul.f32 %v1703, 1.442695
        %v1707 = vpow.pop %v1706
        %v1708 = vmul.f32 %v1704, 1.442695
        %v1709 = vpow.pop %v1708
        %v1710 = vmul.f32 %v1705, 1.442695
        %v1711 = vpow.pop %v1710
        %v1712 = vsel %vm945, %v1707, 0.0
        %1713 = vadd.xlane.f32.xlu0 %v1712
        %v1714 = vpop.xlane.xlu0 %1713
        %v1715 = vsel %vm945, %v1709, 0.0
        %1716 = vadd.xlane.f32.xlu0 %v1715
        %v1717 = vpop.xlane.xlu0 %1716
        %v1718 = vsel %vm952, %v1711, 0.0
        %1719 = vadd.xlane.f32.xlu0 %v1718
        %v1720 = vpop.xlane.xlu0 %1719
        %v1721 = vrcp.pop %v1714
        %v1722 = vmul.f32 %v1707, %v1721
        %v1723 = vrcp.pop %v1717
        %v1724 = vmul.f32 %v1709, %v1723
        %v1725 = vrcp.pop %v1720
        %v1726 = vmul.f32 %v1711, %v1725
        %1727 = vrot.lane.b32.xlu0 %v830, 40
        %v1728 = vpop.permute.xlu0 %1727
        %1729 = vrot.lane.b32.xlu0 %v833, 40
        %v1730 = vpop.permute.xlu0 %1729
        %1731 = vrot.lane.b32.xlu0 %v838, 40
        %v1732 = vpop.permute.xlu0 %1731
        %v1736 = vsel %vm945, %v1722, 0
        %v1739 = vsel %vm945, %v1724, 0
        %v1742 = vsel %vm945, %v1726, 0
        %v1744 = vsel %vm997, %v1732, 0
        %1746 = vmatprep.subr.mxu0 0.0
        %1747 = vmatpush1.msra.mxu0 %v1728
        %1748 = vmatprep.subr.mxu0 0.0
        %1749 = vmatpush1.msra.mxu0 %v1730
        %1750 = vmatprep.subr.mxu0 0.0
        %1751 = vmatpush1.msra.mxu0 %v1744
        %1752 = vmatprep.subr.mxu0 0.0
        %1753 = vmatpush1.msra.mxu0 0.0
        %1754 = vmatprep.subr.mxu0 0.0
        %1755 = vmatpush1.msra.mxu0 0.0
        %1756 = vmatprep.subr.mxu0 0.0
        %1757 = vmatpush1.msra.mxu0 0.0
        %1758 = vmatprep.subr.mxu0 0.0
        %1759 = vmatpush1.msra.mxu0 0.0
        %1760 = vmatprep.subr.mxu0 0.0
        %1761 = vmatpush1.msra.mxu0 0.0
        %1762 = vmatprep.subr.mxu0 0.0
        %1763 = vmatpush1.msra.mxu0 0.0
        %1764 = vmatprep.subr.mxu0 0.0
        %1765 = vmatpush1.msra.mxu0 0.0
        %1766 = vmatprep.subr.mxu0 0.0
        %1767 = vmatpush1.msra.mxu0 0.0
        %1768 = vmatprep.subr.mxu0 0.0
        %1769 = vmatpush1.msra.mxu0 0.0
        %1770 = vmatprep.subr.mxu0 0.0
        %1771 = vmatpush1.msra.mxu0 0.0
        %1772 = vmatprep.subr.mxu0 0.0
        %1773 = vmatpush1.msra.mxu0 0.0
        %1774 = vmatprep.subr.mxu0 0.0
        %1775 = vmatpush1.msra.mxu0 0.0
        %1776 = vmatprep.subr.mxu0 0.0
        %1777 = vmatpush1.msra.mxu0 0.0
        %1778 = vmatprep.subr.mxu0 0.0
        %1779 = vmatpush1.msra.mxu0 0.0
        %1780 = vmatprep.subr.mxu0 0.0
        %1781 = vmatpush1.msra.mxu0 0.0
        %1782 = vmatprep.subr.mxu0 0.0
        %1783 = vmatpush1.msra.mxu0 0.0
        %1784 = vmatprep.subr.mxu0 0.0
        %1785 = vmatpush1.msra.mxu0 0.0
        %1786 = vmatprep.subr.mxu0 0.0
        %1787 = vmatpush1.msra.mxu0 0.0
        %1788 = vmatprep.subr.mxu0 0.0
        %1789 = vmatpush1.msra.mxu0 0.0
        %1790 = vmatprep.subr.mxu0 0.0
        %1791 = vmatpush1.msra.mxu0 0.0
        %1792 = vmatprep.subr.mxu0 0.0
        %1793 = vmatpush1.msra.mxu0 0.0
        %1794 = vmatprep.subr.mxu0 0.0
        %1795 = vmatpush1.msra.mxu0 0.0
        %1796 = vmatprep.subr.mxu0 0.0
        %1797 = vmatpush1.msra.mxu0 0.0
        %1798 = vmatprep.subr.mxu0 0.0
        %1799 = vmatpush1.msra.mxu0 0.0
        %1800 = vmatprep.subr.mxu0 0.0
        %1801 = vmatpush1.msra.mxu0 0.0
        %1802 = vmatprep.subr.mxu0 0.0
        %1803 = vmatpush1.msra.mxu0 0.0
        %1804 = vmatprep.subr.mxu0 0.0
        %1805 = vmatpush1.msra.mxu0 0.0
        %1806 = vmatprep.subr.mxu0 0.0
        %1807 = vmatpush1.msra.mxu0 0.0
        %1808 = vmatprep.subr.mxu0 0.0
        %1809 = vmatpush1.msra.mxu0 0.0
        %1810 = vmatprep.mubr.f32.mxu0 0.0
        %1811 = vmatmul.mubr.f32.gmra.mrb[0].mxu0 %v1736
        %v1812 = vpop.f32.mrb[0].mxu0
        %v1813 = vadd.f32 0.0, %v1812
        %v1814 = vpop.f32.mrb[0].mxu0
        %1815 = vmatprep.mubr.f32.mxu0 0.0
        %1816 = vmatmul.mubr.f32.gmra.mrb[0].mxu0 %v1739
        %v1817 = vpop.f32.mrb[0].mxu0
        %v1818 = vadd.f32 0.0, %v1817
        %v1819 = vpop.f32.mrb[0].mxu0
        %1820 = vmatprep.mubr.f32.mxu0 0.0
        %1821 = vmatmul.mubr.f32.gmra.mrb[0].mxu0 %v1742
        %v1822 = vpop.f32.mrb[0].mxu0
        %v1823 = vadd.f32 0.0, %v1822
        %v1824 = vpop.f32.mrb[0].mxu0
        %1825 = vdwg.mxu0
        %1829 = vrot.lane.b32.xlu0 %v1813, 24
        %v1830 = vpop.permute.xlu0 %1829
        %1831 = vrot.lane.b32.xlu0 %v1818, 24
        %v1832 = vpop.permute.xlu0 %1831
        %1833 = vrot.lane.b32.xlu0 %v1823, 24
        %v1834 = vpop.permute.xlu0 %1833
        %vm1838 = vcmask 261312
        %1839 = vst.msk [vmem:[#allocation3] sm:$0xff] %vm1838, %v1830
        %1840 = vst.msk [vmem:[#allocation3 + $0x8] sm:$0xff] %vm1838, %v1832
        %vm1841 = vcmask 255168
        %1842 = vst.msk [vmem:[#allocation3 + $0x10] sm:$0x3] %vm1841, %v1834
        %v1843 = vld [vmem:[#allocation3] sm:$0xff]
        %v1844 = vld [vmem:[#allocation3 + $0x8] sm:$0xff]
        %v1845 = vld [vmem:[#allocation3 + $0x10] sm:$0x3]
        %s1846 = scalar_lea.vmem [#allocation6], 256
        %v1847 = vld [vmem:[%s1846] sm:$0xf]
        %v1848 = vld [vmem:[%s1846 + $0x8] sm:$0xf]
        %v1849 = vld [vmem:[%s1846 + $0x10] sm:$0xf]
        %v1850 = vld [vmem:[%s1846 + $0x18] sm:$0xf]
        %v1851 = vpack.c.bf16 %v1844, %v1843
        %v1852 = vpack.c.bf16 %v1845, %v1845
        %v1857 = vunpack.c.l.b16 %v1847
        %v1858 = vunpack.c.l.b16 %v1848
        %v1859 = vunpack.c.l.b16 %v1849
        %v1860 = vunpack.c.l.b16 %v1850
        %v1861 = vpack.c.b16 %v1858, %v1857
        %v1862 = vpack.c.b16 %v1860, %v1859
        %v1866 = vsel %vm247, %v1851, 0
        %v1869 = vsel %vm247, %v1852, 0
        %1871 = vmatprep.subr.bf16.mxu0 0
        %1872 = vmatpush1.bf16.msra.mxu0 %v1861
        %1873 = vmatprep.subr.bf16.mxu0 0
        %1874 = vmatpush1.bf16.msra.mxu0 %v1862
        %1875 = vmatprep.subr.bf16.mxu0 0
        %1876 = vmatpush1.bf16.msra.mxu0 0
        %1877 = vmatprep.subr.bf16.mxu0 0
        %1878 = vmatpush1.bf16.msra.mxu0 0
        %1879 = vmatprep.subr.bf16.mxu0 0
        %1880 = vmatpush1.bf16.msra.mxu0 0
        %1881 = vmatprep.subr.bf16.mxu0 0
        %1882 = vmatpush1.bf16.msra.mxu0 0
        %1883 = vmatprep.subr.bf16.mxu0 0
        %1884 = vmatpush1.bf16.msra.mxu0 0
        %1885 = vmatprep.subr.bf16.mxu0 0
        %1886 = vmatpush1.bf16.msra.mxu0 0
        %1887 = vmatprep.subr.bf16.mxu0 0
        %1888 = vmatpush1.bf16.msra.mxu0 0
        %1889 = vmatprep.subr.bf16.mxu0 0
        %1890 = vmatpush1.bf16.msra.mxu0 0
        %1891 = vmatprep.subr.bf16.mxu0 0
        %1892 = vmatpush1.bf16.msra.mxu0 0
        %1893 = vmatprep.subr.bf16.mxu0 0
        %1894 = vmatpush1.bf16.msra.mxu0 0
        %1895 = vmatprep.subr.bf16.mxu0 0
        %1896 = vmatpush1.bf16.msra.mxu0 0
        %1897 = vmatprep.subr.bf16.mxu0 0
        %1898 = vmatpush1.bf16.msra.mxu0 0
        %1899 = vmatprep.subr.bf16.mxu0 0
        %1900 = vmatpush1.bf16.msra.mxu0 0
        %1901 = vmatprep.subr.bf16.mxu0 0
        %1902 = vmatpush1.bf16.msra.mxu0 0
        %1903 = vmatprep.mubr.bf16.mxu0 0
        %1904 = vmatmul.mubr.bf16.gmra.mrb[0].mxu0 %v1866
        %v1905 = vpop.f32.mrb[0].mxu0
        %v1906 = vadd.f32 0.0, %v1905
        %v1907 = vpop.f32.mrb[0].mxu0
        %v1908 = vpop.f32.mrb[0].mxu0
        %v1909 = vadd.f32 0.0, %v1908
        %v1910 = vpop.f32.mrb[0].mxu0
        %1911 = vmatprep.mubr.bf16.mxu0 0
        %1912 = vmatmul.mubr.bf16.gmra.mrb[0].mxu0 %v1869
        %v1913 = vpop.f32.mrb[0].mxu0
        %v1914 = vadd.f32 0.0, %v1913
        %v1915 = vpop.f32.mrb[0].mxu0
        %v1916 = vpop.f32.mrb[0].mxu0
        %v1917 = vpop.f32.mrb[0].mxu0
        %1918 = vdwg.mxu0
        %v1919 = vadd.f32 %v717, %v1906
        %v1920 = vadd.f32 %v718, %v1909
        %v1921 = vadd.f32 %v719, %v1914
        %v1922 = vld [vmem:[%s3 + $0x3] ss:$0 sm:$0xff]
        %v1923 = vadd.f32 %v1919, %v1922
        %v1924 = vadd.f32 %v1920, %v1922
        %v1925 = vadd.f32 %v1921, %v1922
        %v1926 = vsel %vm247, %v1923, 0.0
        %1927 = vadd.xlane.f32.xlu0 %v1926
        %v1928 = vpop.xlane.xlu0 %1927
        %v1929 = vsel %vm247, %v1924, 0.0
        %1930 = vadd.xlane.f32.xlu0 %v1929
        %v1931 = vpop.xlane.xlu0 %1930
        %v1932 = vsel %vm726, %v1925, 0.0
        %1933 = vadd.xlane.f32.xlu0 %v1932
        %v1934 = vpop.xlane.xlu0 %1933
        %v1935 = vmul.f32 %v1928, %v730
        %v1936 = vmul.f32 %v1931, %v730
        %v1937 = vmul.f32 %v1934, %v730
        %v1938 = vsub.f32 %v1923, %v1935
        %v1939 = vsub.f32 %v1924, %v1936
        %v1940 = vsub.f32 %v1925, %v1937
        %v1941 = vmul.f32 %v1938, %v1938
        %v1942 = vmul.f32 %v1939, %v1939
        %v1943 = vmul.f32 %v1940, %v1940
        %v1944 = vsel %vm247, %v1941, 0.0
        %1945 = vadd.xlane.f32.xlu0 %v1944
        %v1946 = vpop.xlane.xlu0 %1945
        %v1947 = vsel %vm247, %v1942, 0.0
        %1948 = vadd.xlane.f32.xlu0 %v1947
        %v1949 = vpop.xlane.xlu0 %1948
        %v1950 = vsel %vm726, %v1943, 0.0
        %1951 = vadd.xlane.f32.xlu0 %v1950
        %v1952 = vpop.xlane.xlu0 %1951
        %v1953 = vmul.f32 %v1946, %v730
        %v1954 = vmul.f32 %v1949, %v730
        %v1955 = vmul.f32 %v1952, %v730
        %v1956 = vadd.f32 %v1953, 1e-06
        %v1957 = vadd.f32 %v1954, 1e-06
        %v1958 = vadd.f32 %v1955, 1e-06
        %v1959 = vrsqrt.pop %v1956
        %v1960 = vrsqrt.pop %v1957
        %v1961 = vrsqrt.pop %v1958
        %v1962 = vmul.f32 %v1938, %v1959
        %v1963 = vmul.f32 %v1939, %v1960
        %v1964 = vmul.f32 %v1940, %v1961
        %v1965 = vld [vmem:[%s3 + $0x4] ss:$0 sm:$0xff]
        %v1966 = vmul.f32 %v1962, %v1965
        %v1967 = vmul.f32 %v1963, %v1965
        %v1968 = vmul.f32 %v1964, %v1965
        %v1969 = vld [vmem:[%s3 + $0x5] ss:$0 sm:$0xff]
        %v1970 = vadd.f32 %v1966, %v1969
        %v1971 = vadd.f32 %v1967, %v1969
        %v1972 = vadd.f32 %v1968, %v1969
        %s1973 = scalar_lea.vmem [#allocation6], 384
        %v1974 = vld [vmem:[%s1973] sm:$0xf]
        %v1975 = vld [vmem:[%s1973 + $0x8] sm:$0xf]
        %v1976 = vld [vmem:[%s1973 + $0x10] sm:$0xf]
        %v1977 = vld [vmem:[%s1973 + $0x18] sm:$0xf]
        %v1978 = vpack.c.bf16 %v1971, %v1970
        %v1979 = vpack.c.bf16 %v1972, %v1972
        %v1980 = vld [vmem:[%s3 + $0x6] ss:$0 sm:$0xff]
        %v1985 = vunpack.c.l.b16 %v1974
        %v1986 = vunpack.c.l.b16 %v1975
        %v1987 = vunpack.c.l.b16 %v1976
        %v1988 = vunpack.c.l.b16 %v1977
        %v1989 = vpack.c.b16 %v1986, %v1985
        %v1990 = vpack.c.b16 %v1988, %v1987
        %v1994 = vsel %vm247, %v1978, 0
        %v1997 = vsel %vm247, %v1979, 0
        %1999 = vmatprep.subr.bf16.mxu0 0
        %2000 = vmatpush1.bf16.msra.mxu0 %v1989
        %2001 = vmatprep.subr.bf16.mxu0 0
        %2002 = vmatpush1.bf16.msra.mxu0 %v1990
        %2003 = vmatprep.subr.bf16.mxu0 0
        %2004 = vmatpush1.bf16.msra.mxu0 0
        %2005 = vmatprep.subr.bf16.mxu0 0
        %2006 = vmatpush1.bf16.msra.mxu0 0
        %2007 = vmatprep.subr.bf16.mxu0 0
        %2008 = vmatpush1.bf16.msra.mxu0 0
        %2009 = vmatprep.subr.bf16.mxu0 0
        %2010 = vmatpush1.bf16.msra.mxu0 0
        %2011 = vmatprep.subr.bf16.mxu0 0
        %2012 = vmatpush1.bf16.msra.mxu0 0
        %2013 = vmatprep.subr.bf16.mxu0 0
        %2014 = vmatpush1.bf16.msra.mxu0 0
        %2015 = vmatprep.subr.bf16.mxu0 0
        %2016 = vmatpush1.bf16.msra.mxu0 0
        %2017 = vmatprep.subr.bf16.mxu0 0
        %2018 = vmatpush1.bf16.msra.mxu0 0
        %2019 = vmatprep.subr.bf16.mxu0 0
        %2020 = vmatpush1.bf16.msra.mxu0 0
        %2021 = vmatprep.subr.bf16.mxu0 0
        %2022 = vmatpush1.bf16.msra.mxu0 0
        %2023 = vmatprep.subr.bf16.mxu0 0
        %2024 = vmatpush1.bf16.msra.mxu0 0
        %2025 = vmatprep.subr.bf16.mxu0 0
        %2026 = vmatpush1.bf16.msra.mxu0 0
        %2027 = vmatprep.subr.bf16.mxu0 0
        %2028 = vmatpush1.bf16.msra.mxu0 0
        %2029 = vmatprep.subr.bf16.mxu0 0
        %2030 = vmatpush1.bf16.msra.mxu0 0
        %2031 = vmatprep.mubr.bf16.mxu0 0
        %2032 = vmatmul.mubr.bf16.gmra.mrb[0].mxu0 %v1994
        %v2033 = vpop.f32.mrb[0].mxu0
        %v2034 = vadd.f32 %v1980, %v2033
        %v2035 = vpop.f32.mrb[0].mxu0
        %v2036 = vpop.f32.mrb[0].mxu0
        %v2037 = vadd.f32 %v1980, %v2036
        %v2038 = vpop.f32.mrb[0].mxu0
        %2039 = vmatprep.mubr.bf16.mxu0 0
        %2040 = vmatmul.mubr.bf16.gmra.mrb[0].mxu0 %v1997
        %v2041 = vpop.f32.mrb[0].mxu0
        %v2042 = vadd.f32 %v1980, %v2041
        %v2043 = vpop.f32.mrb[0].mxu0
        %v2044 = vpop.f32.mrb[0].mxu0
        %v2045 = vpop.f32.mrb[0].mxu0
        %2046 = vdwg.mxu0
        %v2047 = vmul.f32 %v2034, %v2034
        %v2048 = vmul.f32 %v2037, %v2037
        %v2049 = vmul.f32 %v2042, %v2042
        %v2050 = vmul.f32 %v2034, %v2047
        %v2051 = vmul.f32 %v2037, %v2048
        %v2052 = vmul.f32 %v2042, %v2049
        %v2053 = vmul.f32 %v2050, 0.044715
        %v2054 = vmul.f32 %v2051, 0.044715
        %v2055 = vmul.f32 %v2052, 0.044715
        %v2056 = vadd.f32 %v2034, %v2053
        %v2057 = vadd.f32 %v2037, %v2054
        %v2058 = vadd.f32 %v2042, %v2055
        %v2059 = vmul.f32 %v2056, 0.7978846
        %v2060 = vmul.f32 %v2057, 0.7978846
        %v2061 = vmul.f32 %v2058, 0.7978846
        %v2062 = vtanh.pop %v2059
        %v2063 = vtanh.pop %v2060
        %v2064 = vtanh.pop %v2061
        %v2065 = vadd.f32 %v2062, 1.0
        %v2066 = vadd.f32 %v2063, 1.0
        %v2067 = vadd.f32 %v2064, 1.0
        %v2068 = vmul.f32 %v2065, 0.5
        %v2069 = vmul.f32 %v2066, 0.5
        %v2070 = vmul.f32 %v2067, 0.5
        %v2071 = vmul.f32 %v2034, %v2068
        %v2072 = vmul.f32 %v2037, %v2069
        %v2073 = vmul.f32 %v2042, %v2070
        %s2074 = scalar_lea.vmem [#allocation6], 512
        %v2075 = vld [vmem:[%s2074] sm:$0xf]
        %v2076 = vld [vmem:[%s2074 + $0x8] sm:$0xf]
        %v2077 = vld [vmem:[%s2074 + $0x10] sm:$0xf]
        %v2078 = vld [vmem:[%s2074 + $0x18] sm:$0xf]
        %v2079 = vld [vmem:[%s2074 + $0x20] sm:$0xf]
        %v2080 = vld [vmem:[%s2074 + $0x28] sm:$0xf]
        %v2081 = vld [vmem:[%s2074 + $0x30] sm:$0xf]
        %v2082 = vld [vmem:[%s2074 + $0x38] sm:$0xf]
        %v2083 = vld [vmem:[%s2074 + $0x40] sm:$0xf]
        %v2084 = vld [vmem:[%s2074 + $0x48] sm:$0xf]
        %v2085 = vld [vmem:[%s2074 + $0x50] sm:$0xf]
        %v2086 = vld [vmem:[%s2074 + $0x58] sm:$0xf]
        %v2087 = vld [vmem:[%s2074 + $0x60] sm:$0xf]
        %v2088 = vld [vmem:[%s2074 + $0x68] sm:$0xf]
        %v2089 = vld [vmem:[%s2074 + $0x70] sm:$0xf]
        %v2090 = vld [vmem:[%s2074 + $0x78] sm:$0xf]
        %v2091 = vpack.c.bf16 %v2072, %v2071
        %v2092 = vpack.c.bf16 %v2073, %v2073
        %v2109 = vunpack.c.l.b16 %v2075
        %v2110 = vunpack.c.l.b16 %v2076
        %v2111 = vunpack.c.l.b16 %v2077
        %v2112 = vunpack.c.l.b16 %v2078
        %v2113 = vunpack.c.l.b16 %v2079
        %v2114 = vunpack.c.l.b16 %v2080
        %v2115 = vunpack.c.l.b16 %v2081
        %v2116 = vunpack.c.l.b16 %v2082
        %v2117 = vunpack.c.l.b16 %v2083
        %v2118 = vunpack.c.l.b16 %v2084
        %v2119 = vunpack.c.l.b16 %v2085
        %v2120 = vunpack.c.l.b16 %v2086
        %v2121 = vunpack.c.l.b16 %v2087
        %v2122 = vunpack.c.l.b16 %v2088
        %v2123 = vunpack.c.l.b16 %v2089
        %v2124 = vunpack.c.l.b16 %v2090
        %v2125 = vpack.c.b16 %v2110, %v2109
        %v2126 = vpack.c.b16 %v2112, %v2111
        %v2127 = vpack.c.b16 %v2114, %v2113
        %v2128 = vpack.c.b16 %v2116, %v2115
        %v2129 = vpack.c.b16 %v2118, %v2117
        %v2130 = vpack.c.b16 %v2120, %v2119
        %v2131 = vpack.c.b16 %v2122, %v2121
        %v2132 = vpack.c.b16 %v2124, %v2123
        %2141 = vmatprep.subr.bf16.mxu0 0
        %2142 = vmatpush1.bf16.msra.mxu0 %v2125
        %2143 = vmatprep.subr.bf16.mxu0 0
        %2144 = vmatpush1.bf16.msra.mxu0 %v2126
        %2145 = vmatprep.subr.bf16.mxu0 0
        %2146 = vmatpush1.bf16.msra.mxu0 %v2127
        %2147 = vmatprep.subr.bf16.mxu0 0
        %2148 = vmatpush1.bf16.msra.mxu0 %v2128
        %2149 = vmatprep.subr.bf16.mxu0 0
        %2150 = vmatpush1.bf16.msra.mxu0 %v2129
        %2151 = vmatprep.subr.bf16.mxu0 0
        %2152 = vmatpush1.bf16.msra.mxu0 %v2130
        %2153 = vmatprep.subr.bf16.mxu0 0
        %2154 = vmatpush1.bf16.msra.mxu0 %v2131
        %2155 = vmatprep.subr.bf16.mxu0 0
        %2156 = vmatpush1.bf16.msra.mxu0 %v2132
        %2157 = vmatprep.subr.bf16.mxu0 0
        %2158 = vmatpush1.bf16.msra.mxu0 0
        %2159 = vmatprep.subr.bf16.mxu0 0
        %2160 = vmatpush1.bf16.msra.mxu0 0
        %2161 = vmatprep.subr.bf16.mxu0 0
        %2162 = vmatpush1.bf16.msra.mxu0 0
        %2163 = vmatprep.subr.bf16.mxu0 0
        %2164 = vmatpush1.bf16.msra.mxu0 0
        %2165 = vmatprep.subr.bf16.mxu0 0
        %2166 = vmatpush1.bf16.msra.mxu0 0
        %2167 = vmatprep.subr.bf16.mxu0 0
        %2168 = vmatpush1.bf16.msra.mxu0 0
        %2169 = vmatprep.subr.bf16.mxu0 0
        %2170 = vmatpush1.bf16.msra.mxu0 0
        %2171 = vmatprep.subr.bf16.mxu0 0
        %2172 = vmatpush1.bf16.msra.mxu0 0
        %2173 = vmatprep.mubr.bf16.mxu0 0
        %2174 = vmatmul.mubr.bf16.gmra.mrb[0].mxu0 %v2091
        %v2175 = vpop.f32.mrb[0].mxu0
        %v2176 = vadd.f32 0.0, %v2175
        %v2177 = vpop.f32.mrb[0].mxu0
        %v2178 = vpop.f32.mrb[0].mxu0
        %v2179 = vadd.f32 0.0, %v2178
        %v2180 = vpop.f32.mrb[0].mxu0
        %2181 = vmatprep.mubr.bf16.mxu0 0
        %2182 = vmatmul.mubr.bf16.gmra.mrb[0].mxu0 %v2092
        %v2183 = vpop.f32.mrb[0].mxu0
        %v2184 = vadd.f32 0.0, %v2183
        %v2185 = vpop.f32.mrb[0].mxu0
        %v2186 = vpop.f32.mrb[0].mxu0
        %v2187 = vpop.f32.mrb[0].mxu0
        %2188 = vdwg.mxu0
        %v2189 = vadd.f32 %v1923, %v2176
        %v2190 = vadd.f32 %v1924, %v2179
        %v2191 = vadd.f32 %v1925, %v2184
        %v2192 = vld [vmem:[%s3 + $0x7] ss:$0 sm:$0xff]
        %v2193 = vadd.f32 %v2189, %v2192
        %v2194 = vadd.f32 %v2190, %v2192
        %v2195 = vadd.f32 %v2191, %v2192
        %v2196 = vsel %vm247, %v2193, 0.0
        %2197 = vadd.xlane.f32.xlu0 %v2196
        %v2198 = vpop.xlane.xlu0 %2197
        %v2199 = vsel %vm247, %v2194, 0.0
        %2200 = vadd.xlane.f32.xlu0 %v2199
        %v2201 = vpop.xlane.xlu0 %2200
        %v2202 = vsel %vm726, %v2195, 0.0
        %2203 = vadd.xlane.f32.xlu0 %v2202
        %v2204 = vpop.xlane.xlu0 %2203
        %v2205 = vmul.f32 %v2198, %v730
        %v2206 = vmul.f32 %v2201, %v730
        %v2207 = vmul.f32 %v2204, %v730
        %v2208 = vsub.f32 %v2193, %v2205
        %v2209 = vsub.f32 %v2194, %v2206
        %v2210 = vsub.f32 %v2195, %v2207
        %v2211 = vmul.f32 %v2208, %v2208
        %v2212 = vmul.f32 %v2209, %v2209
        %v2213 = vmul.f32 %v2210, %v2210
        %v2214 = vsel %vm247, %v2211, 0.0
        %2215 = vadd.xlane.f32.xlu0 %v2214
        %v2216 = vpop.xlane.xlu0 %2215
        %v2217 = vsel %vm247, %v2212, 0.0
        %2218 = vadd.xlane.f32.xlu0 %v2217
        %v2219 = vpop.xlane.xlu0 %2218
        %v2220 = vsel %vm726, %v2213, 0.0
        %2221 = vadd.xlane.f32.xlu0 %v2220
        %v2222 = vpop.xlane.xlu0 %2221
        %v2223 = vmul.f32 %v2216, %v730
        %v2224 = vmul.f32 %v2219, %v730
        %v2225 = vmul.f32 %v2222, %v730
        %v2226 = vadd.f32 %v2223, 1e-06
        %v2227 = vadd.f32 %v2224, 1e-06
        %v2228 = vadd.f32 %v2225, 1e-06
        %v2229 = vrsqrt.pop %v2226
        %v2230 = vrsqrt.pop %v2227
        %v2231 = vrsqrt.pop %v2228
        %v2232 = vmul.f32 %v2208, %v2229
        %v2233 = vmul.f32 %v2209, %v2230
        %v2234 = vmul.f32 %v2210, %v2231
        %v2235 = vld [vmem:[%s3 + $0x10] ss:$0 sm:$0xff]
        %v2236 = vmul.f32 %v2232, %v2235
        %v2237 = vmul.f32 %v2233, %v2235
        %v2238 = vmul.f32 %v2234, %v2235
        %v2239 = vld [vmem:[%s3 + $0x11] ss:$0 sm:$0xff]
        %v2240 = vadd.f32 %v2236, %v2239
        %v2241 = vadd.f32 %v2237, %v2239
        %v2242 = vadd.f32 %v2238, %v2239
        %s2243 = scalar_lea.vmem [#allocation6], 640
        %v2244 = vld [vmem:[%s2243] sm:$0xf]
        %v2245 = vld [vmem:[%s2243 + $0x8] sm:$0xf]
        %v2246 = vld [vmem:[%s2243 + $0x10] sm:$0xf]
        %v2247 = vld [vmem:[%s2243 + $0x18] sm:$0xf]
        %v2248 = vpack.c.bf16 %v2241, %v2240
        %v2249 = vpack.c.bf16 %v2242, %v2242
        %v2250 = vld [vmem:[%s3 + $0x12] ss:$0 sm:$0xff]
        %v2255 = vunpack.c.l.b16 %v2244
        %v2256 = vunpack.c.l.b16 %v2245
        %v2257 = vunpack.c.l.b16 %v2246
        %v2258 = vunpack.c.l.b16 %v2247
        %v2259 = vpack.c.b16 %v2256, %v2255
        %v2260 = vpack.c.b16 %v2258, %v2257
        %v2264 = vsel %vm247, %v2248, 0
        %v2267 = vsel %vm247, %v2249, 0
        %2269 = vmatprep.subr.bf16.mxu0 0
        %2270 = vmatpush1.bf16.msra.mxu0 %v2259
        %2271 = vmatprep.subr.bf16.mxu0 0
        %2272 = vmatpush1.bf16.msra.mxu0 %v2260
        %2273 = vmatprep.subr.bf16.mxu0 0
        %2274 = vmatpush1.bf16.msra.mxu0 0
        %2275 = vmatprep.subr.bf16.mxu0 0
        %2276 = vmatpush1.bf16.msra.mxu0 0
        %2277 = vmatprep.subr.bf16.mxu0 0
        %2278 = vmatpush1.bf16.msra.mxu0 0
        %2279 = vmatprep.subr.bf16.mxu0 0
        %2280 = vmatpush1.bf16.msra.mxu0 0
        %2281 = vmatprep.subr.bf16.mxu0 0
        %2282 = vmatpush1.bf16.msra.mxu0 0
        %2283 = vmatprep.subr.bf16.mxu0 0
        %2284 = vmatpush1.bf16.msra.mxu0 0
        %2285 = vmatprep.subr.bf16.mxu0 0
        %2286 = vmatpush1.bf16.msra.mxu0 0
        %2287 = vmatprep.subr.bf16.mxu0 0
        %2288 = vmatpush1.bf16.msra.mxu0 0
        %2289 = vmatprep.subr.bf16.mxu0 0
        %2290 = vmatpush1.bf16.msra.mxu0 0
        %2291 = vmatprep.subr.bf16.mxu0 0
        %2292 = vmatpush1.bf16.msra.mxu0 0
        %2293 = vmatprep.subr.bf16.mxu0 0
        %2294 = vmatpush1.bf16.msra.mxu0 0
        %2295 = vmatprep.subr.bf16.mxu0 0
        %2296 = vmatpush1.bf16.msra.mxu0 0
        %2297 = vmatprep.subr.bf16.mxu0 0
        %2298 = vmatpush1.bf16.msra.mxu0 0
        %2299 = vmatprep.subr.bf16.mxu0 0
        %2300 = vmatpush1.bf16.msra.mxu0 0
        %2301 = vmatprep.mubr.bf16.mxu0 0
        %2302 = vmatmul.mubr.bf16.gmra.mrb[0].mxu0 %v2264
        %v2303 = vpop.f32.mrb[0].mxu0
        %v2304 = vadd.f32 %v2250, %v2303
        %v2305 = vpop.f32.mrb[0].mxu0
        %v2306 = vpop.f32.mrb[0].mxu0
        %v2307 = vadd.f32 %v2250, %v2306
        %v2308 = vpop.f32.mrb[0].mxu0
        %2309 = vmatprep.mubr.bf16.mxu0 0
        %2310 = vmatmul.mubr.bf16.gmra.mrb[0].mxu0 %v2267
        %v2311 = vpop.f32.mrb[0].mxu0
        %v2312 = vadd.f32 %v2250, %v2311
        %v2313 = vpop.f32.mrb[0].mxu0
        %v2314 = vpop.f32.mrb[0].mxu0
        %v2315 = vpop.f32.mrb[0].mxu0
        %2316 = vdwg.mxu0
        %2320 = vrot.lane.b32.xlu0 %v2304, 96
        %v2321 = vpop.permute.xlu0 %2320
        %2322 = vrot.lane.b32.xlu0 %v2307, 96
        %v2323 = vpop.permute.xlu0 %2322
        %2324 = vrot.lane.b32.xlu0 %v2312, 96
        %v2325 = vpop.permute.xlu0 %2324
        %v2326 = vsel %vm852, %v2304, 0
        %v2328 = vsel %vm852, %v2307, 0
        %v2330 = vsel %vm852, %v2312, 0
        %v2332 = vsel %vm852, %v2321, 0
        %v2334 = vsel %vm852, %v2323, 0
        %v2336 = vsel %vm852, %v2325, 0
        %2338 = vmatprep.subr.mxu0 0.0
        %2339 = vmatpush1.xpose.msra.mxu0 %v2332
        %2340 = vmatprep.subr.mxu0 0.0
        %2341 = vmatpush1.xpose.msra.mxu0 %v2334
        %2342 = vmatprep.subr.mxu0 0.0
        %2343 = vmatpush1.xpose.msra.mxu0 %v2336
        %2344 = vmatprep.subr.mxu0 0.0
        %2345 = vmatpush1.xpose.msra.mxu0 0.0
        %2346 = vmatprep.subr.mxu0 0.0
        %2347 = vmatpush1.xpose.msra.mxu0 0.0
        %2348 = vmatprep.subr.mxu0 0.0
        %2349 = vmatpush1.xpose.msra.mxu0 0.0
        %2350 = vmatprep.subr.mxu0 0.0
        %2351 = vmatpush1.xpose.msra.mxu0 0.0
        %2352 = vmatprep.subr.mxu0 0.0
        %2353 = vmatpush1.xpose.msra.mxu0 0.0
        %2354 = vmatprep.subr.mxu0 0.0
        %2355 = vmatpush1.xpose.msra.mxu0 0.0
        %2356 = vmatprep.subr.mxu0 0.0
        %2357 = vmatpush1.xpose.msra.mxu0 0.0
        %2358 = vmatprep.subr.mxu0 0.0
        %2359 = vmatpush1.xpose.msra.mxu0 0.0
        %2360 = vmatprep.subr.mxu0 0.0
        %2361 = vmatpush1.xpose.msra.mxu0 0.0
        %2362 = vmatprep.subr.mxu0 0.0
        %2363 = vmatpush1.xpose.msra.mxu0 0.0
        %2364 = vmatprep.subr.mxu0 0.0
        %2365 = vmatpush1.xpose.msra.mxu0 0.0
        %2366 = vmatprep.subr.mxu0 0.0
        %2367 = vmatpush1.xpose.msra.mxu0 0.0
        %2368 = vmatprep.subr.mxu0 0.0
        %2369 = vmatpush1.xpose.msra.mxu0 0.0
        %2370 = vmatprep.subr.mxu0 0.0
        %2371 = vmatpush1.xpose.msra.mxu0 0.0
        %2372 = vmatprep.subr.mxu0 0.0
        %2373 = vmatpush1.xpose.msra.mxu0 0.0
        %2374 = vmatprep.subr.mxu0 0.0
        %2375 = vmatpush1.xpose.msra.mxu0 0.0
        %2376 = vmatprep.subr.mxu0 0.0
        %2377 = vmatpush1.xpose.msra.mxu0 0.0
        %2378 = vmatprep.subr.mxu0 0.0
        %2379 = vmatpush1.xpose.msra.mxu0 0.0
        %2380 = vmatprep.subr.mxu0 0.0
        %2381 = vmatpush1.xpose.msra.mxu0 0.0
        %2382 = vmatprep.subr.mxu0 0.0
        %2383 = vmatpush1.xpose.msra.mxu0 0.0
        %2384 = vmatprep.subr.mxu0 0.0
        %2385 = vmatpush1.xpose.msra.mxu0 0.0
        %2386 = vmatprep.subr.mxu0 0.0
        %2387 = vmatpush1.xpose.msra.mxu0 0.0
        %2388 = vmatprep.subr.mxu0 0.0
        %2389 = vmatpush1.xpose.msra.mxu0 0.0
        %2390 = vmatprep.subr.mxu0 0.0
        %2391 = vmatpush1.xpose.msra.mxu0 0.0
        %2392 = vmatprep.subr.mxu0 0.0
        %2393 = vmatpush1.xpose.msra.mxu0 0.0
        %2394 = vmatprep.subr.mxu0 0.0
        %2395 = vmatpush1.xpose.msra.mxu0 0.0
        %2396 = vmatprep.subr.mxu0 0.0
        %2397 = vmatpush1.xpose.msra.mxu0 0.0
        %2398 = vmatprep.subr.mxu0 0.0
        %2399 = vmatpush1.xpose.msra.mxu0 0.0
        %2400 = vmatprep.subr.mxu0 0.0
        %2401 = vmatpush1.xpose.msra.mxu0 0.0
        %2402 = vmatprep.mubr.f32.mxu0 0.0
        %2403 = vmatmul.mubr.f32.gmra.mrb[0].mxu0 %v2326
        %v2404 = vpop.f32.mrb[0].mxu0
        %v2405 = vadd.f32 0.0, %v2404
        %v2406 = vpop.f32.mrb[0].mxu0
        %2407 = vmatprep.mubr.f32.mxu0 0.0
        %2408 = vmatmul.mubr.f32.gmra.mrb[0].mxu0 %v2328
        %v2409 = vpop.f32.mrb[0].mxu0
        %v2410 = vadd.f32 0.0, %v2409
        %v2411 = vpop.f32.mrb[0].mxu0
        %2412 = vmatprep.mubr.f32.mxu0 0.0
        %2413 = vmatmul.mubr.f32.gmra.mrb[0].mxu0 %v2330
        %v2414 = vpop.f32.mrb[0].mxu0
        %v2415 = vadd.f32 0.0, %v2414
        %v2416 = vpop.f32.mrb[0].mxu0
        %2417 = vdwg.mxu0
        %v2418 = vsel %vm945, %v2405, -inf
        %2419 = vmax.xlane.f32.xlu0 %v2418
        %v2420 = vpop.xlane.xlu0 %2419
        %v2421 = vsel %vm945, %v2410, -inf
        %2422 = vmax.xlane.f32.xlu0 %v2421
        %v2423 = vpop.xlane.xlu0 %2422
        %v2424 = vsel %vm952, %v2415, -inf
        %2425 = vmax.xlane.f32.xlu0 %v2424
        %v2426 = vpop.xlane.xlu0 %2425
        %v2427 = vsub.f32 %v2405, %v2420
        %v2428 = vsub.f32 %v2410, %v2423
        %v2429 = vsub.f32 %v2415, %v2426
        %v2430 = vmul.f32 %v2427, 1.442695
        %v2431 = vpow.pop %v2430
        %v2432 = vmul.f32 %v2428, 1.442695
        %v2433 = vpow.pop %v2432
        %v2434 = vmul.f32 %v2429, 1.442695
        %v2435 = vpow.pop %v2434
        %v2436 = vsel %vm945, %v2431, 0.0
        %2437 = vadd.xlane.f32.xlu0 %v2436
        %v2438 = vpop.xlane.xlu0 %2437
        %v2439 = vsel %vm945, %v2433, 0.0
        %2440 = vadd.xlane.f32.xlu0 %v2439
        %v2441 = vpop.xlane.xlu0 %2440
        %v2442 = vsel %vm952, %v2435, 0.0
        %2443 = vadd.xlane.f32.xlu0 %v2442
        %v2444 = vpop.xlane.xlu0 %2443
        %v2445 = vrcp.pop %v2438
        %v2446 = vmul.f32 %v2431, %v2445
        %v2447 = vrcp.pop %v2441
        %v2448 = vmul.f32 %v2433, %v2447
        %v2449 = vrcp.pop %v2444
        %v2450 = vmul.f32 %v2435, %v2449
        %2451 = vrot.lane.b32.xlu0 %v2304, 64
        %v2452 = vpop.permute.xlu0 %2451
        %2453 = vrot.lane.b32.xlu0 %v2307, 64
        %v2454 = vpop.permute.xlu0 %2453
        %2455 = vrot.lane.b32.xlu0 %v2312, 64
        %v2456 = vpop.permute.xlu0 %2455
        %v2460 = vsel %vm945, %v2446, 0
        %v2463 = vsel %vm945, %v2448, 0
        %v2466 = vsel %vm945, %v2450, 0
        %v2468 = vsel %vm997, %v2456, 0
        %2470 = vmatprep.subr.mxu0 0.0
        %2471 = vmatpush1.msra.mxu0 %v2452
        %2472 = vmatprep.subr.mxu0 0.0
        %2473 = vmatpush1.msra.mxu0 %v2454
        %2474 = vmatprep.subr.mxu0 0.0
        %2475 = vmatpush1.msra.mxu0 %v2468
        %2476 = vmatprep.subr.mxu0 0.0
        %2477 = vmatpush1.msra.mxu0 0.0
        %2478 = vmatprep.subr.mxu0 0.0
        %2479 = vmatpush1.msra.mxu0 0.0
        %2480 = vmatprep.subr.mxu0 0.0
        %2481 = vmatpush1.msra.mxu0 0.0
        %2482 = vmatprep.subr.mxu0 0.0
        %2483 = vmatpush1.msra.mxu0 0.0
        %2484 = vmatprep.subr.mxu0 0.0
        %2485 = vmatpush1.msra.mxu0 0.0
        %2486 = vmatprep.subr.mxu0 0.0
        %2487 = vmatpush1.msra.mxu0 0.0
        %2488 = vmatprep.subr.mxu0 0.0
        %2489 = vmatpush1.msra.mxu0 0.0
        %2490 = vmatprep.subr.mxu0 0.0
        %2491 = vmatpush1.msra.mxu0 0.0
        %2492 = vmatprep.subr.mxu0 0.0
        %2493 = vmatpush1.msra.mxu0 0.0
        %2494 = vmatprep.subr.mxu0 0.0
        %2495 = vmatpush1.msra.mxu0 0.0
        %2496 = vmatprep.subr.mxu0 0.0
        %2497 = vmatpush1.msra.mxu0 0.0
        %2498 = vmatprep.subr.mxu0 0.0
        %2499 = vmatpush1.msra.mxu0 0.0
        %2500 = vmatprep.subr.mxu0 0.0
        %2501 = vmatpush1.msra.mxu0 0.0
        %2502 = vmatprep.subr.mxu0 0.0
        %2503 = vmatpush1.msra.mxu0 0.0
        %2504 = vmatprep.subr.mxu0 0.0
        %2505 = vmatpush1.msra.mxu0 0.0
        %2506 = vmatprep.subr.mxu0 0.0
        %2507 = vmatpush1.msra.mxu0 0.0
        %2508 = vmatprep.subr.mxu0 0.0
        %2509 = vmatpush1.msra.mxu0 0.0
        %2510 = vmatprep.subr.mxu0 0.0
        %2511 = vmatpush1.msra.mxu0 0.0
        %2512 = vmatprep.subr.mxu0 0.0
        %2513 = vmatpush1.msra.mxu0 0.0
        %2514 = vmatprep.subr.mxu0 0.0
        %2515 = vmatpush1.msra.mxu0 0.0
        %2516 = vmatprep.subr.mxu0 0.0
        %2517 = vmatpush1.msra.mxu0 0.0
        %2518 = vmatprep.subr.mxu0 0.0
        %2519 = vmatpush1.msra.mxu0 0.0
        %2520 = vmatprep.subr.mxu0 0.0
        %2521 = vmatpush1.msra.mxu0 0.0
        %2522 = vmatprep.subr.mxu0 0.0
        %2523 = vmatpush1.msra.mxu0 0.0
        %2524 = vmatprep.subr.mxu0 0.0
        %2525 = vmatpush1.msra.mxu0 0.0
        %2526 = vmatprep.subr.mxu0 0.0
        %2527 = vmatpush1.msra.mxu0 0.0
        %2528 = vmatprep.subr.mxu0 0.0
        %2529 = vmatpush1.msra.mxu0 0.0
        %2530 = vmatprep.subr.mxu0 0.0
        %2531 = vmatpush1.msra.mxu0 0.0
        %2532 = vmatprep.subr.mxu0 0.0
        %2533 = vmatpush1.msra.mxu0 0.0
        %2534 = vmatprep.mubr.f32.mxu0 0.0
        %2535 = vmatmul.mubr.f32.gmra.mrb[0].mxu0 %v2460
        %v2536 = vpop.f32.mrb[0].mxu0
        %v2537 = vadd.f32 0.0, %v2536
        %v2538 = vpop.f32.mrb[0].mxu0
        %2539 = vmatprep.mubr.f32.mxu0 0.0
        %2540 = vmatmul.mubr.f32.gmra.mrb[0].mxu0 %v2463
        %v2541 = vpop.f32.mrb[0].mxu0
        %v2542 = vadd.f32 0.0, %v2541
        %v2543 = vpop.f32.mrb[0].mxu0
        %2544 = vmatprep.mubr.f32.mxu0 0.0
        %2545 = vmatmul.mubr.f32.gmra.mrb[0].mxu0 %v2466
        %v2546 = vpop.f32.mrb[0].mxu0
        %v2547 = vadd.f32 0.0, %v2546
        %v2548 = vpop.f32.mrb[0].mxu0
        %2549 = vdwg.mxu0
        %2550 = vst.msk [vmem:[#allocation3] sm:$0xff] %vm852, %v2537
        %2551 = vst.msk [vmem:[#allocation3 + $0x8] sm:$0xff] %vm852, %v2542
        %2552 = vst.msk [vmem:[#allocation3 + $0x10] sm:$0x3] %vm1082, %v2547
        %2553 = vrot.lane.b32.xlu0 %v2304, 120
        %v2554 = vpop.permute.xlu0 %2553
        %2555 = vrot.lane.b32.xlu0 %v2307, 120
        %v2556 = vpop.permute.xlu0 %2555
        %2557 = vrot.lane.b32.xlu0 %v2312, 120
        %v2558 = vpop.permute.xlu0 %2557
        %2559 = vrot.lane.b32.xlu0 %v2304, 88
        %v2560 = vpop.permute.xlu0 %2559
        %2561 = vrot.lane.b32.xlu0 %v2307, 88
        %v2562 = vpop.permute.xlu0 %2561
        %2563 = vrot.lane.b32.xlu0 %v2312, 88
        %v2564 = vpop.permute.xlu0 %2563
        %v2565 = vsel %vm852, %v2554, 0
        %v2567 = vsel %vm852, %v2556, 0
        %v2569 = vsel %vm852, %v2558, 0
        %v2571 = vsel %vm852, %v2560, 0
        %v2573 = vsel %vm852, %v2562, 0
        %v2575 = vsel %vm852, %v2564, 0
        %2577 = vmatprep.subr.mxu0 0.0
        %2578 = vmatpush1.xpose.msra.mxu0 %v2571
        %2579 = vmatprep.subr.mxu0 0.0
        %2580 = vmatpush1.xpose.msra.mxu0 %v2573
        %2581 = vmatprep.subr.mxu0 0.0
        %2582 = vmatpush1.xpose.msra.mxu0 %v2575
        %2583 = vmatprep.subr.mxu0 0.0
        %2584 = vmatpush1.xpose.msra.mxu0 0.0
        %2585 = vmatprep.subr.mxu0 0.0
        %2586 = vmatpush1.xpose.msra.mxu0 0.0
        %2587 = vmatprep.subr.mxu0 0.0
        %2588 = vmatpush1.xpose.msra.mxu0 0.0
        %2589 = vmatprep.subr.mxu0 0.0
        %2590 = vmatpush1.xpose.msra.mxu0 0.0
        %2591 = vmatprep.subr.mxu0 0.0
        %2592 = vmatpush1.xpose.msra.mxu0 0.0
        %2593 = vmatprep.subr.mxu0 0.0
        %2594 = vmatpush1.xpose.msra.mxu0 0.0
        %2595 = vmatprep.subr.mxu0 0.0
        %2596 = vmatpush1.xpose.msra.mxu0 0.0
        %2597 = vmatprep.subr.mxu0 0.0
        %2598 = vmatpush1.xpose.msra.mxu0 0.0
        %2599 = vmatprep.subr.mxu0 0.0
        %2600 = vmatpush1.xpose.msra.mxu0 0.0
        %2601 = vmatprep.subr.mxu0 0.0
        %2602 = vmatpush1.xpose.msra.mxu0 0.0
        %2603 = vmatprep.subr.mxu0 0.0
        %2604 = vmatpush1.xpose.msra.mxu0 0.0
        %2605 = vmatprep.subr.mxu0 0.0
        %2606 = vmatpush1.xpose.msra.mxu0 0.0
        %2607 = vmatprep.subr.mxu0 0.0
        %2608 = vmatpush1.xpose.msra.mxu0 0.0
        %2609 = vmatprep.subr.mxu0 0.0
        %2610 = vmatpush1.xpose.msra.mxu0 0.0
        %2611 = vmatprep.subr.mxu0 0.0
        %2612 = vmatpush1.xpose.msra.mxu0 0.0
        %2613 = vmatprep.subr.mxu0 0.0
        %2614 = vmatpush1.xpose.msra.mxu0 0.0
        %2615 = vmatprep.subr.mxu0 0.0
        %2616 = vmatpush1.xpose.msra.mxu0 0.0
        %2617 = vmatprep.subr.mxu0 0.0
        %2618 = vmatpush1.xpose.msra.mxu0 0.0
        %2619 = vmatprep.subr.mxu0 0.0
        %2620 = vmatpush1.xpose.msra.mxu0 0.0
        %2621 = vmatprep.subr.mxu0 0.0
        %2622 = vmatpush1.xpose.msra.mxu0 0.0
        %2623 = vmatprep.subr.mxu0 0.0
        %2624 = vmatpush1.xpose.msra.mxu0 0.0
        %2625 = vmatprep.subr.mxu0 0.0
        %2626 = vmatpush1.xpose.msra.mxu0 0.0
        %2627 = vmatprep.subr.mxu0 0.0
        %2628 = vmatpush1.xpose.msra.mxu0 0.0
        %2629 = vmatprep.subr.mxu0 0.0
        %2630 = vmatpush1.xpose.msra.mxu0 0.0
        %2631 = vmatprep.subr.mxu0 0.0
        %2632 = vmatpush1.xpose.msra.mxu0 0.0
        %2633 = vmatprep.subr.mxu0 0.0
        %2634 = vmatpush1.xpose.msra.mxu0 0.0
        %2635 = vmatprep.subr.mxu0 0.0
        %2636 = vmatpush1.xpose.msra.mxu0 0.0
        %2637 = vmatprep.subr.mxu0 0.0
        %2638 = vmatpush1.xpose.msra.mxu0 0.0
        %2639 = vmatprep.subr.mxu0 0.0
        %2640 = vmatpush1.xpose.msra.mxu0 0.0
        %2641 = vmatprep.mubr.f32.mxu0 0.0
        %2642 = vmatmul.mubr.f32.gmra.mrb[0].mxu0 %v2565
        %v2643 = vpop.f32.mrb[0].mxu0
        %v2644 = vadd.f32 0.0, %v2643
        %v2645 = vpop.f32.mrb[0].mxu0
        %2646 = vmatprep.mubr.f32.mxu0 0.0
        %2647 = vmatmul.mubr.f32.gmra.mrb[0].mxu0 %v2567
        %v2648 = vpop.f32.mrb[0].mxu0
        %v2649 = vadd.f32 0.0, %v2648
        %v2650 = vpop.f32.mrb[0].mxu0
        %2651 = vmatprep.mubr.f32.mxu0 0.0
        %2652 = vmatmul.mubr.f32.gmra.mrb[0].mxu0 %v2569
        %v2653 = vpop.f32.mrb[0].mxu0
        %v2654 = vadd.f32 0.0, %v2653
        %v2655 = vpop.f32.mrb[0].mxu0
        %2656 = vdwg.mxu0
        %v2657 = vsel %vm945, %v2644, -inf
        %2658 = vmax.xlane.f32.xlu0 %v2657
        %v2659 = vpop.xlane.xlu0 %2658
        %v2660 = vsel %vm945, %v2649, -inf
        %2661 = vmax.xlane.f32.xlu0 %v2660
        %v2662 = vpop.xlane.xlu0 %2661
        %v2663 = vsel %vm952, %v2654, -inf
        %2664 = vmax.xlane.f32.xlu0 %v2663
        %v2665 = vpop.xlane.xlu0 %2664
        %v2666 = vsub.f32 %v2644, %v2659
        %v2667 = vsub.f32 %v2649, %v2662
        %v2668 = vsub.f32 %v2654, %v2665
        %v2669 = vmul.f32 %v2666, 1.442695
        %v2670 = vpow.pop %v2669
        %v2671 = vmul.f32 %v2667, 1.442695
        %v2672 = vpow.pop %v2671
        %v2673 = vmul.f32 %v2668, 1.442695
        %v2674 = vpow.pop %v2673
        %v2675 = vsel %vm945, %v2670, 0.0
        %2676 = vadd.xlane.f32.xlu0 %v2675
        %v2677 = vpop.xlane.xlu0 %2676
        %v2678 = vsel %vm945, %v2672, 0.0
        %2679 = vadd.xlane.f32.xlu0 %v2678
        %v2680 = vpop.xlane.xlu0 %2679
        %v2681 = vsel %vm952, %v2674, 0.0
        %2682 = vadd.xlane.f32.xlu0 %v2681
        %v2683 = vpop.xlane.xlu0 %2682
        %v2684 = vrcp.pop %v2677
        %v2685 = vmul.f32 %v2670, %v2684
        %v2686 = vrcp.pop %v2680
        %v2687 = vmul.f32 %v2672, %v2686
        %v2688 = vrcp.pop %v2683
        %v2689 = vmul.f32 %v2674, %v2688
        %2690 = vrot.lane.b32.xlu0 %v2304, 56
        %v2691 = vpop.permute.xlu0 %2690
        %2692 = vrot.lane.b32.xlu0 %v2307, 56
        %v2693 = vpop.permute.xlu0 %2692
        %2694 = vrot.lane.b32.xlu0 %v2312, 56
        %v2695 = vpop.permute.xlu0 %2694
        %v2699 = vsel %vm945, %v2685, 0
        %v2702 = vsel %vm945, %v2687, 0
        %v2705 = vsel %vm945, %v2689, 0
        %v2707 = vsel %vm997, %v2695, 0
        %2709 = vmatprep.subr.mxu0 0.0
        %2710 = vmatpush1.msra.mxu0 %v2691
        %2711 = vmatprep.subr.mxu0 0.0
        %2712 = vmatpush1.msra.mxu0 %v2693
        %2713 = vmatprep.subr.mxu0 0.0
        %2714 = vmatpush1.msra.mxu0 %v2707
        %2715 = vmatprep.subr.mxu0 0.0
        %2716 = vmatpush1.msra.mxu0 0.0
        %2717 = vmatprep.subr.mxu0 0.0
        %2718 = vmatpush1.msra.mxu0 0.0
        %2719 = vmatprep.subr.mxu0 0.0
        %2720 = vmatpush1.msra.mxu0 0.0
        %2721 = vmatprep.subr.mxu0 0.0
        %2722 = vmatpush1.msra.mxu0 0.0
        %2723 = vmatprep.subr.mxu0 0.0
        %2724 = vmatpush1.msra.mxu0 0.0
        %2725 = vmatprep.subr.mxu0 0.0
        %2726 = vmatpush1.msra.mxu0 0.0
        %2727 = vmatprep.subr.mxu0 0.0
        %2728 = vmatpush1.msra.mxu0 0.0
        %2729 = vmatprep.subr.mxu0 0.0
        %2730 = vmatpush1.msra.mxu0 0.0
        %2731 = vmatprep.subr.mxu0 0.0
        %2732 = vmatpush1.msra.mxu0 0.0
        %2733 = vmatprep.subr.mxu0 0.0
        %2734 = vmatpush1.msra.mxu0 0.0
        %2735 = vmatprep.subr.mxu0 0.0
        %2736 = vmatpush1.msra.mxu0 0.0
        %2737 = vmatprep.subr.mxu0 0.0
        %2738 = vmatpush1.msra.mxu0 0.0
        %2739 = vmatprep.subr.mxu0 0.0
        %2740 = vmatpush1.msra.mxu0 0.0
        %2741 = vmatprep.subr.mxu0 0.0
        %2742 = vmatpush1.msra.mxu0 0.0
        %2743 = vmatprep.subr.mxu0 0.0
        %2744 = vmatpush1.msra.mxu0 0.0
        %2745 = vmatprep.subr.mxu0 0.0
        %2746 = vmatpush1.msra.mxu0 0.0
        %2747 = vmatprep.subr.mxu0 0.0
        %2748 = vmatpush1.msra.mxu0 0.0
        %2749 = vmatprep.subr.mxu0 0.0
        %2750 = vmatpush1.msra.mxu0 0.0
        %2751 = vmatprep.subr.mxu0 0.0
        %2752 = vmatpush1.msra.mxu0 0.0
        %2753 = vmatprep.subr.mxu0 0.0
        %2754 = vmatpush1.msra.mxu0 0.0
        %2755 = vmatprep.subr.mxu0 0.0
        %2756 = vmatpush1.msra.mxu0 0.0
        %2757 = vmatprep.subr.mxu0 0.0
        %2758 = vmatpush1.msra.mxu0 0.0
        %2759 = vmatprep.subr.mxu0 0.0
        %2760 = vmatpush1.msra.mxu0 0.0
        %2761 = vmatprep.subr.mxu0 0.0
        %2762 = vmatpush1.msra.mxu0 0.0
        %2763 = vmatprep.subr.mxu0 0.0
        %2764 = vmatpush1.msra.mxu0 0.0
        %2765 = vmatprep.subr.mxu0 0.0
        %2766 = vmatpush1.msra.mxu0 0.0
        %2767 = vmatprep.subr.mxu0 0.0
        %2768 = vmatpush1.msra.mxu0 0.0
        %2769 = vmatprep.subr.mxu0 0.0
        %2770 = vmatpush1.msra.mxu0 0.0
        %2771 = vmatprep.subr.mxu0 0.0
        %2772 = vmatpush1.msra.mxu0 0.0
        %2773 = vmatprep.mubr.f32.mxu0 0.0
        %2774 = vmatmul.mubr.f32.gmra.mrb[0].mxu0 %v2699
        %v2775 = vpop.f32.mrb[0].mxu0
        %v2776 = vadd.f32 0.0, %v2775
        %v2777 = vpop.f32.mrb[0].mxu0
        %2778 = vmatprep.mubr.f32.mxu0 0.0
        %2779 = vmatmul.mubr.f32.gmra.mrb[0].mxu0 %v2702
        %v2780 = vpop.f32.mrb[0].mxu0
        %v2781 = vadd.f32 0.0, %v2780
        %v2782 = vpop.f32.mrb[0].mxu0
        %2783 = vmatprep.mubr.f32.mxu0 0.0
        %2784 = vmatmul.mubr.f32.gmra.mrb[0].mxu0 %v2705
        %v2785 = vpop.f32.mrb[0].mxu0
        %v2786 = vadd.f32 0.0, %v2785
        %v2787 = vpop.f32.mrb[0].mxu0
        %2788 = vdwg.mxu0
        %2792 = vrot.lane.b32.xlu0 %v2776, 8
        %v2793 = vpop.permute.xlu0 %2792
        %2794 = vrot.lane.b32.xlu0 %v2781, 8
        %v2795 = vpop.permute.xlu0 %2794
        %2796 = vrot.lane.b32.xlu0 %v2786, 8
        %v2797 = vpop.permute.xlu0 %2796
        %2801 = vst.msk [vmem:[#allocation3] sm:$0xff] %vm1332, %v2793
        %2802 = vst.msk [vmem:[#allocation3 + $0x8] sm:$0xff] %vm1332, %v2795
        %2803 = vst.msk [vmem:[#allocation3 + $0x10] sm:$0x3] %vm1335, %v2797
        %2804 = vrot.lane.b32.xlu0 %v2304, 112
        %v2805 = vpop.permute.xlu0 %2804
        %2806 = vrot.lane.b32.xlu0 %v2307, 112
        %v2807 = vpop.permute.xlu0 %2806
        %2808 = vrot.lane.b32.xlu0 %v2312, 112
        %v2809 = vpop.permute.xlu0 %2808
        %2810 = vrot.lane.b32.xlu0 %v2304, 80
        %v2811 = vpop.permute.xlu0 %2810
        %2812 = vrot.lane.b32.xlu0 %v2307, 80
        %v2813 = vpop.permute.xlu0 %2812
        %2814 = vrot.lane.b32.xlu0 %v2312, 80
        %v2815 = vpop.permute.xlu0 %2814
        %v2816 = vsel %vm852, %v2805, 0
        %v2818 = vsel %vm852, %v2807, 0
        %v2820 = vsel %vm852, %v2809, 0
        %v2822 = vsel %vm852, %v2811, 0
        %v2824 = vsel %vm852, %v2813, 0
        %v2826 = vsel %vm852, %v2815, 0
        %2828 = vmatprep.subr.mxu0 0.0
        %2829 = vmatpush1.xpose.msra.mxu0 %v2822
        %2830 = vmatprep.subr.mxu0 0.0
        %2831 = vmatpush1.xpose.msra.mxu0 %v2824
        %2832 = vmatprep.subr.mxu0 0.0
        %2833 = vmatpush1.xpose.msra.mxu0 %v2826
        %2834 = vmatprep.subr.mxu0 0.0
        %2835 = vmatpush1.xpose.msra.mxu0 0.0
        %2836 = vmatprep.subr.mxu0 0.0
        %2837 = vmatpush1.xpose.msra.mxu0 0.0
        %2838 = vmatprep.subr.mxu0 0.0
        %2839 = vmatpush1.xpose.msra.mxu0 0.0
        %2840 = vmatprep.subr.mxu0 0.0
        %2841 = vmatpush1.xpose.msra.mxu0 0.0
        %2842 = vmatprep.subr.mxu0 0.0
        %2843 = vmatpush1.xpose.msra.mxu0 0.0
        %2844 = vmatprep.subr.mxu0 0.0
        %2845 = vmatpush1.xpose.msra.mxu0 0.0
        %2846 = vmatprep.subr.mxu0 0.0
        %2847 = vmatpush1.xpose.msra.mxu0 0.0
        %2848 = vmatprep.subr.mxu0 0.0
        %2849 = vmatpush1.xpose.msra.mxu0 0.0
        %2850 = vmatprep.subr.mxu0 0.0
        %2851 = vmatpush1.xpose.msra.mxu0 0.0
        %2852 = vmatprep.subr.mxu0 0.0
        %2853 = vmatpush1.xpose.msra.mxu0 0.0
        %2854 = vmatprep.subr.mxu0 0.0
        %2855 = vmatpush1.xpose.msra.mxu0 0.0
        %2856 = vmatprep.subr.mxu0 0.0
        %2857 = vmatpush1.xpose.msra.mxu0 0.0
        %2858 = vmatprep.subr.mxu0 0.0
        %2859 = vmatpush1.xpose.msra.mxu0 0.0
        %2860 = vmatprep.subr.mxu0 0.0
        %2861 = vmatpush1.xpose.msra.mxu0 0.0
        %2862 = vmatprep.subr.mxu0 0.0
        %2863 = vmatpush1.xpose.msra.mxu0 0.0
        %2864 = vmatprep.subr.mxu0 0.0
        %2865 = vmatpush1.xpose.msra.mxu0 0.0
        %2866 = vmatprep.subr.mxu0 0.0
        %2867 = vmatpush1.xpose.msra.mxu0 0.0
        %2868 = vmatprep.subr.mxu0 0.0
        %2869 = vmatpush1.xpose.msra.mxu0 0.0
        %2870 = vmatprep.subr.mxu0 0.0
        %2871 = vmatpush1.xpose.msra.mxu0 0.0
        %2872 = vmatprep.subr.mxu0 0.0
        %2873 = vmatpush1.xpose.msra.mxu0 0.0
        %2874 = vmatprep.subr.mxu0 0.0
        %2875 = vmatpush1.xpose.msra.mxu0 0.0
        %2876 = vmatprep.subr.mxu0 0.0
        %2877 = vmatpush1.xpose.msra.mxu0 0.0
        %2878 = vmatprep.subr.mxu0 0.0
        %2879 = vmatpush1.xpose.msra.mxu0 0.0
        %2880 = vmatprep.subr.mxu0 0.0
        %2881 = vmatpush1.xpose.msra.mxu0 0.0
        %2882 = vmatprep.subr.mxu0 0.0
        %2883 = vmatpush1.xpose.msra.mxu0 0.0
        %2884 = vmatprep.subr.mxu0 0.0
        %2885 = vmatpush1.xpose.msra.mxu0 0.0
        %2886 = vmatprep.subr.mxu0 0.0
        %2887 = vmatpush1.xpose.msra.mxu0 0.0
        %2888 = vmatprep.subr.mxu0 0.0
        %2889 = vmatpush1.xpose.msra.mxu0 0.0
        %2890 = vmatprep.subr.mxu0 0.0
        %2891 = vmatpush1.xpose.msra.mxu0 0.0
        %2892 = vmatprep.mubr.f32.mxu0 0.0
        %2893 = vmatmul.mubr.f32.gmra.mrb[0].mxu0 %v2816
        %v2894 = vpop.f32.mrb[0].mxu0
        %v2895 = vadd.f32 0.0, %v2894
        %v2896 = vpop.f32.mrb[0].mxu0
        %2897 = vmatprep.mubr.f32.mxu0 0.0
        %2898 = vmatmul.mubr.f32.gmra.mrb[0].mxu0 %v2818
        %v2899 = vpop.f32.mrb[0].mxu0
        %v2900 = vadd.f32 0.0, %v2899
        %v2901 = vpop.f32.mrb[0].mxu0
        %2902 = vmatprep.mubr.f32.mxu0 0.0
        %2903 = vmatmul.mubr.f32.gmra.mrb[0].mxu0 %v2820
        %v2904 = vpop.f32.mrb[0].mxu0
        %v2905 = vadd.f32 0.0, %v2904
        %v2906 = vpop.f32.mrb[0].mxu0
        %2907 = vdwg.mxu0
        %v2908 = vsel %vm945, %v2895, -inf
        %2909 = vmax.xlane.f32.xlu0 %v2908
        %v2910 = vpop.xlane.xlu0 %2909
        %v2911 = vsel %vm945, %v2900, -inf
        %2912 = vmax.xlane.f32.xlu0 %v2911
        %v2913 = vpop.xlane.xlu0 %2912
        %v2914 = vsel %vm952, %v2905, -inf
        %2915 = vmax.xlane.f32.xlu0 %v2914
        %v2916 = vpop.xlane.xlu0 %2915
        %v2917 = vsub.f32 %v2895, %v2910
        %v2918 = vsub.f32 %v2900, %v2913
        %v2919 = vsub.f32 %v2905, %v2916
        %v2920 = vmul.f32 %v2917, 1.442695
        %v2921 = vpow.pop %v2920
        %v2922 = vmul.f32 %v2918, 1.442695
        %v2923 = vpow.pop %v2922
        %v2924 = vmul.f32 %v2919, 1.442695
        %v2925 = vpow.pop %v2924
        %v2926 = vsel %vm945, %v2921, 0.0
        %2927 = vadd.xlane.f32.xlu0 %v2926
        %v2928 = vpop.xlane.xlu0 %2927
        %v2929 = vsel %vm945, %v2923, 0.0
        %2930 = vadd.xlane.f32.xlu0 %v2929
        %v2931 = vpop.xlane.xlu0 %2930
        %v2932 = vsel %vm952, %v2925, 0.0
        %2933 = vadd.xlane.f32.xlu0 %v2932
        %v2934 = vpop.xlane.xlu0 %2933
        %v2935 = vrcp.pop %v2928
        %v2936 = vmul.f32 %v2921, %v2935
        %v2937 = vrcp.pop %v2931
        %v2938 = vmul.f32 %v2923, %v2937
        %v2939 = vrcp.pop %v2934
        %v2940 = vmul.f32 %v2925, %v2939
        %2941 = vrot.lane.b32.xlu0 %v2304, 48
        %v2942 = vpop.permute.xlu0 %2941
        %2943 = vrot.lane.b32.xlu0 %v2307, 48
        %v2944 = vpop.permute.xlu0 %2943
        %2945 = vrot.lane.b32.xlu0 %v2312, 48
        %v2946 = vpop.permute.xlu0 %2945
        %v2950 = vsel %vm945, %v2936, 0
        %v2953 = vsel %vm945, %v2938, 0
        %v2956 = vsel %vm945, %v2940, 0
        %v2958 = vsel %vm997, %v2946, 0
        %2960 = vmatprep.subr.mxu0 0.0
        %2961 = vmatpush1.msra.mxu0 %v2942
        %2962 = vmatprep.subr.mxu0 0.0
        %2963 = vmatpush1.msra.mxu0 %v2944
        %2964 = vmatprep.subr.mxu0 0.0
        %2965 = vmatpush1.msra.mxu0 %v2958
        %2966 = vmatprep.subr.mxu0 0.0
        %2967 = vmatpush1.msra.mxu0 0.0
        %2968 = vmatprep.subr.mxu0 0.0
        %2969 = vmatpush1.msra.mxu0 0.0
        %2970 = vmatprep.subr.mxu0 0.0
        %2971 = vmatpush1.msra.mxu0 0.0
        %2972 = vmatprep.subr.mxu0 0.0
        %2973 = vmatpush1.msra.mxu0 0.0
        %2974 = vmatprep.subr.mxu0 0.0
        %2975 = vmatpush1.msra.mxu0 0.0
        %2976 = vmatprep.subr.mxu0 0.0
        %2977 = vmatpush1.msra.mxu0 0.0
        %2978 = vmatprep.subr.mxu0 0.0
        %2979 = vmatpush1.msra.mxu0 0.0
        %2980 = vmatprep.subr.mxu0 0.0
        %2981 = vmatpush1.msra.mxu0 0.0
        %2982 = vmatprep.subr.mxu0 0.0
        %2983 = vmatpush1.msra.mxu0 0.0
        %2984 = vmatprep.subr.mxu0 0.0
        %2985 = vmatpush1.msra.mxu0 0.0
        %2986 = vmatprep.subr.mxu0 0.0
        %2987 = vmatpush1.msra.mxu0 0.0
        %2988 = vmatprep.subr.mxu0 0.0
        %2989 = vmatpush1.msra.mxu0 0.0
        %2990 = vmatprep.subr.mxu0 0.0
        %2991 = vmatpush1.msra.mxu0 0.0
        %2992 = vmatprep.subr.mxu0 0.0
        %2993 = vmatpush1.msra.mxu0 0.0
        %2994 = vmatprep.subr.mxu0 0.0
        %2995 = vmatpush1.msra.mxu0 0.0
        %2996 = vmatprep.subr.mxu0 0.0
        %2997 = vmatpush1.msra.mxu0 0.0
        %2998 = vmatprep.subr.mxu0 0.0
        %2999 = vmatpush1.msra.mxu0 0.0
        %3000 = vmatprep.subr.mxu0 0.0
        %3001 = vmatpush1.msra.mxu0 0.0
        %3002 = vmatprep.subr.mxu0 0.0
        %3003 = vmatpush1.msra.mxu0 0.0
        %3004 = vmatprep.subr.mxu0 0.0
        %3005 = vmatpush1.msra.mxu0 0.0
        %3006 = vmatprep.subr.mxu0 0.0
        %3007 = vmatpush1.msra.mxu0 0.0
        %3008 = vmatprep.subr.mxu0 0.0
        %3009 = vmatpush1.msra.mxu0 0.0
        %3010 = vmatprep.subr.mxu0 0.0
        %3011 = vmatpush1.msra.mxu0 0.0
        %3012 = vmatprep.subr.mxu0 0.0
        %3013 = vmatpush1.msra.mxu0 0.0
        %3014 = vmatprep.subr.mxu0 0.0
        %3015 = vmatpush1.msra.mxu0 0.0
        %3016 = vmatprep.subr.mxu0 0.0
        %3017 = vmatpush1.msra.mxu0 0.0
        %3018 = vmatprep.subr.mxu0 0.0
        %3019 = vmatpush1.msra.mxu0 0.0
        %3020 = vmatprep.subr.mxu0 0.0
        %3021 = vmatpush1.msra.mxu0 0.0
        %3022 = vmatprep.subr.mxu0 0.0
        %3023 = vmatpush1.msra.mxu0 0.0
        %3024 = vmatprep.mubr.f32.mxu0 0.0
        %3025 = vmatmul.mubr.f32.gmra.mrb[0].mxu0 %v2950
        %v3026 = vpop.f32.mrb[0].mxu0
        %v3027 = vadd.f32 0.0, %v3026
        %v3028 = vpop.f32.mrb[0].mxu0
        %3029 = vmatprep.mubr.f32.mxu0 0.0
        %3030 = vmatmul.mubr.f32.gmra.mrb[0].mxu0 %v2953
        %v3031 = vpop.f32.mrb[0].mxu0
        %v3032 = vadd.f32 0.0, %v3031
        %v3033 = vpop.f32.mrb[0].mxu0
        %3034 = vmatprep.mubr.f32.mxu0 0.0
        %3035 = vmatmul.mubr.f32.gmra.mrb[0].mxu0 %v2956
        %v3036 = vpop.f32.mrb[0].mxu0
        %v3037 = vadd.f32 0.0, %v3036
        %v3038 = vpop.f32.mrb[0].mxu0
        %3039 = vdwg.mxu0
        %3043 = vrot.lane.b32.xlu0 %v3027, 16
        %v3044 = vpop.permute.xlu0 %3043
        %3045 = vrot.lane.b32.xlu0 %v3032, 16
        %v3046 = vpop.permute.xlu0 %3045
        %3047 = vrot.lane.b32.xlu0 %v3037, 16
        %v3048 = vpop.permute.xlu0 %3047
        %3052 = vst.msk [vmem:[#allocation3] sm:$0xff] %vm1585, %v3044
        %3053 = vst.msk [vmem:[#allocation3 + $0x8] sm:$0xff] %vm1585, %v3046
        %3054 = vst.msk [vmem:[#allocation3 + $0x10] sm:$0x3] %vm1588, %v3048
        %3055 = vrot.lane.b32.xlu0 %v2304, 104
        %v3056 = vpop.permute.xlu0 %3055
        %3057 = vrot.lane.b32.xlu0 %v2307, 104
        %v3058 = vpop.permute.xlu0 %3057
        %3059 = vrot.lane.b32.xlu0 %v2312, 104
        %v3060 = vpop.permute.xlu0 %3059
        %3061 = vrot.lane.b32.xlu0 %v2304, 72
        %v3062 = vpop.permute.xlu0 %3061
        %3063 = vrot.lane.b32.xlu0 %v2307, 72
        %v3064 = vpop.permute.xlu0 %3063
        %3065 = vrot.lane.b32.xlu0 %v2312, 72
        %v3066 = vpop.permute.xlu0 %3065
        %v3067 = vsel %vm852, %v3056, 0
        %v3069 = vsel %vm852, %v3058, 0
        %v3071 = vsel %vm852, %v3060, 0
        %v3073 = vsel %vm852, %v3062, 0
        %v3075 = vsel %vm852, %v3064, 0
        %v3077 = vsel %vm852, %v3066, 0
        %3079 = vmatprep.subr.mxu0 0.0
        %3080 = vmatpush1.xpose.msra.mxu0 %v3073
        %3081 = vmatprep.subr.mxu0 0.0
        %3082 = vmatpush1.xpose.msra.mxu0 %v3075
        %3083 = vmatprep.subr.mxu0 0.0
        %3084 = vmatpush1.xpose.msra.mxu0 %v3077
        %3085 = vmatprep.subr.mxu0 0.0
        %3086 = vmatpush1.xpose.msra.mxu0 0.0
        %3087 = vmatprep.subr.mxu0 0.0
        %3088 = vmatpush1.xpose.msra.mxu0 0.0
        %3089 = vmatprep.subr.mxu0 0.0
        %3090 = vmatpush1.xpose.msra.mxu0 0.0
        %3091 = vmatprep.subr.mxu0 0.0
        %3092 = vmatpush1.xpose.msra.mxu0 0.0
        %3093 = vmatprep.subr.mxu0 0.0
        %3094 = vmatpush1.xpose.msra.mxu0 0.0
        %3095 = vmatprep.subr.mxu0 0.0
        %3096 = vmatpush1.xpose.msra.mxu0 0.0
        %3097 = vmatprep.subr.mxu0 0.0
        %3098 = vmatpush1.xpose.msra.mxu0 0.0
        %3099 = vmatprep.subr.mxu0 0.0
        %3100 = vmatpush1.xpose.msra.mxu0 0.0
        %3101 = vmatprep.subr.mxu0 0.0
        %3102 = vmatpush1.xpose.msra.mxu0 0.0
        %3103 = vmatprep.subr.mxu0 0.0
        %3104 = vmatpush1.xpose.msra.mxu0 0.0
        %3105 = vmatprep.subr.mxu0 0.0
        %3106 = vmatpush1.xpose.msra.mxu0 0.0
        %3107 = vmatprep.subr.mxu0 0.0
        %3108 = vmatpush1.xpose.msra.mxu0 0.0
        %3109 = vmatprep.subr.mxu0 0.0
        %3110 = vmatpush1.xpose.msra.mxu0 0.0
        %3111 = vmatprep.subr.mxu0 0.0
        %3112 = vmatpush1.xpose.msra.mxu0 0.0
        %3113 = vmatprep.subr.mxu0 0.0
        %3114 = vmatpush1.xpose.msra.mxu0 0.0
        %3115 = vmatprep.subr.mxu0 0.0
        %3116 = vmatpush1.xpose.msra.mxu0 0.0
        %3117 = vmatprep.subr.mxu0 0.0
        %3118 = vmatpush1.xpose.msra.mxu0 0.0
        %3119 = vmatprep.subr.mxu0 0.0
        %3120 = vmatpush1.xpose.msra.mxu0 0.0
        %3121 = vmatprep.subr.mxu0 0.0
        %3122 = vmatpush1.xpose.msra.mxu0 0.0
        %3123 = vmatprep.subr.mxu0 0.0
        %3124 = vmatpush1.xpose.msra.mxu0 0.0
        %3125 = vmatprep.subr.mxu0 0.0
        %3126 = vmatpush1.xpose.msra.mxu0 0.0
        %3127 = vmatprep.subr.mxu0 0.0
        %3128 = vmatpush1.xpose.msra.mxu0 0.0
        %3129 = vmatprep.subr.mxu0 0.0
        %3130 = vmatpush1.xpose.msra.mxu0 0.0
        %3131 = vmatprep.subr.mxu0 0.0
        %3132 = vmatpush1.xpose.msra.mxu0 0.0
        %3133 = vmatprep.subr.mxu0 0.0
        %3134 = vmatpush1.xpose.msra.mxu0 0.0
        %3135 = vmatprep.subr.mxu0 0.0
        %3136 = vmatpush1.xpose.msra.mxu0 0.0
        %3137 = vmatprep.subr.mxu0 0.0
        %3138 = vmatpush1.xpose.msra.mxu0 0.0
        %3139 = vmatprep.subr.mxu0 0.0
        %3140 = vmatpush1.xpose.msra.mxu0 0.0
        %3141 = vmatprep.subr.mxu0 0.0
        %3142 = vmatpush1.xpose.msra.mxu0 0.0
        %3143 = vmatprep.mubr.f32.mxu0 0.0
        %3144 = vmatmul.mubr.f32.gmra.mrb[0].mxu0 %v3067
        %v3145 = vpop.f32.mrb[0].mxu0
        %v3146 = vadd.f32 0.0, %v3145
        %v3147 = vpop.f32.mrb[0].mxu0
        %3148 = vmatprep.mubr.f32.mxu0 0.0
        %3149 = vmatmul.mubr.f32.gmra.mrb[0].mxu0 %v3069
        %v3150 = vpop.f32.mrb[0].mxu0
        %v3151 = vadd.f32 0.0, %v3150
        %v3152 = vpop.f32.mrb[0].mxu0
        %3153 = vmatprep.mubr.f32.mxu0 0.0
        %3154 = vmatmul.mubr.f32.gmra.mrb[0].mxu0 %v3071
        %v3155 = vpop.f32.mrb[0].mxu0
        %v3156 = vadd.f32 0.0, %v3155
        %v3157 = vpop.f32.mrb[0].mxu0
        %3158 = vdwg.mxu0
        %v3159 = vsel %vm945, %v3146, -inf
        %3160 = vmax.xlane.f32.xlu0 %v3159
        %v3161 = vpop.xlane.xlu0 %3160
        %v3162 = vsel %vm945, %v3151, -inf
        %3163 = vmax.xlane.f32.xlu0 %v3162
        %v3164 = vpop.xlane.xlu0 %3163
        %v3165 = vsel %vm952, %v3156, -inf
        %3166 = vmax.xlane.f32.xlu0 %v3165
        %v3167 = vpop.xlane.xlu0 %3166
        %v3168 = vsub.f32 %v3146, %v3161
        %v3169 = vsub.f32 %v3151, %v3164
        %v3170 = vsub.f32 %v3156, %v3167
        %v3171 = vmul.f32 %v3168, 1.442695
        %v3172 = vpow.pop %v3171
        %v3173 = vmul.f32 %v3169, 1.442695
        %v3174 = vpow.pop %v3173
        %v3175 = vmul.f32 %v3170, 1.442695
        %v3176 = vpow.pop %v3175
        %v3177 = vsel %vm945, %v3172, 0.0
        %3178 = vadd.xlane.f32.xlu0 %v3177
        %v3179 = vpop.xlane.xlu0 %3178
        %v3180 = vsel %vm945, %v3174, 0.0
        %3181 = vadd.xlane.f32.xlu0 %v3180
        %v3182 = vpop.xlane.xlu0 %3181
        %v3183 = vsel %vm952, %v3176, 0.0
        %3184 = vadd.xlane.f32.xlu0 %v3183
        %v3185 = vpop.xlane.xlu0 %3184
        %v3186 = vrcp.pop %v3179
        %v3187 = vmul.f32 %v3172, %v3186
        %v3188 = vrcp.pop %v3182
        %v3189 = vmul.f32 %v3174, %v3188
        %v3190 = vrcp.pop %v3185
        %v3191 = vmul.f32 %v3176, %v3190
        %3192 = vrot.lane.b32.xlu0 %v2304, 40
        %v3193 = vpop.permute.xlu0 %3192
        %3194 = vrot.lane.b32.xlu0 %v2307, 40
        %v3195 = vpop.permute.xlu0 %3194
        %3196 = vrot.lane.b32.xlu0 %v2312, 40
        %v3197 = vpop.permute.xlu0 %3196
        %v3201 = vsel %vm945, %v3187, 0
        %v3204 = vsel %vm945, %v3189, 0
        %v3207 = vsel %vm945, %v3191, 0
        %v3209 = vsel %vm997, %v3197, 0
        %3211 = vmatprep.subr.mxu0 0.0
        %3212 = vmatpush1.msra.mxu0 %v3193
        %3213 = vmatprep.subr.mxu0 0.0
        %3214 = vmatpush1.msra.mxu0 %v3195
        %3215 = vmatprep.subr.mxu0 0.0
        %3216 = vmatpush1.msra.mxu0 %v3209
        %3217 = vmatprep.subr.mxu0 0.0
        %3218 = vmatpush1.msra.mxu0 0.0
        %3219 = vmatprep.subr.mxu0 0.0
        %3220 = vmatpush1.msra.mxu0 0.0
        %3221 = vmatprep.subr.mxu0 0.0
        %3222 = vmatpush1.msra.mxu0 0.0
        %3223 = vmatprep.subr.mxu0 0.0
        %3224 = vmatpush1.msra.mxu0 0.0
        %3225 = vmatprep.subr.mxu0 0.0
        %3226 = vmatpush1.msra.mxu0 0.0
        %3227 = vmatprep.subr.mxu0 0.0
        %3228 = vmatpush1.msra.mxu0 0.0
        %3229 = vmatprep.subr.mxu0 0.0
        %3230 = vmatpush1.msra.mxu0 0.0
        %3231 = vmatprep.subr.mxu0 0.0
        %3232 = vmatpush1.msra.mxu0 0.0
        %3233 = vmatprep.subr.mxu0 0.0
        %3234 = vmatpush1.msra.mxu0 0.0
        %3235 = vmatprep.subr.mxu0 0.0
        %3236 = vmatpush1.msra.mxu0 0.0
        %3237 = vmatprep.subr.mxu0 0.0
        %3238 = vmatpush1.msra.mxu0 0.0
        %3239 = vmatprep.subr.mxu0 0.0
        %3240 = vmatpush1.msra.mxu0 0.0
        %3241 = vmatprep.subr.mxu0 0.0
        %3242 = vmatpush1.msra.mxu0 0.0
        %3243 = vmatprep.subr.mxu0 0.0
        %3244 = vmatpush1.msra.mxu0 0.0
        %3245 = vmatprep.subr.mxu0 0.0
        %3246 = vmatpush1.msra.mxu0 0.0
        %3247 = vmatprep.subr.mxu0 0.0
        %3248 = vmatpush1.msra.mxu0 0.0
        %3249 = vmatprep.subr.mxu0 0.0
        %3250 = vmatpush1.msra.mxu0 0.0
        %3251 = vmatprep.subr.mxu0 0.0
        %3252 = vmatpush1.msra.mxu0 0.0
        %3253 = vmatprep.subr.mxu0 0.0
        %3254 = vmatpush1.msra.mxu0 0.0
        %3255 = vmatprep.subr.mxu0 0.0
        %3256 = vmatpush1.msra.mxu0 0.0
        %3257 = vmatprep.subr.mxu0 0.0
        %3258 = vmatpush1.msra.mxu0 0.0
        %3259 = vmatprep.subr.mxu0 0.0
        %3260 = vmatpush1.msra.mxu0 0.0
        %3261 = vmatprep.subr.mxu0 0.0
        %3262 = vmatpush1.msra.mxu0 0.0
        %3263 = vmatprep.subr.mxu0 0.0
        %3264 = vmatpush1.msra.mxu0 0.0
        %3265 = vmatprep.subr.mxu0 0.0
        %3266 = vmatpush1.msra.mxu0 0.0
        %3267 = vmatprep.subr.mxu0 0.0
        %3268 = vmatpush1.msra.mxu0 0.0
        %3269 = vmatprep.subr.mxu0 0.0
        %3270 = vmatpush1.msra.mxu0 0.0
        %3271 = vmatprep.subr.mxu0 0.0
        %3272 = vmatpush1.msra.mxu0 0.0
        %3273 = vmatprep.subr.mxu0 0.0
        %3274 = vmatpush1.msra.mxu0 0.0
        %3275 = vmatprep.mubr.f32.mxu0 0.0
        %3276 = vmatmul.mubr.f32.gmra.mrb[0].mxu0 %v3201
        %v3277 = vpop.f32.mrb[0].mxu0
        %v3278 = vadd.f32 0.0, %v3277
        %v3279 = vpop.f32.mrb[0].mxu0
        %3280 = vmatprep.mubr.f32.mxu0 0.0
        %3281 = vmatmul.mubr.f32.gmra.mrb[0].mxu0 %v3204
        %v3282 = vpop.f32.mrb[0].mxu0
        %v3283 = vadd.f32 0.0, %v3282
        %v3284 = vpop.f32.mrb[0].mxu0
        %3285 = vmatprep.mubr.f32.mxu0 0.0
        %3286 = vmatmul.mubr.f32.gmra.mrb[0].mxu0 %v3207
        %v3287 = vpop.f32.mrb[0].mxu0
        %v3288 = vadd.f32 0.0, %v3287
        %v3289 = vpop.f32.mrb[0].mxu0
        %3290 = vdwg.mxu0
        %3294 = vrot.lane.b32.xlu0 %v3278, 24
        %v3295 = vpop.permute.xlu0 %3294
        %3296 = vrot.lane.b32.xlu0 %v3283, 24
        %v3297 = vpop.permute.xlu0 %3296
        %3298 = vrot.lane.b32.xlu0 %v3288, 24
        %v3299 = vpop.permute.xlu0 %3298
        %3303 = vst.msk [vmem:[#allocation3] sm:$0xff] %vm1838, %v3295
        %3304 = vst.msk [vmem:[#allocation3 + $0x8] sm:$0xff] %vm1838, %v3297
        %3305 = vst.msk [vmem:[#allocation3 + $0x10] sm:$0x3] %vm1841, %v3299
        %v3306 = vld [vmem:[#allocation3] sm:$0xff]
        %v3307 = vld [vmem:[#allocation3 + $0x8] sm:$0xff]
        %v3308 = vld [vmem:[#allocation3 + $0x10] sm:$0x3]
        %s3309 = scalar_lea.vmem [#allocation6], 768
        %v3310 = vld [vmem:[%s3309] sm:$0xf]
        %v3311 = vld [vmem:[%s3309 + $0x8] sm:$0xf]
        %v3312 = vld [vmem:[%s3309 + $0x10] sm:$0xf]
        %v3313 = vld [vmem:[%s3309 + $0x18] sm:$0xf]
        %v3314 = vpack.c.bf16 %v3307, %v3306
        %v3315 = vpack.c.bf16 %v3308, %v3308
        %v3320 = vunpack.c.l.b16 %v3310
        %v3321 = vunpack.c.l.b16 %v3311
        %v3322 = vunpack.c.l.b16 %v3312
        %v3323 = vunpack.c.l.b16 %v3313
        %v3324 = vpack.c.b16 %v3321, %v3320
        %v3325 = vpack.c.b16 %v3323, %v3322
        %v3329 = vsel %vm247, %v3314, 0
        %v3332 = vsel %vm247, %v3315, 0
        %3334 = vmatprep.subr.bf16.mxu0 0
        %3335 = vmatpush1.bf16.msra.mxu0 %v3324
        %3336 = vmatprep.subr.bf16.mxu0 0
        %3337 = vmatpush1.bf16.msra.mxu0 %v3325
        %3338 = vmatprep.subr.bf16.mxu0 0
        %3339 = vmatpush1.bf16.msra.mxu0 0
        %3340 = vmatprep.subr.bf16.mxu0 0
        %3341 = vmatpush1.bf16.msra.mxu0 0
        %3342 = vmatprep.subr.bf16.mxu0 0
        %3343 = vmatpush1.bf16.msra.mxu0 0
        %3344 = vmatprep.subr.bf16.mxu0 0
        %3345 = vmatpush1.bf16.msra.mxu0 0
        %3346 = vmatprep.subr.bf16.mxu0 0
        %3347 = vmatpush1.bf16.msra.mxu0 0
        %3348 = vmatprep.subr.bf16.mxu0 0
        %3349 = vmatpush1.bf16.msra.mxu0 0
        %3350 = vmatprep.subr.bf16.mxu0 0
        %3351 = vmatpush1.bf16.msra.mxu0 0
        %3352 = vmatprep.subr.bf16.mxu0 0
        %3353 = vmatpush1.bf16.msra.mxu0 0
        %3354 = vmatprep.subr.bf16.mxu0 0
        %3355 = vmatpush1.bf16.msra.mxu0 0
        %3356 = vmatprep.subr.bf16.mxu0 0
        %3357 = vmatpush1.bf16.msra.mxu0 0
        %3358 = vmatprep.subr.bf16.mxu0 0
        %3359 = vmatpush1.bf16.msra.mxu0 0
        %3360 = vmatprep.subr.bf16.mxu0 0
        %3361 = vmatpush1.bf16.msra.mxu0 0
        %3362 = vmatprep.subr.bf16.mxu0 0
        %3363 = vmatpush1.bf16.msra.mxu0 0
        %3364 = vmatprep.subr.bf16.mxu0 0
        %3365 = vmatpush1.bf16.msra.mxu0 0
        %3366 = vmatprep.mubr.bf16.mxu0 0
        %3367 = vmatmul.mubr.bf16.gmra.mrb[0].mxu0 %v3329
        %v3368 = vpop.f32.mrb[0].mxu0
        %v3369 = vadd.f32 0.0, %v3368
        %v3370 = vpop.f32.mrb[0].mxu0
        %v3371 = vpop.f32.mrb[0].mxu0
        %v3372 = vadd.f32 0.0, %v3371
        %v3373 = vpop.f32.mrb[0].mxu0
        %3374 = vmatprep.mubr.bf16.mxu0 0
        %3375 = vmatmul.mubr.bf16.gmra.mrb[0].mxu0 %v3332
        %v3376 = vpop.f32.mrb[0].mxu0
        %v3377 = vadd.f32 0.0, %v3376
        %v3378 = vpop.f32.mrb[0].mxu0
        %v3379 = vpop.f32.mrb[0].mxu0
        %v3380 = vpop.f32.mrb[0].mxu0
        %3381 = vdwg.mxu0
        %v3382 = vadd.f32 %v2193, %v3369
        %v3383 = vadd.f32 %v2194, %v3372
        %v3384 = vadd.f32 %v2195, %v3377
        %v3385 = vld [vmem:[%s3 + $0x13] ss:$0 sm:$0xff]
        %v3386 = vadd.f32 %v3382, %v3385
        %v3387 = vadd.f32 %v3383, %v3385
        %v3388 = vadd.f32 %v3384, %v3385
        %v3389 = vsel %vm247, %v3386, 0.0
        %3390 = vadd.xlane.f32.xlu0 %v3389
        %v3391 = vpop.xlane.xlu0 %3390
        %v3392 = vsel %vm247, %v3387, 0.0
        %3393 = vadd.xlane.f32.xlu0 %v3392
        %v3394 = vpop.xlane.xlu0 %3393
        %v3395 = vsel %vm726, %v3388, 0.0
        %3396 = vadd.xlane.f32.xlu0 %v3395
        %v3397 = vpop.xlane.xlu0 %3396
        %v3398 = vmul.f32 %v3391, %v730
        %v3399 = vmul.f32 %v3394, %v730
        %v3400 = vmul.f32 %v3397, %v730
        %v3401 = vsub.f32 %v3386, %v3398
        %v3402 = vsub.f32 %v3387, %v3399
        %v3403 = vsub.f32 %v3388, %v3400
        %v3404 = vmul.f32 %v3401, %v3401
        %v3405 = vmul.f32 %v3402, %v3402
        %v3406 = vmul.f32 %v3403, %v3403
        %v3407 = vsel %vm247, %v3404, 0.0
        %3408 = vadd.xlane.f32.xlu0 %v3407
        %v3409 = vpop.xlane.xlu0 %3408
        %v3410 = vsel %vm247, %v3405, 0.0
        %3411 = vadd.xlane.f32.xlu0 %v3410
        %v3412 = vpop.xlane.xlu0 %3411
        %v3413 = vsel %vm726, %v3406, 0.0
        %3414 = vadd.xlane.f32.xlu0 %v3413
        %v3415 = vpop.xlane.xlu0 %3414
        %v3416 = vmul.f32 %v3409, %v730
        %v3417 = vmul.f32 %v3412, %v730
        %v3418 = vmul.f32 %v3415, %v730
        %v3419 = vadd.f32 %v3416, 1e-06
        %v3420 = vadd.f32 %v3417, 1e-06
        %v3421 = vadd.f32 %v3418, 1e-06
        %v3422 = vrsqrt.pop %v3419
        %v3423 = vrsqrt.pop %v3420
        %v3424 = vrsqrt.pop %v3421
        %v3425 = vmul.f32 %v3401, %v3422
        %v3426 = vmul.f32 %v3402, %v3423
        %v3427 = vmul.f32 %v3403, %v3424
        %v3428 = vld [vmem:[%s3 + $0x14] ss:$0 sm:$0xff]
        %v3429 = vmul.f32 %v3425, %v3428
        %v3430 = vmul.f32 %v3426, %v3428
        %v3431 = vmul.f32 %v3427, %v3428
        %v3432 = vld [vmem:[%s3 + $0x15] ss:$0 sm:$0xff]
        %v3433 = vadd.f32 %v3429, %v3432
        %v3434 = vadd.f32 %v3430, %v3432
        %v3435 = vadd.f32 %v3431, %v3432
        %s3436 = scalar_lea.vmem [#allocation6], 896
        %v3437 = vld [vmem:[%s3436] sm:$0xf]
        %v3438 = vld [vmem:[%s3436 + $0x8] sm:$0xf]
        %v3439 = vld [vmem:[%s3436 + $0x10] sm:$0xf]
        %v3440 = vld [vmem:[%s3436 + $0x18] sm:$0xf]
        %v3441 = vpack.c.bf16 %v3434, %v3433
        %v3442 = vpack.c.bf16 %v3435, %v3435
        %v3443 = vld [vmem:[%s3 + $0x16] ss:$0 sm:$0xff]
        %v3448 = vunpack.c.l.b16 %v3437
        %v3449 = vunpack.c.l.b16 %v3438
        %v3450 = vunpack.c.l.b16 %v3439
        %v3451 = vunpack.c.l.b16 %v3440
        %v3452 = vpack.c.b16 %v3449, %v3448
        %v3453 = vpack.c.b16 %v3451, %v3450
        %v3457 = vsel %vm247, %v3441, 0
        %v3460 = vsel %vm247, %v3442, 0
        %3462 = vmatprep.subr.bf16.mxu0 0
        %3463 = vmatpush1.bf16.msra.mxu0 %v3452
        %3464 = vmatprep.subr.bf16.mxu0 0
        %3465 = vmatpush1.bf16.msra.mxu0 %v3453
        %3466 = vmatprep.subr.bf16.mxu0 0
        %3467 = vmatpush1.bf16.msra.mxu0 0
        %3468 = vmatprep.subr.bf16.mxu0 0
        %3469 = vmatpush1.bf16.msra.mxu0 0
        %3470 = vmatprep.subr.bf16.mxu0 0
        %3471 = vmatpush1.bf16.msra.mxu0 0
        %3472 = vmatprep.subr.bf16.mxu0 0
        %3473 = vmatpush1.bf16.msra.mxu0 0
        %3474 = vmatprep.subr.bf16.mxu0 0
        %3475 = vmatpush1.bf16.msra.mxu0 0
        %3476 = vmatprep.subr.bf16.mxu0 0
        %3477 = vmatpush1.bf16.msra.mxu0 0
        %3478 = vmatprep.subr.bf16.mxu0 0
        %3479 = vmatpush1.bf16.msra.mxu0 0
        %3480 = vmatprep.subr.bf16.mxu0 0
        %3481 = vmatpush1.bf16.msra.mxu0 0
        %3482 = vmatprep.subr.bf16.mxu0 0
        %3483 = vmatpush1.bf16.msra.mxu0 0
        %3484 = vmatprep.subr.bf16.mxu0 0
        %3485 = vmatpush1.bf16.msra.mxu0 0
        %3486 = vmatprep.subr.bf16.mxu0 0
        %3487 = vmatpush1.bf16.msra.mxu0 0
        %3488 = vmatprep.subr.bf16.mxu0 0
        %3489 = vmatpush1.bf16.msra.mxu0 0
        %3490 = vmatprep.subr.bf16.mxu0 0
        %3491 = vmatpush1.bf16.msra.mxu0 0
        %3492 = vmatprep.subr.bf16.mxu0 0
        %3493 = vmatpush1.bf16.msra.mxu0 0
        %3494 = vmatprep.mubr.bf16.mxu0 0
        %3495 = vmatmul.mubr.bf16.gmra.mrb[0].mxu0 %v3457
        %v3496 = vpop.f32.mrb[0].mxu0
        %v3497 = vadd.f32 %v3443, %v3496
        %v3498 = vpop.f32.mrb[0].mxu0
        %v3499 = vpop.f32.mrb[0].mxu0
        %v3500 = vadd.f32 %v3443, %v3499
        %v3501 = vpop.f32.mrb[0].mxu0
        %3502 = vmatprep.mubr.bf16.mxu0 0
        %3503 = vmatmul.mubr.bf16.gmra.mrb[0].mxu0 %v3460
        %v3504 = vpop.f32.mrb[0].mxu0
        %v3505 = vadd.f32 %v3443, %v3504
        %v3506 = vpop.f32.mrb[0].mxu0
        %v3507 = vpop.f32.mrb[0].mxu0
        %v3508 = vpop.f32.mrb[0].mxu0
        %3509 = vdwg.mxu0
        %v3510 = vmul.f32 %v3497, %v3497
        %v3511 = vmul.f32 %v3500, %v3500
        %v3512 = vmul.f32 %v3505, %v3505
        %v3513 = vmul.f32 %v3497, %v3510
        %v3514 = vmul.f32 %v3500, %v3511
        %v3515 = vmul.f32 %v3505, %v3512
        %v3516 = vmul.f32 %v3513, 0.044715
        %v3517 = vmul.f32 %v3514, 0.044715
        %v3518 = vmul.f32 %v3515, 0.044715
        %v3519 = vadd.f32 %v3497, %v3516
        %v3520 = vadd.f32 %v3500, %v3517
        %v3521 = vadd.f32 %v3505, %v3518
        %v3522 = vmul.f32 %v3519, 0.7978846
        %v3523 = vmul.f32 %v3520, 0.7978846
        %v3524 = vmul.f32 %v3521, 0.7978846
        %v3525 = vtanh.pop %v3522
        %v3526 = vtanh.pop %v3523
        %v3527 = vtanh.pop %v3524
        %v3528 = vadd.f32 %v3525, 1.0
        %v3529 = vadd.f32 %v3526, 1.0
        %v3530 = vadd.f32 %v3527, 1.0
        %v3531 = vmul.f32 %v3528, 0.5
        %v3532 = vmul.f32 %v3529, 0.5
        %v3533 = vmul.f32 %v3530, 0.5
        %v3534 = vmul.f32 %v3497, %v3531
        %v3535 = vmul.f32 %v3500, %v3532
        %v3536 = vmul.f32 %v3505, %v3533
        %s3537 = scalar_lea.vmem [#allocation6], 1024
        %v3538 = vld [vmem:[%s3537] sm:$0xf]
        %v3539 = vld [vmem:[%s3537 + $0x8] sm:$0xf]
        %v3540 = vld [vmem:[%s3537 + $0x10] sm:$0xf]
        %v3541 = vld [vmem:[%s3537 + $0x18] sm:$0xf]
        %v3542 = vld [vmem:[%s3537 + $0x20] sm:$0xf]
        %v3543 = vld [vmem:[%s3537 + $0x28] sm:$0xf]
        %v3544 = vld [vmem:[%s3537 + $0x30] sm:$0xf]
        %v3545 = vld [vmem:[%s3537 + $0x38] sm:$0xf]
        %v3546 = vld [vmem:[%s3537 + $0x40] sm:$0xf]
        %v3547 = vld [vmem:[%s3537 + $0x48] sm:$0xf]
        %v3548 = vld [vmem:[%s3537 + $0x50] sm:$0xf]
        %v3549 = vld [vmem:[%s3537 + $0x58] sm:$0xf]
        %v3550 = vld [vmem:[%s3537 + $0x60] sm:$0xf]
        %v3551 = vld [vmem:[%s3537 + $0x68] sm:$0xf]
        %v3552 = vld [vmem:[%s3537 + $0x70] sm:$0xf]
        %v3553 = vld [vmem:[%s3537 + $0x78] sm:$0xf]
        %v3554 = vpack.c.bf16 %v3535, %v3534
        %v3555 = vpack.c.bf16 %v3536, %v3536
        %v3572 = vunpack.c.l.b16 %v3538
        %v3573 = vunpack.c.l.b16 %v3539
        %v3574 = vunpack.c.l.b16 %v3540
        %v3575 = vunpack.c.l.b16 %v3541
        %v3576 = vunpack.c.l.b16 %v3542
        %v3577 = vunpack.c.l.b16 %v3543
        %v3578 = vunpack.c.l.b16 %v3544
        %v3579 = vunpack.c.l.b16 %v3545
        %v3580 = vunpack.c.l.b16 %v3546
        %v3581 = vunpack.c.l.b16 %v3547
        %v3582 = vunpack.c.l.b16 %v3548
        %v3583 = vunpack.c.l.b16 %v3549
        %v3584 = vunpack.c.l.b16 %v3550
        %v3585 = vunpack.c.l.b16 %v3551
        %v3586 = vunpack.c.l.b16 %v3552
        %v3587 = vunpack.c.l.b16 %v3553
        %v3588 = vpack.c.b16 %v3573, %v3572
        %v3589 = vpack.c.b16 %v3575, %v3574
        %v3590 = vpack.c.b16 %v3577, %v3576
        %v3591 = vpack.c.b16 %v3579, %v3578
        %v3592 = vpack.c.b16 %v3581, %v3580
        %v3593 = vpack.c.b16 %v3583, %v3582
        %v3594 = vpack.c.b16 %v3585, %v3584
        %v3595 = vpack.c.b16 %v3587, %v3586
        %3604 = vmatprep.subr.bf16.mxu0 0
        %3605 = vmatpush1.bf16.msra.mxu0 %v3588
        %3606 = vmatprep.subr.bf16.mxu0 0
        %3607 = vmatpush1.bf16.msra.mxu0 %v3589
        %3608 = vmatprep.subr.bf16.mxu0 0
        %3609 = vmatpush1.bf16.msra.mxu0 %v3590
        %3610 = vmatprep.subr.bf16.mxu0 0
        %3611 = vmatpush1.bf16.msra.mxu0 %v3591
        %3612 = vmatprep.subr.bf16.mxu0 0
        %3613 = vmatpush1.bf16.msra.mxu0 %v3592
        %3614 = vmatprep.subr.bf16.mxu0 0
        %3615 = vmatpush1.bf16.msra.mxu0 %v3593
        %3616 = vmatprep.subr.bf16.mxu0 0
        %3617 = vmatpush1.bf16.msra.mxu0 %v3594
        %3618 = vmatprep.subr.bf16.mxu0 0
        %3619 = vmatpush1.bf16.msra.mxu0 %v3595
        %3620 = vmatprep.subr.bf16.mxu0 0
        %3621 = vmatpush1.bf16.msra.mxu0 0
        %3622 = vmatprep.subr.bf16.mxu0 0
        %3623 = vmatpush1.bf16.msra.mxu0 0
        %3624 = vmatprep.subr.bf16.mxu0 0
        %3625 = vmatpush1.bf16.msra.mxu0 0
        %3626 = vmatprep.subr.bf16.mxu0 0
        %3627 = vmatpush1.bf16.msra.mxu0 0
        %3628 = vmatprep.subr.bf16.mxu0 0
        %3629 = vmatpush1.bf16.msra.mxu0 0
        %3630 = vmatprep.subr.bf16.mxu0 0
        %3631 = vmatpush1.bf16.msra.mxu0 0
        %3632 = vmatprep.subr.bf16.mxu0 0
        %3633 = vmatpush1.bf16.msra.mxu0 0
        %3634 = vmatprep.subr.bf16.mxu0 0
        %3635 = vmatpush1.bf16.msra.mxu0 0
        %3636 = vmatprep.mubr.bf16.mxu0 0
        %3637 = vmatmul.mubr.bf16.gmra.mrb[0].mxu0 %v3554
        %v3638 = vpop.f32.mrb[0].mxu0
        %v3639 = vadd.f32 0.0, %v3638
        %v3640 = vpop.f32.mrb[0].mxu0
        %v3641 = vpop.f32.mrb[0].mxu0
        %v3642 = vpop.f32.mrb[0].mxu0
        %3643 = vmatprep.mubr.bf16.mxu0 0
        %3644 = vmatmul.mubr.bf16.gmra.mrb[0].mxu0 %v3555
        %v3645 = vpop.f32.mrb[0].mxu0
        %v3646 = vpop.f32.mrb[0].mxu0
        %v3647 = vpop.f32.mrb[0].mxu0
        %v3648 = vpop.f32.mrb[0].mxu0
        %3649 = vdwg.mxu0
        %v3650 = vadd.f32 %v3386, %v3639
        %v3651 = vld [vmem:[%s3 + $0x17] ss:$0 sm:$0xff]
        %v3652 = vadd.f32 %v3650, %v3651
        %v3653 = vsel %vm247, %v3652, 0.0
        %3654 = vadd.xlane.f32.xlu0 %v3653
        %v3655 = vpop.xlane.xlu0 %3654
        %v3656 = vmul.f32 %v3655, %v730
        %v3657 = vsub.f32 %v3652, %v3656
        %v3658 = vmul.f32 %v3657, %v3657
        %v3659 = vsel %vm247, %v3658, 0.0
        %3660 = vadd.xlane.f32.xlu0 %v3659
        %v3661 = vpop.xlane.xlu0 %3660
        %v3662 = vmul.f32 %v3661, %v730
        %v3663 = vadd.f32 %v3662, 1e-06
        %v3664 = vrsqrt.pop %v3663
        %v3665 = vmul.f32 %v3657, %v3664
        %v3666 = vld [vmem:[%s3 + $0x20] ss:$0 sm:$0xff]
        %v3667 = vmul.f32 %v3665, %v3666
        %v3668 = vld [vmem:[%s3 + $0x21] ss:$0 sm:$0xff]
        %v3669 = vadd.f32 %v3667, %v3668
        %v3671 = vrot.slane %v3669, 1
        %v3673 = vadd.f32 %v3669, %v3671
        %v3674 = vmul.f32 %v3673, 0.5
        %vm3675 = vcmask 253952
        %v3676 = vsel %vm3675, %v3674, 0.0
        %3677 = vadd.xlane.f32.xlu0 %v3676
        %v3678 = vpop.xlane.xlu0 %3677
        %v3679 = vmul.f32 %v3678, %v730
        %v3680 = vsub.f32 %v3674, %v3679
        %v3681 = vmul.f32 %v3680, %v3680
        %v3682 = vsel %vm3675, %v3681, 0.0
        %3683 = vadd.xlane.f32.xlu0 %v3682
        %v3684 = vpop.xlane.xlu0 %3683
        %v3685 = vmul.f32 %v3684, %v730
        %v3686 = vadd.f32 %v3685, 1e-06
        %v3687 = vrsqrt.pop %v3686
        %v3688 = vmul.f32 %v3680, %v3687
        %v3689 = vld [vmem:[%s3 + $0x22] ss:$0 sm:$0xff]
        %v3690 = vmul.f32 %v3688, %v3689
        %v3691 = vld [vmem:[%s3 + $0x23] ss:$0 sm:$0xff]
        %v3692 = vadd.f32 %v3690, %v3691
        %s3693 = scalar_lea.vmem [#allocation6], 1152
        %v3694 = vld [vmem:[%s3693] sm:$0xff]
        %v3695 = vld [vmem:[%s3693 + $0x8] sm:$0xff]
        %v3696 = vld [vmem:[%s3693 + $0x10] sm:$0xff]
        %v3697 = vld [vmem:[%s3693 + $0x18] sm:$0xff]
        %v3698 = vpack.c.bf16 %v3692, %v3692
        %s3699 = scalar_lea.vmem %s3, 36
        %v3700 = vld [vmem:[%s3699] ss:$8 sm:$0x3]
        %v3705 = vunpack.c.l.b16 %v3694
        %v3706 = vunpack.c.h.b16 %v3694
        %v3707 = vunpack.c.l.b16 %v3695
        %v3708 = vunpack.c.h.b16 %v3695
        %v3709 = vunpack.c.l.b16 %v3696
        %v3710 = vunpack.c.h.b16 %v3696
        %v3711 = vunpack.c.l.b16 %v3697
        %v3712 = vunpack.c.h.b16 %v3697
        %v3713 = vpack.c.b16 %v3707, %v3705
        %v3714 = vpack.c.b16 %v3708, %v3706
        %v3715 = vpack.c.b16 %v3711, %v3709
        %v3716 = vpack.c.b16 %v3712, %v3710
        %v3722 = vlaneseq
        %v3723 = vshrl.u32 %v3722, 7
        %v3724 = vsub.s32 0, %v3723
        %v3725 = vrot.slane %v3700, %v3724
        %v3726 = vlaneseq
        %v3727 = vshrl.u32 %v3726, 7
        %v3728 = vsub.s32 1, %v3727
        %v3729 = vrot.slane %v3700, %v3728
        %v3733 = vsel %vm247, %v3698, 0
        %3735 = vmatprep.subr.bf16.mxu0 %v3714
        %3736 = vmatpush1.bf16.msra.mxu0 %v3713
        %3737 = vmatprep.subr.bf16.mxu0 %v3716
        %3738 = vmatpush1.bf16.msra.mxu0 %v3715
        %3739 = vmatprep.subr.bf16.mxu0 0
        %3740 = vmatpush1.bf16.msra.mxu0 0
        %3741 = vmatprep.subr.bf16.mxu0 0
        %3742 = vmatpush1.bf16.msra.mxu0 0
        %3743 = vmatprep.subr.bf16.mxu0 0
        %3744 = vmatpush1.bf16.msra.mxu0 0
        %3745 = vmatprep.subr.bf16.mxu0 0
        %3746 = vmatpush1.bf16.msra.mxu0 0
        %3747 = vmatprep.subr.bf16.mxu0 0
        %3748 = vmatpush1.bf16.msra.mxu0 0
        %3749 = vmatprep.subr.bf16.mxu0 0
        %3750 = vmatpush1.bf16.msra.mxu0 0
        %3751 = vmatprep.subr.bf16.mxu0 0
        %3752 = vmatpush1.bf16.msra.mxu0 0
        %3753 = vmatprep.subr.bf16.mxu0 0
        %3754 = vmatpush1.bf16.msra.mxu0 0
        %3755 = vmatprep.subr.bf16.mxu0 0
        %3756 = vmatpush1.bf16.msra.mxu0 0
        %3757 = vmatprep.subr.bf16.mxu0 0
        %3758 = vmatpush1.bf16.msra.mxu0 0
        %3759 = vmatprep.subr.bf16.mxu0 0
        %3760 = vmatpush1.bf16.msra.mxu0 0
        %3761 = vmatprep.subr.bf16.mxu0 0
        %3762 = vmatpush1.bf16.msra.mxu0 0
        %3763 = vmatprep.subr.bf16.mxu0 0
        %3764 = vmatpush1.bf16.msra.mxu0 0
        %3765 = vmatprep.subr.bf16.mxu0 0
        %3766 = vmatpush1.bf16.msra.mxu0 0
        %3767 = vmatprep.mubr.bf16.mxu0 0
        %3768 = vmatmul.mubr.bf16.gmra.mrb[0].mxu0 %v3733
        %v3769 = vpop.f32.mrb[0].mxu0
        %v3770 = vadd.f32 %v3725, %v3769
        %v3771 = vpop.f32.mrb[0].mxu0
        %v3772 = vadd.f32 %v3729, %v3771
        %v3773 = vpop.f32.mrb[0].mxu0
        %v3774 = vpop.f32.mrb[0].mxu0
        %3775 = vdwg.mxu0
        %v3776 = vsub.f32 0.0, %v3770
        %v3777 = vsub.f32 0.0, %v3772
        %v3778 = vmul.f32 %v3776, 1.442695
        %v3779 = vpow.pop %v3778
        %v3780 = vmul.f32 %v3777, 1.442695
        %v3781 = vpow.pop %v3780
        %v3782 = vadd.f32 %v3779, 1.0
        %v3783 = vadd.f32 %v3781, 1.0
        %v3784 = vrcp.pop %v3782
        %v3785 = vmul.f32 1.0, %v3784
        %v3786 = vrcp.pop %v3783
        %v3787 = vmul.f32 1.0, %v3786
        %v3790 = vcombine.low %v3785, %v3787
        %v3792 = vunpack.c.l.s4 1966171168
        %v3793 = vunpack.c.0.s8 %v3792
        %v3794 = vlaneseq
        %v3795 = vshrl.u32 %v3794, 7
        %v3796 = vsub.s32 %v3793, %v3795
        %v3797 = vrot.slane %v3790, %v3796
        %v3799 = vunpack.c.l.s4 1966171168
        %v3800 = vunpack.c.0.s8 %v3799
        %v3801 = vlaneseq
        %v3802 = vshrl.u32 %v3801, 7
        %v3803 = vsub.s32 %v3800, %v3802
        %v3804 = vrot.slane %v3797, %v3803
        %v3806 = vlaneseq
        %vm3807 = vcmp.ge.s32.totalorder %v3806, 0
        %vm3808 = vcmp.lt.s32.totalorder %v3806, 256
        %vm3809 = vmand %vm3807, %vm3808
        %3810 = vst.msk [vmem:[%s225] sm:$0x3] %vm3809, %v3804
        %p3811 = scmp.lt.s32.totalorder %s17, 1
        %s3812 = scalar_select %p3811, %s17, 1
        %s3813 = smul.addr %s3812, 2
        %s3814 = scalar_lea.vmem %s4, %s3813
        // Predicated region
        $region45: #{passt_mtg_forward.1} parent=35 // pred_check
          %p3815 = pneg %p124
        $region46: #{passt_mtg_forward.1} parent=35 // pred_check_branch
          %3817 = sbr.rel (%p3815) target = $region48
        $region47: #{passt_mtg_forward.1} parent=35 // pred_region
          _
        $region48: #{passt_mtg_forward.1} parent=35 // pred_fallthru
          _
      $region36: #{passt_mtg_forward.1} parent=5 // pred_fallthru
        _
      %p3818 = scmp.le.s32.totalorder 2, %s12
      // Predicated region
      $region49: #{passt_mtg_forward.1} parent=5 // pred_check
        %p3819 = pneg %p3818
      $region50: #{passt_mtg_forward.1} parent=5 // pred_check_branch
        %3821 = sbr.rel (%p3819) target = $region52
      $region51: #{passt_mtg_forward.1} parent=5 // pred_region
        %s3822 = ssub.s32 %s12, 2
        // Predicated region
        $region53: #{passt_mtg_forward.1} parent=51 // pred_check
          %p3823 = pneg %p130
        $region54: #{passt_mtg_forward.1} parent=51 // pred_check_branch
          %3825 = sbr.rel (%p3823) target = $region56
        $region55: #{passt_mtg_forward.1} parent=51 // pred_region
          %p3826 = scmp.lt.s32.totalorder %s18, 1
          %s3827 = scalar_select %p3826, %s18, 1
          %s3828 = smul.addr %s3827, 2
          %s3829 = scalar_lea.vmem %s4, %s3828
        $region56: #{passt_mtg_forward.1} parent=51 // pred_fallthru
          _
      $region52: #{passt_mtg_forward.1} parent=5 // pred_fallthru
        _
    $region6: #{passt_mtg_forward.1} parent=1 // loop_footer
      %s16 = sadd.s32 1, %s12
    $region7: #{passt_mtg_forward.1} parent=1 // loop_footer_branch
      %11 = sbr.rel target = $region3
    $region8: #{passt_mtg_forward.1} parent=1 // loop_exit
      _
    %3830 = vsyncpa [#allocation5], 1
    %s3831 = scalar_lea.sflag [#allocation5], 1
    %3832 = vsyncpa %s3831, 1
    %3833 = vsyncpa [#allocation7], 1

</llo_original>
